<compile_context>
chip_gen: v7x
topology: tpu7x:2x2x1
jax: 0.10.0
libtpu: 0.0.40
codegen_flags: <defaults>
</compile_context>

<pallas_src>
import functools
import math

import jax
import jax.numpy as jnp
from jax import lax
from jax.experimental import pallas as pl
from jax.experimental.pallas import tpu as pltpu


def _im2col3(x, h_out, w_out):
    """(Hin, Win, Cin) -> (h_out*w_out, 9*Cin); tap order (dy, dx, c)."""
    c_in = x.shape[-1]
    taps = [x[dy:dy + h_out, dx:dx + w_out, :]
            for dy in range(3) for dx in range(3)]
    cols = jnp.concatenate(taps, axis=-1)              # (h_out, w_out, 9*Cin)
    return cols.reshape(h_out * w_out, 9 * c_in)


def _prelu(y, alpha):
    return jnp.where(y >= 0.0, y, y * alpha)


def _pnet_kernel(x_ref, w1_ref, b1_ref, a1_ref, w2_ref, b2_ref, a2_ref,
                 w3_ref, b3_ref, a3_ref, w4_ref, b4_ref,
                 o_ref, *, H, W):
    """One batch element per grid step; all convs are im2col MXU matmuls."""
    H1, W1 = H - 2, W - 2                     # after conv1 (3x3, valid)
    H2, W2 = -(-H1 // 2), -(-W1 // 2)         # after maxpool 2x2 (ceil_mode)
    H3, W3 = H2 - 2, W2 - 2                   # after conv2
    H4, W4 = H3 - 2, W3 - 2                   # after conv3

    x = x_ref[0]                              # (H, W, 3) f32

    # --- conv1 (3x3, 3->10) + PReLU: one im2col matmul, K = 27 ---
    y = jnp.dot(_im2col3(x, H1, W1), w1_ref[...],
                preferred_element_type=jnp.float32) + b1_ref[...]
    y = _prelu(y, a1_ref[...])
    c1 = y.shape[-1]
    y = y.reshape(H1, W1, c1)

    # --- MaxPool2d(2, 2, ceil_mode=True) ---
    # Pad odd extents with -inf (ceil_mode), then:
    #   rows:  major-dim split (H1 -> H2, 2) + elementwise max
    #   cols:  static 2-wide sublane slices + elementwise max, concatenated.
    if H1 % 2:
        y = jnp.concatenate(
            [y, jnp.full((1, W1, c1), -jnp.inf, jnp.float32)], axis=0)
    if W1 % 2:
        y = jnp.concatenate(
            [y, jnp.full((y.shape[0], 1, c1), -jnp.inf, jnp.float32)], axis=1)
    r = y.reshape(H2, 2, 2 * W2, c1)                       # major-dim split only
    rmax = jnp.maximum(r[:, 0], r[:, 1])                   # (H2, 2*W2, c1)
    p = jnp.concatenate(
        [jnp.maximum(rmax[:, 2 * j:2 * j + 1, :],
                     rmax[:, 2 * j + 1:2 * j + 2, :])
         for j in range(W2)], axis=1)                      # (H2, W2, c1)

    # --- conv2 (3x3, 10->16) + PReLU: K = 90 ---
    y = jnp.dot(_im2col3(p, H3, W3), w2_ref[...],
                preferred_element_type=jnp.float32) + b2_ref[...]
    y = _prelu(y, a2_ref[...])
    y = y.reshape(H3, W3, y.shape[-1])

    # --- conv3 (3x3, 16->32) + PReLU: K = 144 ---
    y = jnp.dot(_im2col3(y, H4, W4), w3_ref[...],
                preferred_element_type=jnp.float32) + b3_ref[...]
    y = _prelu(y, a3_ref[...])                             # (H4*W4, 32)

    # --- fused 1x1 head: [conv4_2 | conv4_1] as one (32, 6) matmul ---
    h = jnp.dot(y, w4_ref[...],
                preferred_element_type=jnp.float32) + b4_ref[...]   # (H4*W4, 6)
    reg = h[:, 0:4]                                        # conv4_2 (bbox)
    logits = h[:, 4:6]                                     # conv4_1 (cls)
    m = jnp.max(logits, axis=-1, keepdims=True)
    e = jnp.exp(logits - m)
    prob = e / jnp.sum(e, axis=-1, keepdims=True)          # softmax over classes

    # Single lane-contiguous store: [reg(4) | prob(2)]  -> one output DMA.
    o_ref[0] = jnp.concatenate([reg, prob], axis=-1)


def pnet_pallas(x_nhwc, kparams):
    N, H, W, _ = x_nhwc.shape
    H1, W1 = H - 2, W - 2
    H2, W2 = -(-H1 // 2), -(-W1 // 2)
    H3, W3 = H2 - 2, W2 - 2
    H4, W4 = H3 - 2, W3 - 2

    kernel = functools.partial(_pnet_kernel, H=H, W=W)

    def _full_spec(a):
        return pl.BlockSpec(a.shape, lambda b, n=a.ndim: (0,) * n)

    # Advisory cost estimate: tiny, latency-bound kernel — let XLA overlap it.
    flops = 2 * N * (H1 * W1 * 27 * 10 + H3 * W3 * 90 * 16
                     + H4 * W4 * 144 * 32 + H4 * W4 * 32 * 6)
    bytes_accessed = 4 * (x_nhwc.size + sum(int(a.size) for a in kparams)
                          + N * H4 * W4 * 6)
    cost = pl.CostEstimate(flops=int(flops),
                           transcendentals=int(N * H4 * W4 * 2),
                           bytes_accessed=int(bytes_accessed))

    fused = pl.pallas_call(
        kernel,
        out_shape=jax.ShapeDtypeStruct((N, H4 * W4, 6), jnp.float32),
        grid=(N,),
        in_specs=[pl.BlockSpec((1, H, W, 3), lambda b: (b, 0, 0, 0))]
                 + [_full_spec(a) for a in kparams],
        out_specs=pl.BlockSpec((1, H4 * W4, 6), lambda b: (b, 0, 0)),
        compiler_params=pltpu.CompilerParams(
            dimension_semantics=("parallel",)),
        cost_estimate=cost,
    )(x_nhwc, *kparams)

    # Layout plumbing only (no compute): split the fused slab into the heads.
    reg = fused[..., 0:4].reshape(N, H4, W4, 4)     # conv4_2 (bbox reg)
    prob = fused[..., 4:6].reshape(N, H4, W4, 2)    # softmax(conv4_1)
    return reg, prob


def make_pt_params(key):
    """Deterministic synthetic parameters with PyTorch shapes."""
    # TODO(synk): real weights would come from torch.load(model_path); synthetic here.
    keys = iter(jax.random.split(key, 32))

    def conv_w(out_c, in_c, kh, kw):
        fan_in = in_c * kh * kw
        return jax.random.normal(next(keys), (out_c, in_c, kh, kw),
                                 jnp.float32) / math.sqrt(float(fan_in))

    def bias(c):
        return 0.1 * jax.random.normal(next(keys), (c,), jnp.float32)

    def alpha(c):
        return 0.25 + 0.05 * jax.random.normal(next(keys), (c,), jnp.float32)

    w1, b1, a1 = conv_w(10, 3, 3, 3), bias(10), alpha(10)
    w2, b2, a2 = conv_w(16, 10, 3, 3), bias(16), alpha(16)
    w3, b3, a3 = conv_w(32, 16, 3, 3), bias(32), alpha(32)
    w41, b41 = conv_w(2, 32, 1, 1), bias(2)
    w42, b42 = conv_w(4, 32, 1, 1), bias(4)
    return (w1, b1, a1, w2, b2, a2, w3, b3, a3, w41, b41, w42, b42)


def prep_kernel_params(pt):
    """PyTorch conv layouts -> matmul layouts used inside the kernel."""
    (w1, b1, a1, w2, b2, a2, w3, b3, a3, w41, b41, w42, b42) = pt

    def conv_mat(w):   # (Cout,Cin,kh,kw) -> (kh*kw*Cin, Cout); (dy,dx,c) row order
        return jnp.transpose(w, (2, 3, 1, 0)).reshape(-1, w.shape[0])

    def row(v):
        return v.reshape(1, -1)

    # Fused 1x1 head: columns 0:4 = conv4_2 (bbox reg), 4:6 = conv4_1 (cls).
    w4 = jnp.concatenate([w42[:, :, 0, 0], w41[:, :, 0, 0]], axis=0).T   # (32, 6)
    b4 = jnp.concatenate([b42, b41])

    return (conv_mat(w1), row(b1), row(a1),
            conv_mat(w2), row(b2), row(a2),
            conv_mat(w3), row(b3), row(a3),
            w4, row(b4))


def reference(x_nhwc, pt):
    """Independent pure-JAX reference (lax convs / reduce_window)."""
    (w1, b1, a1, w2, b2, a2, w3, b3, a3, w41, b41, w42, b42) = pt

    def conv(x, w, b):
        y = lax.conv_general_dilated(
            x, jnp.transpose(w, (2, 3, 1, 0)), (1, 1), 'VALID',
            dimension_numbers=('NHWC', 'HWIO', 'NHWC'))
        return y + b

    def prelu(x, a):
        return jnp.where(x >= 0, x, x * a)

    y = prelu(conv(x_nhwc, w1, b1), a1)
    ph, pw = (-y.shape[1]) % 2, (-y.shape[2]) % 2            # ceil_mode=True
    y = jnp.pad(y, ((0, 0), (0, ph), (0, pw), (0, 0)),
                constant_values=-jnp.inf)
    y = lax.reduce_window(y, -jnp.inf, lax.max,
                          (1, 2, 2, 1), (1, 2, 2, 1), 'VALID')
    y = prelu(conv(y, w2, b2), a2)
    y = prelu(conv(y, w3, b3), a3)
    a_prob = jax.nn.softmax(conv(y, w41, b41), axis=-1)
    b_reg = conv(y, w42, b42)
    return b_reg, a_prob


if __name__ == "__main__":
    key = jax.random.PRNGKey(0)
    kx, kp = jax.random.split(key)

    # PyTorch NCHW input [2, 3, 16, 16]  <->  NHWC here.
    N, H, W, C = 2, 16, 16, 3
    x = jax.random.normal(kx, (N, H, W, C), jnp.float32)

    pt_params = make_pt_params(kp)
    kparams = prep_kernel_params(pt_params)

    out_b, out_a = pnet_pallas(x, kparams)
    out_b = jax.block_until_ready(out_b)
    out_a = jax.block_until_ready(out_a)

    ref_b, ref_a = reference(x, pt_params)
    err_b = float(jnp.max(jnp.abs(out_b - ref_b)))
    err_a = float(jnp.max(jnp.abs(out_a - ref_a)))
    assert out_b.shape == ref_b.shape and out_a.shape == ref_a.shape
    assert jnp.allclose(out_b, ref_b, atol=2e-3, rtol=2e-3), f"bbox err {err_b}"
    assert jnp.allclose(out_a, ref_a, atol=2e-3, rtol=2e-3), f"prob err {err_a}"

    print("KERNEL_OK")
</pallas_src>

<mosaic_0001>
module attributes {stable_mosaic.version = 11 : i64} {
  func.func @_pnet_kernel(%arg0: i32, %arg1: memref<1x16x16x3xf32, #tpu.memory_space<vmem>>, %arg2: memref<27x10xf32, #tpu.memory_space<vmem>>, %arg3: memref<1x10xf32, #tpu.memory_space<vmem>>, %arg4: memref<1x10xf32, #tpu.memory_space<vmem>>, %arg5: memref<90x16xf32, #tpu.memory_space<vmem>>, %arg6: memref<1x16xf32, #tpu.memory_space<vmem>>, %arg7: memref<1x16xf32, #tpu.memory_space<vmem>>, %arg8: memref<144x32xf32, #tpu.memory_space<vmem>>, %arg9: memref<1x32xf32, #tpu.memory_space<vmem>>, %arg10: memref<1x32xf32, #tpu.memory_space<vmem>>, %arg11: memref<32x6xf32, #tpu.memory_space<vmem>>, %arg12: memref<1x6xf32, #tpu.memory_space<vmem>>, %arg13: memref<1x9x6xf32, #tpu.memory_space<vmem>>) attributes {dimension_semantics = [#tpu.dimension_semantics<parallel>], iteration_bounds = array<i64: 2>, scalar_prefetch = 0 : i64, scratch_operands = 0 : i64, tpu.core_type = #tpu.core_type<tc>, window_params = [{transform_indices = @transform_0, window_bounds = array<i64: 1, 16, 16, 3>}, {pipeline_mode = #tpu.pipeline_mode<synchronous>, transform_indices = @transform_1, window_bounds = array<i64: 27, 10>}, {pipeline_mode = #tpu.pipeline_mode<synchronous>, transform_indices = @transform_2, window_bounds = array<i64: 1, 10>}, {pipeline_mode = #tpu.pipeline_mode<synchronous>, transform_indices = @transform_3, window_bounds = array<i64: 1, 10>}, {pipeline_mode = #tpu.pipeline_mode<synchronous>, transform_indices = @transform_4, window_bounds = array<i64: 90, 16>}, {pipeline_mode = #tpu.pipeline_mode<synchronous>, transform_indices = @transform_5, window_bounds = array<i64: 1, 16>}, {pipeline_mode = #tpu.pipeline_mode<synchronous>, transform_indices = @transform_6, window_bounds = array<i64: 1, 16>}, {pipeline_mode = #tpu.pipeline_mode<synchronous>, transform_indices = @transform_7, window_bounds = array<i64: 144, 32>}, {pipeline_mode = #tpu.pipeline_mode<synchronous>, transform_indices = @transform_8, window_bounds = array<i64: 1, 32>}, {pipeline_mode = #tpu.pipeline_mode<synchronous>, transform_indices = @transform_9, window_bounds = array<i64: 1, 32>}, {pipeline_mode = #tpu.pipeline_mode<synchronous>, transform_indices = @transform_10, window_bounds = array<i64: 32, 6>}, {pipeline_mode = #tpu.pipeline_mode<synchronous>, transform_indices = @transform_11, window_bounds = array<i64: 1, 6>}, {transform_indices = @transform_12, window_bounds = array<i64: 1, 9, 6>}]} {
    %c0 = arith.constant 0 : index
    %c0_0 = arith.constant 0 : index
    %c0_1 = arith.constant 0 : index
    %c0_2 = arith.constant 0 : index
    %0 = vector.load %arg1[%c0, %c0_0, %c0_1, %c0_2] : memref<1x16x16x3xf32, #tpu.memory_space<vmem>>, vector<1x16x16x3xf32>
    %1 = vector.shape_cast %0 : vector<1x16x16x3xf32> to vector<16x16x3xf32>
    %2 = vector.extract_strided_slice %1 {offsets = [0, 0, 0], sizes = [14, 14, 3], strides = [1, 1, 1]} : vector<16x16x3xf32> to vector<14x14x3xf32>
    %3 = vector.extract_strided_slice %1 {offsets = [0, 1, 0], sizes = [14, 14, 3], strides = [1, 1, 1]} : vector<16x16x3xf32> to vector<14x14x3xf32>
    %4 = vector.extract_strided_slice %1 {offsets = [0, 2, 0], sizes = [14, 14, 3], strides = [1, 1, 1]} : vector<16x16x3xf32> to vector<14x14x3xf32>
    %5 = vector.extract_strided_slice %1 {offsets = [1, 0, 0], sizes = [14, 14, 3], strides = [1, 1, 1]} : vector<16x16x3xf32> to vector<14x14x3xf32>
    %6 = vector.extract_strided_slice %1 {offsets = [1, 1, 0], sizes = [14, 14, 3], strides = [1, 1, 1]} : vector<16x16x3xf32> to vector<14x14x3xf32>
    %7 = vector.extract_strided_slice %1 {offsets = [1, 2, 0], sizes = [14, 14, 3], strides = [1, 1, 1]} : vector<16x16x3xf32> to vector<14x14x3xf32>
    %8 = vector.extract_strided_slice %1 {offsets = [2, 0, 0], sizes = [14, 14, 3], strides = [1, 1, 1]} : vector<16x16x3xf32> to vector<14x14x3xf32>
    %9 = vector.extract_strided_slice %1 {offsets = [2, 1, 0], sizes = [14, 14, 3], strides = [1, 1, 1]} : vector<16x16x3xf32> to vector<14x14x3xf32>
    %10 = vector.extract_strided_slice %1 {offsets = [2, 2, 0], sizes = [14, 14, 3], strides = [1, 1, 1]} : vector<16x16x3xf32> to vector<14x14x3xf32>
    %11 = tpu.concatenate %2, %3, %4, %5, %6, %7, %8, %9, %10 in 2 : vector<14x14x3xf32>, vector<14x14x3xf32>, vector<14x14x3xf32>, vector<14x14x3xf32>, vector<14x14x3xf32>, vector<14x14x3xf32>, vector<14x14x3xf32>, vector<14x14x3xf32>, vector<14x14x3xf32> -> vector<14x14x27xf32>
    %12 = vector.shape_cast %11 : vector<14x14x27xf32> to vector<196x27xf32>
    %c0_3 = arith.constant 0 : index
    %c0_4 = arith.constant 0 : index
    %13 = vector.load %arg2[%c0_3, %c0_4] : memref<27x10xf32, #tpu.memory_space<vmem>>, vector<27x10xf32>
    %cst = arith.constant dense<0.000000e+00> : vector<196x10xf32>
    %14 = tpu.matmul %12, %13, %cst {dimension_numbers = #tpu.dot_dimension_numbers<[1], [0], [0], [1], [0, 0, 1, 1], [], []>} : vector<196x27xf32>, vector<27x10xf32>, vector<196x10xf32> -> vector<196x10xf32>
    %c0_5 = arith.constant 0 : index
    %c0_6 = arith.constant 0 : index
    %15 = vector.load %arg3[%c0_5, %c0_6] : memref<1x10xf32, #tpu.memory_space<vmem>>, vector<1x10xf32>
    %16 = vector.broadcast %15 : vector<1x10xf32> to vector<196x10xf32>
    %17 = arith.addf %14, %16 : vector<196x10xf32>
    %c0_7 = arith.constant 0 : index
    %c0_8 = arith.constant 0 : index
    %18 = vector.load %arg4[%c0_7, %c0_8] : memref<1x10xf32, #tpu.memory_space<vmem>>, vector<1x10xf32>
    %cst_9 = arith.constant 0.000000e+00 : f32
    %19 = vector.broadcast %cst_9 : f32 to vector<196x10xf32>
    %20 = arith.cmpf oge, %17, %19 : vector<196x10xf32>
    %21 = vector.broadcast %18 : vector<1x10xf32> to vector<196x10xf32>
    %22 = arith.mulf %17, %21 : vector<196x10xf32>
    %23 = arith.select %20, %17, %22 : vector<196x10xi1>, vector<196x10xf32>
    %24 = vector.shape_cast %23 : vector<196x10xf32> to vector<14x14x10xf32>
    %25 = vector.shape_cast %24 : vector<14x14x10xf32> to vector<7x2x14x10xf32>
    %26 = vector.extract_strided_slice %25 {offsets = [0, 0, 0, 0], sizes = [7, 1, 14, 10], strides = [1, 1, 1, 1]} : vector<7x2x14x10xf32> to vector<7x1x14x10xf32>
    %27 = vector.shape_cast %26 : vector<7x1x14x10xf32> to vector<7x14x10xf32>
    %28 = vector.extract_strided_slice %25 {offsets = [0, 1, 0, 0], sizes = [7, 1, 14, 10], strides = [1, 1, 1, 1]} : vector<7x2x14x10xf32> to vector<7x1x14x10xf32>
    %29 = vector.shape_cast %28 : vector<7x1x14x10xf32> to vector<7x14x10xf32>
    %30 = arith.maximumf %27, %29 : vector<7x14x10xf32>
    %31 = vector.extract_strided_slice %30 {offsets = [0, 0, 0], sizes = [7, 1, 10], strides = [1, 1, 1]} : vector<7x14x10xf32> to vector<7x1x10xf32>
    %32 = vector.extract_strided_slice %30 {offsets = [0, 1, 0], sizes = [7, 1, 10], strides = [1, 1, 1]} : vector<7x14x10xf32> to vector<7x1x10xf32>
    %33 = arith.maximumf %31, %32 : vector<7x1x10xf32>
    %34 = vector.extract_strided_slice %30 {offsets = [0, 2, 0], sizes = [7, 1, 10], strides = [1, 1, 1]} : vector<7x14x10xf32> to vector<7x1x10xf32>
    %35 = vector.extract_strided_slice %30 {offsets = [0, 3, 0], sizes = [7, 1, 10], strides = [1, 1, 1]} : vector<7x14x10xf32> to vector<7x1x10xf32>
    %36 = arith.maximumf %34, %35 : vector<7x1x10xf32>
    %37 = vector.extract_strided_slice %30 {offsets = [0, 4, 0], sizes = [7, 1, 10], strides = [1, 1, 1]} : vector<7x14x10xf32> to vector<7x1x10xf32>
    %38 = vector.extract_strided_slice %30 {offsets = [0, 5, 0], sizes = [7, 1, 10], strides = [1, 1, 1]} : vector<7x14x10xf32> to vector<7x1x10xf32>
    %39 = arith.maximumf %37, %38 : vector<7x1x10xf32>
    %40 = vector.extract_strided_slice %30 {offsets = [0, 6, 0], sizes = [7, 1, 10], strides = [1, 1, 1]} : vector<7x14x10xf32> to vector<7x1x10xf32>
    %41 = vector.extract_strided_slice %30 {offsets = [0, 7, 0], sizes = [7, 1, 10], strides = [1, 1, 1]} : vector<7x14x10xf32> to vector<7x1x10xf32>
    %42 = arith.maximumf %40, %41 : vector<7x1x10xf32>
    %43 = vector.extract_strided_slice %30 {offsets = [0, 8, 0], sizes = [7, 1, 10], strides = [1, 1, 1]} : vector<7x14x10xf32> to vector<7x1x10xf32>
    %44 = vector.extract_strided_slice %30 {offsets = [0, 9, 0], sizes = [7, 1, 10], strides = [1, 1, 1]} : vector<7x14x10xf32> to vector<7x1x10xf32>
    %45 = arith.maximumf %43, %44 : vector<7x1x10xf32>
    %46 = vector.extract_strided_slice %30 {offsets = [0, 10, 0], sizes = [7, 1, 10], strides = [1, 1, 1]} : vector<7x14x10xf32> to vector<7x1x10xf32>
    %47 = vector.extract_strided_slice %30 {offsets = [0, 11, 0], sizes = [7, 1, 10], strides = [1, 1, 1]} : vector<7x14x10xf32> to vector<7x1x10xf32>
    %48 = arith.maximumf %46, %47 : vector<7x1x10xf32>
    %49 = vector.extract_strided_slice %30 {offsets = [0, 12, 0], sizes = [7, 1, 10], strides = [1, 1, 1]} : vector<7x14x10xf32> to vector<7x1x10xf32>
    %50 = vector.extract_strided_slice %30 {offsets = [0, 13, 0], sizes = [7, 1, 10], strides = [1, 1, 1]} : vector<7x14x10xf32> to vector<7x1x10xf32>
    %51 = arith.maximumf %49, %50 : vector<7x1x10xf32>
    %52 = tpu.concatenate %33, %36, %39, %42, %45, %48, %51 in 1 : vector<7x1x10xf32>, vector<7x1x10xf32>, vector<7x1x10xf32>, vector<7x1x10xf32>, vector<7x1x10xf32>, vector<7x1x10xf32>, vector<7x1x10xf32> -> vector<7x7x10xf32>
    %53 = vector.extract_strided_slice %52 {offsets = [0, 0, 0], sizes = [5, 5, 10], strides = [1, 1, 1]} : vector<7x7x10xf32> to vector<5x5x10xf32>
    %54 = vector.extract_strided_slice %52 {offsets = [0, 1, 0], sizes = [5, 5, 10], strides = [1, 1, 1]} : vector<7x7x10xf32> to vector<5x5x10xf32>
    %55 = vector.extract_strided_slice %52 {offsets = [0, 2, 0], sizes = [5, 5, 10], strides = [1, 1, 1]} : vector<7x7x10xf32> to vector<5x5x10xf32>
    %56 = vector.extract_strided_slice %52 {offsets = [1, 0, 0], sizes = [5, 5, 10], strides = [1, 1, 1]} : vector<7x7x10xf32> to vector<5x5x10xf32>
    %57 = vector.extract_strided_slice %52 {offsets = [1, 1, 0], sizes = [5, 5, 10], strides = [1, 1, 1]} : vector<7x7x10xf32> to vector<5x5x10xf32>
    %58 = vector.extract_strided_slice %52 {offsets = [1, 2, 0], sizes = [5, 5, 10], strides = [1, 1, 1]} : vector<7x7x10xf32> to vector<5x5x10xf32>
    %59 = vector.extract_strided_slice %52 {offsets = [2, 0, 0], sizes = [5, 5, 10], strides = [1, 1, 1]} : vector<7x7x10xf32> to vector<5x5x10xf32>
    %60 = vector.extract_strided_slice %52 {offsets = [2, 1, 0], sizes = [5, 5, 10], strides = [1, 1, 1]} : vector<7x7x10xf32> to vector<5x5x10xf32>
    %61 = vector.extract_strided_slice %52 {offsets = [2, 2, 0], sizes = [5, 5, 10], strides = [1, 1, 1]} : vector<7x7x10xf32> to vector<5x5x10xf32>
    %62 = tpu.concatenate %53, %54, %55, %56, %57, %58, %59, %60, %61 in 2 : vector<5x5x10xf32>, vector<5x5x10xf32>, vector<5x5x10xf32>, vector<5x5x10xf32>, vector<5x5x10xf32>, vector<5x5x10xf32>, vector<5x5x10xf32>, vector<5x5x10xf32>, vector<5x5x10xf32> -> vector<5x5x90xf32>
    %63 = vector.shape_cast %62 : vector<5x5x90xf32> to vector<25x90xf32>
    %c0_10 = arith.constant 0 : index
    %c0_11 = arith.constant 0 : index
    %64 = vector.load %arg5[%c0_10, %c0_11] : memref<90x16xf32, #tpu.memory_space<vmem>>, vector<90x16xf32>
    %cst_12 = arith.constant dense<0.000000e+00> : vector<25x16xf32>
    %65 = tpu.matmul %63, %64, %cst_12 {dimension_numbers = #tpu.dot_dimension_numbers<[1], [0], [0], [1], [0, 0, 1, 1], [], []>} : vector<25x90xf32>, vector<90x16xf32>, vector<25x16xf32> -> vector<25x16xf32>
    %c0_13 = arith.constant 0 : index
    %c0_14 = arith.constant 0 : index
    %66 = vector.load %arg6[%c0_13, %c0_14] : memref<1x16xf32, #tpu.memory_space<vmem>>, vector<1x16xf32>
    %67 = vector.broadcast %66 : vector<1x16xf32> to vector<25x16xf32>
    %68 = arith.addf %65, %67 : vector<25x16xf32>
    %c0_15 = arith.constant 0 : index
    %c0_16 = arith.constant 0 : index
    %69 = vector.load %arg7[%c0_15, %c0_16] : memref<1x16xf32, #tpu.memory_space<vmem>>, vector<1x16xf32>
    %cst_17 = arith.constant 0.000000e+00 : f32
    %70 = vector.broadcast %cst_17 : f32 to vector<25x16xf32>
    %71 = arith.cmpf oge, %68, %70 : vector<25x16xf32>
    %72 = vector.broadcast %69 : vector<1x16xf32> to vector<25x16xf32>
    %73 = arith.mulf %68, %72 : vector<25x16xf32>
    %74 = arith.select %71, %68, %73 : vector<25x16xi1>, vector<25x16xf32>
    %75 = vector.shape_cast %74 : vector<25x16xf32> to vector<5x5x16xf32>
    %76 = vector.extract_strided_slice %75 {offsets = [0, 0, 0], sizes = [3, 3, 16], strides = [1, 1, 1]} : vector<5x5x16xf32> to vector<3x3x16xf32>
    %77 = vector.extract_strided_slice %75 {offsets = [0, 1, 0], sizes = [3, 3, 16], strides = [1, 1, 1]} : vector<5x5x16xf32> to vector<3x3x16xf32>
    %78 = vector.extract_strided_slice %75 {offsets = [0, 2, 0], sizes = [3, 3, 16], strides = [1, 1, 1]} : vector<5x5x16xf32> to vector<3x3x16xf32>
    %79 = vector.extract_strided_slice %75 {offsets = [1, 0, 0], sizes = [3, 3, 16], strides = [1, 1, 1]} : vector<5x5x16xf32> to vector<3x3x16xf32>
    %80 = vector.extract_strided_slice %75 {offsets = [1, 1, 0], sizes = [3, 3, 16], strides = [1, 1, 1]} : vector<5x5x16xf32> to vector<3x3x16xf32>
    %81 = vector.extract_strided_slice %75 {offsets = [1, 2, 0], sizes = [3, 3, 16], strides = [1, 1, 1]} : vector<5x5x16xf32> to vector<3x3x16xf32>
    %82 = vector.extract_strided_slice %75 {offsets = [2, 0, 0], sizes = [3, 3, 16], strides = [1, 1, 1]} : vector<5x5x16xf32> to vector<3x3x16xf32>
    %83 = vector.extract_strided_slice %75 {offsets = [2, 1, 0], sizes = [3, 3, 16], strides = [1, 1, 1]} : vector<5x5x16xf32> to vector<3x3x16xf32>
    %84 = vector.extract_strided_slice %75 {offsets = [2, 2, 0], sizes = [3, 3, 16], strides = [1, 1, 1]} : vector<5x5x16xf32> to vector<3x3x16xf32>
    %85 = tpu.concatenate %76, %77, %78, %79, %80, %81, %82, %83, %84 in 2 : vector<3x3x16xf32>, vector<3x3x16xf32>, vector<3x3x16xf32>, vector<3x3x16xf32>, vector<3x3x16xf32>, vector<3x3x16xf32>, vector<3x3x16xf32>, vector<3x3x16xf32>, vector<3x3x16xf32> -> vector<3x3x144xf32>
    %86 = vector.shape_cast %85 : vector<3x3x144xf32> to vector<9x144xf32>
    %c0_18 = arith.constant 0 : index
    %c0_19 = arith.constant 0 : index
    %87 = vector.load %arg8[%c0_18, %c0_19] : memref<144x32xf32, #tpu.memory_space<vmem>>, vector<144x32xf32>
    %cst_20 = arith.constant dense<0.000000e+00> : vector<9x32xf32>
    %88 = tpu.matmul %86, %87, %cst_20 {dimension_numbers = #tpu.dot_dimension_numbers<[1], [0], [0], [1], [0, 0, 1, 1], [], []>} : vector<9x144xf32>, vector<144x32xf32>, vector<9x32xf32> -> vector<9x32xf32>
    %c0_21 = arith.constant 0 : index
    %c0_22 = arith.constant 0 : index
    %89 = vector.load %arg9[%c0_21, %c0_22] : memref<1x32xf32, #tpu.memory_space<vmem>>, vector<1x32xf32>
    %90 = vector.broadcast %89 : vector<1x32xf32> to vector<9x32xf32>
    %91 = arith.addf %88, %90 : vector<9x32xf32>
    %c0_23 = arith.constant 0 : index
    %c0_24 = arith.constant 0 : index
    %92 = vector.load %arg10[%c0_23, %c0_24] : memref<1x32xf32, #tpu.memory_space<vmem>>, vector<1x32xf32>
    %cst_25 = arith.constant 0.000000e+00 : f32
    %93 = vector.broadcast %cst_25 : f32 to vector<9x32xf32>
    %94 = arith.cmpf oge, %91, %93 : vector<9x32xf32>
    %95 = vector.broadcast %92 : vector<1x32xf32> to vector<9x32xf32>
    %96 = arith.mulf %91, %95 : vector<9x32xf32>
    %97 = arith.select %94, %91, %96 : vector<9x32xi1>, vector<9x32xf32>
    %c0_26 = arith.constant 0 : index
    %c0_27 = arith.constant 0 : index
    %98 = vector.load %arg11[%c0_26, %c0_27] : memref<32x6xf32, #tpu.memory_space<vmem>>, vector<32x6xf32>
    %cst_28 = arith.constant dense<0.000000e+00> : vector<9x6xf32>
    %99 = tpu.matmul %97, %98, %cst_28 {dimension_numbers = #tpu.dot_dimension_numbers<[1], [0], [0], [1], [0, 0, 1, 1], [], []>} : vector<9x32xf32>, vector<32x6xf32>, vector<9x6xf32> -> vector<9x6xf32>
    %c0_29 = arith.constant 0 : index
    %c0_30 = arith.constant 0 : index
    %100 = vector.load %arg12[%c0_29, %c0_30] : memref<1x6xf32, #tpu.memory_space<vmem>>, vector<1x6xf32>
    %101 = vector.broadcast %100 : vector<1x6xf32> to vector<9x6xf32>
    %102 = arith.addf %99, %101 : vector<9x6xf32>
    %103 = vector.extract_strided_slice %102 {offsets = [0, 0], sizes = [9, 4], strides = [1, 1]} : vector<9x6xf32> to vector<9x4xf32>
    %104 = vector.extract_strided_slice %102 {offsets = [0, 4], sizes = [9, 2], strides = [1, 1]} : vector<9x6xf32> to vector<9x2xf32>
    %cst_31 = arith.constant dense<0xFF800000> : vector<9xf32>
    %105 = vector.multi_reduction <maximumf>, %104, %cst_31 [1] : vector<9x2xf32> to vector<9xf32>
    %106 = vector.shape_cast %105 : vector<9xf32> to vector<9x1xf32>
    %107 = vector.broadcast %106 : vector<9x1xf32> to vector<9x2xf32>
    %108 = arith.subf %104, %107 : vector<9x2xf32>
    %109 = math.exp %108 : vector<9x2xf32>
    %cst_32 = arith.constant dense<0.000000e+00> : vector<9xf32>
    %110 = vector.multi_reduction <add>, %109, %cst_32 [1] : vector<9x2xf32> to vector<9xf32>
    %111 = vector.shape_cast %110 : vector<9xf32> to vector<9x1xf32>
    %112 = vector.broadcast %111 : vector<9x1xf32> to vector<9x2xf32>
    %113 = arith.divf %109, %112 : vector<9x2xf32>
    %114 = tpu.concatenate %103, %113 in 1 : vector<9x4xf32>, vector<9x2xf32> -> vector<9x6xf32>
    %c0_33 = arith.constant 0 : index
    %c0_34 = arith.constant 0 : index
    %c0_35 = arith.constant 0 : index
    %115 = vector.load %arg13[%c0_33, %c0_34, %c0_35] : memref<1x9x6xf32, #tpu.memory_space<vmem>>, vector<1x9x6xf32>
    %116 = vector.shape_cast %115 : vector<1x9x6xf32> to vector<9x6xf32>
    %117 = vector.shape_cast %114 : vector<9x6xf32> to vector<1x9x6xf32>
    tpu.vector_store %arg13[%c0_33, %c0_34, %c0_35], %117 {strides = array<i32>} : memref<1x9x6xf32, #tpu.memory_space<vmem>>, vector<1x9x6xf32>,
    return
  }
  func.func @transform_0(%arg0: i32) -> (i32, i32, i32, i32) {
    %c0_i32 = arith.constant 0 : i32
    %c0_i32_0 = arith.constant 0 : i32
    %c0_i32_1 = arith.constant 0 : i32
    %c0_i32_2 = arith.constant 0 : i32
    return %arg0, %c0_i32, %c0_i32_0, %c0_i32_1 : i32, i32, i32, i32
  }
  func.func @transform_1(%arg0: i32) -> (i32, i32) {
    %c0_i32 = arith.constant 0 : i32
    %c0_i32_0 = arith.constant 0 : i32
    %c0_i32_1 = arith.constant 0 : i32
    return %c0_i32, %c0_i32_0 : i32, i32
  }
  func.func @transform_2(%arg0: i32) -> (i32, i32) {
    %c0_i32 = arith.constant 0 : i32
    %c0_i32_0 = arith.constant 0 : i32
    %c0_i32_1 = arith.constant 0 : i32
    return %c0_i32, %c0_i32_0 : i32, i32
  }
  func.func @transform_3(%arg0: i32) -> (i32, i32) {
    %c0_i32 = arith.constant 0 : i32
    %c0_i32_0 = arith.constant 0 : i32
    %c0_i32_1 = arith.constant 0 : i32
    return %c0_i32, %c0_i32_0 : i32, i32
  }
  func.func @transform_4(%arg0: i32) -> (i32, i32) {
    %c0_i32 = arith.constant 0 : i32
    %c0_i32_0 = arith.constant 0 : i32
    %c0_i32_1 = arith.constant 0 : i32
    return %c0_i32, %c0_i32_0 : i32, i32
  }
  func.func @transform_5(%arg0: i32) -> (i32, i32) {
    %c0_i32 = arith.constant 0 : i32
    %c0_i32_0 = arith.constant 0 : i32
    %c0_i32_1 = arith.constant 0 : i32
    return %c0_i32, %c0_i32_0 : i32, i32
  }
  func.func @transform_6(%arg0: i32) -> (i32, i32) {
    %c0_i32 = arith.constant 0 : i32
    %c0_i32_0 = arith.constant 0 : i32
    %c0_i32_1 = arith.constant 0 : i32
    return %c0_i32, %c0_i32_0 : i32, i32
  }
  func.func @transform_7(%arg0: i32) -> (i32, i32) {
    %c0_i32 = arith.constant 0 : i32
    %c0_i32_0 = arith.constant 0 : i32
    %c0_i32_1 = arith.constant 0 : i32
    return %c0_i32, %c0_i32_0 : i32, i32
  }
  func.func @transform_8(%arg0: i32) -> (i32, i32) {
    %c0_i32 = arith.constant 0 : i32
    %c0_i32_0 = arith.constant 0 : i32
    %c0_i32_1 = arith.constant 0 : i32
    return %c0_i32, %c0_i32_0 : i32, i32
  }
  func.func @transform_9(%arg0: i32) -> (i32, i32) {
    %c0_i32 = arith.constant 0 : i32
    %c0_i32_0 = arith.constant 0 : i32
    %c0_i32_1 = arith.constant 0 : i32
    return %c0_i32, %c0_i32_0 : i32, i32
  }
  func.func @transform_10(%arg0: i32) -> (i32, i32) {
    %c0_i32 = arith.constant 0 : i32
    %c0_i32_0 = arith.constant 0 : i32
    %c0_i32_1 = arith.constant 0 : i32
    return %c0_i32, %c0_i32_0 : i32, i32
  }
  func.func @transform_11(%arg0: i32) -> (i32, i32) {
    %c0_i32 = arith.constant 0 : i32
    %c0_i32_0 = arith.constant 0 : i32
    %c0_i32_1 = arith.constant 0 : i32
    return %c0_i32, %c0_i32_0 : i32, i32
  }
  func.func @transform_12(%arg0: i32) -> (i32, i32, i32) {
    %c0_i32 = arith.constant 0 : i32
    %c0_i32_0 = arith.constant 0 : i32
    %c0_i32_1 = arith.constant 0 : i32
    return %arg0, %c0_i32, %c0_i32_0 : i32, i32, i32
  }
}

</mosaic_0001>

<llo_original>
// kernel: tpu_custom_call.1
$region0: #{tpu_custom_call.1}
  #allocation0 [shape = 'u32[]', space=smem, size = 0x4, offset = 0x4, fixed_abs, tag = 'smem constant byte address 0x4 - core index']
  #allocation1 [shape = 'u32[144,128]{1,0:T(1,128)}', space=vmem, size = 0x12000, scoped, tag = 'internal scratch']
  %s0 = inlined_call_operand.vmem [shape: f32[2,16,16,3], index: 0, kind: input, shape index: {}]
  %s1 = inlined_call_operand.vmem [shape: f32[27,10], index: 1, kind: input, shape index: {}]
  %s2 = inlined_call_operand.vmem [shape: f32[1,10], index: 2, kind: input, shape index: {}]
  %s3 = inlined_call_operand.vmem [shape: f32[1,10], index: 3, kind: input, shape index: {}]
  %s4 = inlined_call_operand.vmem [shape: f32[90,16], index: 4, kind: input, shape index: {}]
  %s5 = inlined_call_operand.vmem [shape: f32[1,16], index: 5, kind: input, shape index: {}]
  %s6 = inlined_call_operand.vmem [shape: f32[1,16], index: 6, kind: input, shape index: {}]
  %s7 = inlined_call_operand.vmem [shape: f32[144,32], index: 7, kind: input, shape index: {}]
  %s8 = inlined_call_operand.vmem [shape: f32[1,32], index: 8, kind: input, shape index: {}]
  %s9 = inlined_call_operand.vmem [shape: f32[1,32], index: 9, kind: input, shape index: {}]
  %s10 = inlined_call_operand.vmem [shape: f32[32,6], index: 10, kind: input, shape index: {}]
  %s11 = inlined_call_operand.vmem [shape: f32[1,6], index: 11, kind: input, shape index: {}]
  %s12 = inlined_call_operand.vmem [shape: f32[2,9,6], index: 12, kind: output, shape index: {}]
  %s13 = sld [smem:[#allocation0]]
  $region81: #{tpu_custom_call.1} parent=0
    _
  %s15 = ssub.s32 1, %s13
  %s16 = scalar_select 0, %s15, %s13
  loop: start=0, step=1, limit=4
  $region2: #{tpu_custom_call.1} parent=0 // loop_pre_header
    _
  $region3: #{tpu_custom_call.1} parent=0 // loop_header
    %s18 = sphi 0, %s22
    %p19 = scmp.ge.s32.totalorder %s18, 4
    %s28 = sphi 0, %s30
    %s31 = sphi 0, %s28
    %s32 = sphi 0, %s31
    %s48 = sphi 0, %s32
    %s52 = sphi 0, %s52
    %s54 = sphi 0, %s52
    %s55 = sphi 0, %s54
    %s69 = sphi 0, %s55
    %s73 = sphi 0, %s73
    %s75 = sphi 0, %s73
    %s76 = sphi 0, %s75
    %s90 = sphi 0, %s76
    %s94 = sphi 0, %s94
    %s96 = sphi 0, %s94
    %s97 = sphi 0, %s96
    %s111 = sphi 0, %s97
    %s115 = sphi 0, %s115
    %s117 = sphi 0, %s115
    %s118 = sphi 0, %s117
    %s132 = sphi 0, %s118
    %s136 = sphi 0, %s136
    %s138 = sphi 0, %s136
    %s139 = sphi 0, %s138
    %s153 = sphi 0, %s139
    %s157 = sphi 0, %s157
    %s159 = sphi 0, %s157
    %s160 = sphi 0, %s159
    %s174 = sphi 0, %s160
    %s178 = sphi 0, %s178
    %s180 = sphi 0, %s178
    %s181 = sphi 0, %s180
    %s195 = sphi 0, %s181
    %s199 = sphi 0, %s199
    %s201 = sphi 0, %s199
    %s202 = sphi 0, %s201
    %s216 = sphi 0, %s202
    %s220 = sphi 0, %s220
    %s222 = sphi 0, %s220
    %s223 = sphi 0, %s222
    %s237 = sphi 0, %s223
    %s241 = sphi 0, %s241
    %s243 = sphi 0, %s241
    %s244 = sphi 0, %s243
    %s258 = sphi 0, %s244
    %s262 = sphi 0, %s262
    %s264 = sphi 0, %s262
    %s265 = sphi 0, %s264
    %s279 = sphi 0, %s265
    %s285 = sphi 0, %s287
    %s288 = sphi 0, %s285
    %s289 = sphi 0, %s288
    %s305 = sphi 0, %s289
  $region4: #{tpu_custom_call.1} parent=0 // loop_header_branch
    %21 = sbr.rel (%p19) target = $region8
  $region5: #{tpu_custom_call.1} parent=0 // loop_body
    %s23 = ssub.s32 %s18, 1
    %s24 = ssub.s32 %s18, 2
    %s25 = sadd.s32 %s18, 1
    %s26 = ssub.s32 %s18, %s25
    %p27 = scmp.eq.s32.totalorder %s26, 0
    %s29 = sadd.s32 %s28, 1
    %s30 = scalar_select %p27, %s28, %s29
    %p33 = pneg %p27
    %p34 = scmp.eq.s32.totalorder %s18, 1
    %p35 = por %p33, %p34
    %p36 = scmp.ne.s32.totalorder %s28, %s31
    %p37 = scmp.eq.s32.totalorder %s18, 0
    %p38 = por %p36, %p37
    %p39 = scmp.ne.s32.totalorder %s28, %s31
    %p40 = scmp.eq.s32.totalorder %s23, 1
    %p41 = por %p39, %p40
    %p42 = scmp.ne.s32.totalorder %s31, %s32
    %p43 = scmp.eq.s32.totalorder %s23, 0
    %p44 = por %p42, %p43
    %p45 = scmp.ne.s32.totalorder %s31, %s32
    %p46 = scmp.eq.s32.totalorder %s24, 1
    %p47 = por %p45, %p46
    %p49 = scmp.ne.s32.totalorder %s32, %s48
    %p50 = scmp.eq.s32.totalorder %s24, 0
    %p51 = por %p49, %p50
    %s53 = sadd.s32 %s52, 1
    %p56 = scmp.eq.s32.totalorder %s18, 1
    %p57 = scmp.ne.s32.totalorder %s52, %s54
    %p58 = scmp.eq.s32.totalorder %s18, 0
    %p59 = por %p57, %p58
    %p60 = scmp.ne.s32.totalorder %s52, %s54
    %p61 = scmp.eq.s32.totalorder %s23, 1
    %p62 = por %p60, %p61
    %p63 = scmp.ne.s32.totalorder %s54, %s55
    %p64 = scmp.eq.s32.totalorder %s23, 0
    %p65 = por %p63, %p64
    %p66 = scmp.ne.s32.totalorder %s54, %s55
    %p67 = scmp.eq.s32.totalorder %s24, 1
    %p68 = por %p66, %p67
    %p70 = scmp.ne.s32.totalorder %s55, %s69
    %p71 = scmp.eq.s32.totalorder %s24, 0
    %p72 = por %p70, %p71
    %s74 = sadd.s32 %s73, 1
    %p77 = scmp.eq.s32.totalorder %s18, 1
    %p78 = scmp.ne.s32.totalorder %s73, %s75
    %p79 = scmp.eq.s32.totalorder %s18, 0
    %p80 = por %p78, %p79
    %p81 = scmp.ne.s32.totalorder %s73, %s75
    %p82 = scmp.eq.s32.totalorder %s23, 1
    %p83 = por %p81, %p82
    %p84 = scmp.ne.s32.totalorder %s75, %s76
    %p85 = scmp.eq.s32.totalorder %s23, 0
    %p86 = por %p84, %p85
    %p87 = scmp.ne.s32.totalorder %s75, %s76
    %p88 = scmp.eq.s32.totalorder %s24, 1
    %p89 = por %p87, %p88
    %p91 = scmp.ne.s32.totalorder %s76, %s90
    %p92 = scmp.eq.s32.totalorder %s24, 0
    %p93 = por %p91, %p92
    %s95 = sadd.s32 %s94, 1
    %p98 = scmp.eq.s32.totalorder %s18, 1
    %p99 = scmp.ne.s32.totalorder %s94, %s96
    %p100 = scmp.eq.s32.totalorder %s18, 0
    %p101 = por %p99, %p100
    %p102 = scmp.ne.s32.totalorder %s94, %s96
    %p103 = scmp.eq.s32.totalorder %s23, 1
    %p104 = por %p102, %p103
    %p105 = scmp.ne.s32.totalorder %s96, %s97
    %p106 = scmp.eq.s32.totalorder %s23, 0
    %p107 = por %p105, %p106
    %p108 = scmp.ne.s32.totalorder %s96, %s97
    %p109 = scmp.eq.s32.totalorder %s24, 1
    %p110 = por %p108, %p109
    %p112 = scmp.ne.s32.totalorder %s97, %s111
    %p113 = scmp.eq.s32.totalorder %s24, 0
    %p114 = por %p112, %p113
    %s116 = sadd.s32 %s115, 1
    %p119 = scmp.eq.s32.totalorder %s18, 1
    %p120 = scmp.ne.s32.totalorder %s115, %s117
    %p121 = scmp.eq.s32.totalorder %s18, 0
    %p122 = por %p120, %p121
    %p123 = scmp.ne.s32.totalorder %s115, %s117
    %p124 = scmp.eq.s32.totalorder %s23, 1
    %p125 = por %p123, %p124
    %p126 = scmp.ne.s32.totalorder %s117, %s118
    %p127 = scmp.eq.s32.totalorder %s23, 0
    %p128 = por %p126, %p127
    %p129 = scmp.ne.s32.totalorder %s117, %s118
    %p130 = scmp.eq.s32.totalorder %s24, 1
    %p131 = por %p129, %p130
    %p133 = scmp.ne.s32.totalorder %s118, %s132
    %p134 = scmp.eq.s32.totalorder %s24, 0
    %p135 = por %p133, %p134
    %s137 = sadd.s32 %s136, 1
    %p140 = scmp.eq.s32.totalorder %s18, 1
    %p141 = scmp.ne.s32.totalorder %s136, %s138
    %p142 = scmp.eq.s32.totalorder %s18, 0
    %p143 = por %p141, %p142
    %p144 = scmp.ne.s32.totalorder %s136, %s138
    %p145 = scmp.eq.s32.totalorder %s23, 1
    %p146 = por %p144, %p145
    %p147 = scmp.ne.s32.totalorder %s138, %s139
    %p148 = scmp.eq.s32.totalorder %s23, 0
    %p149 = por %p147, %p148
    %p150 = scmp.ne.s32.totalorder %s138, %s139
    %p151 = scmp.eq.s32.totalorder %s24, 1
    %p152 = por %p150, %p151
    %p154 = scmp.ne.s32.totalorder %s139, %s153
    %p155 = scmp.eq.s32.totalorder %s24, 0
    %p156 = por %p154, %p155
    %s158 = sadd.s32 %s157, 1
    %p161 = scmp.eq.s32.totalorder %s18, 1
    %p162 = scmp.ne.s32.totalorder %s157, %s159
    %p163 = scmp.eq.s32.totalorder %s18, 0
    %p164 = por %p162, %p163
    %p165 = scmp.ne.s32.totalorder %s157, %s159
    %p166 = scmp.eq.s32.totalorder %s23, 1
    %p167 = por %p165, %p166
    %p168 = scmp.ne.s32.totalorder %s159, %s160
    %p169 = scmp.eq.s32.totalorder %s23, 0
    %p170 = por %p168, %p169
    %p171 = scmp.ne.s32.totalorder %s159, %s160
    %p172 = scmp.eq.s32.totalorder %s24, 1
    %p173 = por %p171, %p172
    %p175 = scmp.ne.s32.totalorder %s160, %s174
    %p176 = scmp.eq.s32.totalorder %s24, 0
    %p177 = por %p175, %p176
    %s179 = sadd.s32 %s178, 1
    %p182 = scmp.eq.s32.totalorder %s18, 1
    %p183 = scmp.ne.s32.totalorder %s178, %s180
    %p184 = scmp.eq.s32.totalorder %s18, 0
    %p185 = por %p183, %p184
    %p186 = scmp.ne.s32.totalorder %s178, %s180
    %p187 = scmp.eq.s32.totalorder %s23, 1
    %p188 = por %p186, %p187
    %p189 = scmp.ne.s32.totalorder %s180, %s181
    %p190 = scmp.eq.s32.totalorder %s23, 0
    %p191 = por %p189, %p190
    %p192 = scmp.ne.s32.totalorder %s180, %s181
    %p193 = scmp.eq.s32.totalorder %s24, 1
    %p194 = por %p192, %p193
    %p196 = scmp.ne.s32.totalorder %s181, %s195
    %p197 = scmp.eq.s32.totalorder %s24, 0
    %p198 = por %p196, %p197
    %s200 = sadd.s32 %s199, 1
    %p203 = scmp.eq.s32.totalorder %s18, 1
    %p204 = scmp.ne.s32.totalorder %s199, %s201
    %p205 = scmp.eq.s32.totalorder %s18, 0
    %p206 = por %p204, %p205
    %p207 = scmp.ne.s32.totalorder %s199, %s201
    %p208 = scmp.eq.s32.totalorder %s23, 1
    %p209 = por %p207, %p208
    %p210 = scmp.ne.s32.totalorder %s201, %s202
    %p211 = scmp.eq.s32.totalorder %s23, 0
    %p212 = por %p210, %p211
    %p213 = scmp.ne.s32.totalorder %s201, %s202
    %p214 = scmp.eq.s32.totalorder %s24, 1
    %p215 = por %p213, %p214
    %p217 = scmp.ne.s32.totalorder %s202, %s216
    %p218 = scmp.eq.s32.totalorder %s24, 0
    %p219 = por %p217, %p218
    %s221 = sadd.s32 %s220, 1
    %p224 = scmp.eq.s32.totalorder %s18, 1
    %p225 = scmp.ne.s32.totalorder %s220, %s222
    %p226 = scmp.eq.s32.totalorder %s18, 0
    %p227 = por %p225, %p226
    %p228 = scmp.ne.s32.totalorder %s220, %s222
    %p229 = scmp.eq.s32.totalorder %s23, 1
    %p230 = por %p228, %p229
    %p231 = scmp.ne.s32.totalorder %s222, %s223
    %p232 = scmp.eq.s32.totalorder %s23, 0
    %p233 = por %p231, %p232
    %p234 = scmp.ne.s32.totalorder %s222, %s223
    %p235 = scmp.eq.s32.totalorder %s24, 1
    %p236 = por %p234, %p235
    %p238 = scmp.ne.s32.totalorder %s223, %s237
    %p239 = scmp.eq.s32.totalorder %s24, 0
    %p240 = por %p238, %p239
    %s242 = sadd.s32 %s241, 1
    %p245 = scmp.eq.s32.totalorder %s18, 1
    %p246 = scmp.ne.s32.totalorder %s241, %s243
    %p247 = scmp.eq.s32.totalorder %s18, 0
    %p248 = por %p246, %p247
    %p249 = scmp.ne.s32.totalorder %s241, %s243
    %p250 = scmp.eq.s32.totalorder %s23, 1
    %p251 = por %p249, %p250
    %p252 = scmp.ne.s32.totalorder %s243, %s244
    %p253 = scmp.eq.s32.totalorder %s23, 0
    %p254 = por %p252, %p253
    %p255 = scmp.ne.s32.totalorder %s243, %s244
    %p256 = scmp.eq.s32.totalorder %s24, 1
    %p257 = por %p255, %p256
    %p259 = scmp.ne.s32.totalorder %s244, %s258
    %p260 = scmp.eq.s32.totalorder %s24, 0
    %p261 = por %p259, %p260
    %s263 = sadd.s32 %s262, 1
    %p266 = scmp.eq.s32.totalorder %s18, 1
    %p267 = scmp.ne.s32.totalorder %s262, %s264
    %p268 = scmp.eq.s32.totalorder %s18, 0
    %p269 = por %p267, %p268
    %p270 = scmp.ne.s32.totalorder %s262, %s264
    %p271 = scmp.eq.s32.totalorder %s23, 1
    %p272 = por %p270, %p271
    %p273 = scmp.ne.s32.totalorder %s264, %s265
    %p274 = scmp.eq.s32.totalorder %s23, 0
    %p275 = por %p273, %p274
    %p276 = scmp.ne.s32.totalorder %s264, %s265
    %p277 = scmp.eq.s32.totalorder %s24, 1
    %p278 = por %p276, %p277
    %p280 = scmp.ne.s32.totalorder %s265, %s279
    %p281 = scmp.eq.s32.totalorder %s24, 0
    %p282 = por %p280, %p281
    %s283 = ssub.s32 %s18, %s25
    %p284 = scmp.eq.s32.totalorder %s283, 0
    %s286 = sadd.s32 %s285, 1
    %s287 = scalar_select %p284, %s285, %s286
    %p290 = pneg %p284
    %p291 = scmp.eq.s32.totalorder %s18, 1
    %p292 = por %p290, %p291
    %p293 = scmp.ne.s32.totalorder %s285, %s288
    %p294 = scmp.eq.s32.totalorder %s18, 0
    %p295 = por %p293, %p294
    %p296 = scmp.ne.s32.totalorder %s285, %s288
    %p297 = scmp.eq.s32.totalorder %s23, 1
    %p298 = por %p296, %p297
    %p299 = scmp.ne.s32.totalorder %s288, %s289
    %p300 = scmp.eq.s32.totalorder %s23, 0
    %p301 = por %p299, %p300
    %p302 = scmp.ne.s32.totalorder %s288, %s289
    %p303 = scmp.eq.s32.totalorder %s24, 1
    %p304 = por %p302, %p303
    %p306 = scmp.ne.s32.totalorder %s289, %s305
    %p307 = scmp.eq.s32.totalorder %s24, 0
    %p308 = por %p306, %p307
    %p309 = scmp.le.s32.totalorder 1, %s18
    %p310 = scmp.lt.s32.totalorder %s18, 3
    %p311 = pnand %p309, %p310
    %p312 = pneg %p311
    // Predicated region
    $region9: #{tpu_custom_call.1} parent=5 // pred_check
      _
    $region10: #{tpu_custom_call.1} parent=5 // pred_check_branch
      %314 = sbr.rel (%p311) target = $region12
    $region11: #{tpu_custom_call.1} parent=5 // pred_region
      %s315 = ssub.s32 %s18, 1
      // Predicated region
      $region13: #{tpu_custom_call.1} parent=11 // pred_check
        %p316 = pneg %p65
      $region14: #{tpu_custom_call.1} parent=11 // pred_check_branch
        %318 = sbr.rel (%p316) target = $region16
      $region15: #{tpu_custom_call.1} parent=11 // pred_region
        _
      $region16: #{tpu_custom_call.1} parent=11 // pred_fallthru
        _
      // Predicated region
      $region17: #{tpu_custom_call.1} parent=11 // pred_check
        %p319 = pneg %p86
      $region18: #{tpu_custom_call.1} parent=11 // pred_check_branch
        %321 = sbr.rel (%p319) target = $region20
      $region19: #{tpu_custom_call.1} parent=11 // pred_region
        _
      $region20: #{tpu_custom_call.1} parent=11 // pred_fallthru
        _
      // Predicated region
      $region21: #{tpu_custom_call.1} parent=11 // pred_check
        %p322 = pneg %p107
      $region22: #{tpu_custom_call.1} parent=11 // pred_check_branch
        %324 = sbr.rel (%p322) target = $region24
      $region23: #{tpu_custom_call.1} parent=11 // pred_region
        _
      $region24: #{tpu_custom_call.1} parent=11 // pred_fallthru
        _
      // Predicated region
      $region25: #{tpu_custom_call.1} parent=11 // pred_check
        %p325 = pneg %p128
      $region26: #{tpu_custom_call.1} parent=11 // pred_check_branch
        %327 = sbr.rel (%p325) target = $region28
      $region27: #{tpu_custom_call.1} parent=11 // pred_region
        _
      $region28: #{tpu_custom_call.1} parent=11 // pred_fallthru
        _
      // Predicated region
      $region29: #{tpu_custom_call.1} parent=11 // pred_check
        %p328 = pneg %p149
      $region30: #{tpu_custom_call.1} parent=11 // pred_check_branch
        %330 = sbr.rel (%p328) target = $region32
      $region31: #{tpu_custom_call.1} parent=11 // pred_region
        _
      $region32: #{tpu_custom_call.1} parent=11 // pred_fallthru
        _
      // Predicated region
      $region33: #{tpu_custom_call.1} parent=11 // pred_check
        %p331 = pneg %p170
      $region34: #{tpu_custom_call.1} parent=11 // pred_check_branch
        %333 = sbr.rel (%p331) target = $region36
      $region35: #{tpu_custom_call.1} parent=11 // pred_region
        _
      $region36: #{tpu_custom_call.1} parent=11 // pred_fallthru
        _
      // Predicated region
      $region37: #{tpu_custom_call.1} parent=11 // pred_check
        %p334 = pneg %p191
      $region38: #{tpu_custom_call.1} parent=11 // pred_check_branch
        %336 = sbr.rel (%p334) target = $region40
      $region39: #{tpu_custom_call.1} parent=11 // pred_region
        _
      $region40: #{tpu_custom_call.1} parent=11 // pred_fallthru
        _
      // Predicated region
      $region41: #{tpu_custom_call.1} parent=11 // pred_check
        %p337 = pneg %p212
      $region42: #{tpu_custom_call.1} parent=11 // pred_check_branch
        %339 = sbr.rel (%p337) target = $region44
      $region43: #{tpu_custom_call.1} parent=11 // pred_region
        _
      $region44: #{tpu_custom_call.1} parent=11 // pred_fallthru
        _
      // Predicated region
      $region45: #{tpu_custom_call.1} parent=11 // pred_check
        %p340 = pneg %p233
      $region46: #{tpu_custom_call.1} parent=11 // pred_check_branch
        %342 = sbr.rel (%p340) target = $region48
      $region47: #{tpu_custom_call.1} parent=11 // pred_region
        _
      $region48: #{tpu_custom_call.1} parent=11 // pred_fallthru
        _
      // Predicated region
      $region49: #{tpu_custom_call.1} parent=11 // pred_check
        %p343 = pneg %p254
      $region50: #{tpu_custom_call.1} parent=11 // pred_check_branch
        %345 = sbr.rel (%p343) target = $region52
      $region51: #{tpu_custom_call.1} parent=11 // pred_region
        _
      $region52: #{tpu_custom_call.1} parent=11 // pred_fallthru
        _
      // Predicated region
      $region53: #{tpu_custom_call.1} parent=11 // pred_check
        %p346 = pneg %p275
      $region54: #{tpu_custom_call.1} parent=11 // pred_check_branch
        %348 = sbr.rel (%p346) target = $region56
      $region55: #{tpu_custom_call.1} parent=11 // pred_region
        _
      $region56: #{tpu_custom_call.1} parent=11 // pred_fallthru
        _
    $region12: #{tpu_custom_call.1} parent=5 // pred_fallthru
      _
    %p349 = scmp.lt.s32.totalorder %s18, 2
    // Predicated region
    $region57: #{tpu_custom_call.1} parent=5 // pred_check
      %p350 = pneg %p349
    $region58: #{tpu_custom_call.1} parent=5 // pred_check_branch
      %352 = sbr.rel (%p350) target = $region60
    $region59: #{tpu_custom_call.1} parent=5 // pred_region
      // Predicated region
      $region61: #{tpu_custom_call.1} parent=59 // pred_check
        %p353 = pneg %p38
      $region62: #{tpu_custom_call.1} parent=59 // pred_check_branch
        %355 = sbr.rel (%p353) target = $region64
      $region63: #{tpu_custom_call.1} parent=59 // pred_region
        %p356 = scmp.lt.s32.totalorder %s18, 1
        %s357 = scalar_select %p356, %s18, 1
        %s358 = smul.addr %s357, 32
        %s359 = smul.addr %s358, 8
        %s360 = scalar_lea.vmem %s0, %s359
      $region64: #{tpu_custom_call.1} parent=59 // pred_fallthru
        _
    $region60: #{tpu_custom_call.1} parent=5 // pred_fallthru
      _
    %p361 = scmp.le.s32.totalorder 1, %s18
    %p362 = scmp.lt.s32.totalorder %s18, 3
    %p363 = pnand %p361, %p362
    %p364 = pneg %p363
    // Predicated region
    $region65: #{tpu_custom_call.1} parent=5 // pred_check
      _
    $region66: #{tpu_custom_call.1} parent=5 // pred_check_branch
      %366 = sbr.rel (%p363) target = $region68
    $region67: #{tpu_custom_call.1} parent=5 // pred_region
      %s367 = ssub.s32 %s18, 1
      %p368 = scmp.lt.s32.totalorder %s23, 1
      %s369 = scalar_select %p368, %s23, 1
      %s370 = smul.addr %s369, 32
      %s371 = smul.addr %s370, 8
      %s372 = scalar_lea.vmem %s0, %s371
      %p373 = pneg %p44
      %p374 = pneg %p41
      %p375 = pneg %p65
      %p376 = pneg %p62
      %p377 = pneg %p86
      %p378 = pneg %p83
      %p379 = pneg %p107
      %p380 = pneg %p104
      %p381 = pneg %p128
      %p382 = pneg %p125
      %p383 = pneg %p149
      %p384 = pneg %p146
      %p385 = pneg %p170
      %p386 = pneg %p167
      %p387 = pneg %p191
      %p388 = pneg %p188
      %p389 = pneg %p212
      %p390 = pneg %p209
      %p391 = pneg %p233
      %p392 = pneg %p230
      %p393 = pneg %p254
      %p394 = pneg %p251
      %p395 = pneg %p275
      %p396 = pneg %p272
      %p397 = pneg %p301
      %p398 = pneg %p298
      %p399 = scmp.lt.s32.totalorder %s23, 1
      %s400 = scalar_select %p399, %s23, 1
      %s401 = smul.addr %s400, 2
      %s402 = smul.addr %s401, 8
      %s403 = scalar_lea.vmem %s12, %s402
      %p404 = scmp.lt.s32.totalorder %s23, 1
      %s405 = scalar_select %p404, %s23, 1
      %s406 = smul.addr %s405, 32
      %s407 = smul.addr %s406, 8
      %s408 = scalar_lea.vmem %s0, %s407
      %p409 = scmp.lt.s32.totalorder %s23, 1
      %s410 = scalar_select %p409, %s23, 1
      %s411 = smul.addr %s410, 2
      %s412 = smul.addr %s411, 8
      %s413 = scalar_lea.vmem %s12, %s412
      %v414 = vld [vmem:[%s408] sm:$0xff]
      %v415 = vld [vmem:[%s408 + $0x8] sm:$0xff]
      %v416 = vld [vmem:[%s408 + $0x10] sm:$0xff]
      %v417 = vld [vmem:[%s408 + $0x18] sm:$0xff]
      %v418 = vld [vmem:[%s408 + $0x20] sm:$0xff]
      %v419 = vld [vmem:[%s408 + $0x28] sm:$0xff]
      %v420 = vld [vmem:[%s408 + $0x30] sm:$0xff]
      %v421 = vld [vmem:[%s408 + $0x38] sm:$0xff]
      %v422 = vld [vmem:[%s408 + $0x40] sm:$0xff]
      %v423 = vld [vmem:[%s408 + $0x48] sm:$0xff]
      %v424 = vld [vmem:[%s408 + $0x50] sm:$0xff]
      %v425 = vld [vmem:[%s408 + $0x58] sm:$0xff]
      %v426 = vld [vmem:[%s408 + $0x60] sm:$0xff]
      %v427 = vld [vmem:[%s408 + $0x68] sm:$0xff]
      %v428 = vld [vmem:[%s408 + $0x70] sm:$0xff]
      %v429 = vld [vmem:[%s408 + $0x78] sm:$0xff]
      %v430 = vld [vmem:[%s408 + $0x80] sm:$0xff]
      %v431 = vld [vmem:[%s408 + $0x88] sm:$0xff]
      %v432 = vld [vmem:[%s408 + $0x90] sm:$0xff]
      %v433 = vld [vmem:[%s408 + $0x98] sm:$0xff]
      %v434 = vld [vmem:[%s408 + $0xa0] sm:$0xff]
      %v435 = vld [vmem:[%s408 + $0xa8] sm:$0xff]
      %v436 = vld [vmem:[%s408 + $0xb0] sm:$0xff]
      %v437 = vld [vmem:[%s408 + $0xb8] sm:$0xff]
      %v438 = vld [vmem:[%s408 + $0xc0] sm:$0xff]
      %v439 = vld [vmem:[%s408 + $0xc8] sm:$0xff]
      %v440 = vld [vmem:[%s408 + $0xd0] sm:$0xff]
      %v441 = vld [vmem:[%s408 + $0xd8] sm:$0xff]
      %v442 = vld [vmem:[%s408 + $0xe0] sm:$0xff]
      %v443 = vld [vmem:[%s408 + $0xe8] sm:$0xff]
      %v444 = vld [vmem:[%s408 + $0xf0] sm:$0xff]
      %v445 = vld [vmem:[%s408 + $0xf8] sm:$0xff]
      %vm474 = vcmask 1046528
      %v475 = vrot.slane %v414, 1
      %v476 = vrot.slane %v415, 1
      %v477 = vsel %vm474, %v475, %v476
      %v478 = vrot.slane %v416, 1
      %v479 = vrot.slane %v417, 1
      %v480 = vsel %vm474, %v478, %v479
      %v481 = vrot.slane %v418, 1
      %v482 = vrot.slane %v419, 1
      %v483 = vsel %vm474, %v481, %v482
      %v484 = vrot.slane %v420, 1
      %v485 = vrot.slane %v421, 1
      %v486 = vsel %vm474, %v484, %v485
      %v487 = vrot.slane %v422, 1
      %v488 = vrot.slane %v423, 1
      %v489 = vsel %vm474, %v487, %v488
      %v490 = vrot.slane %v424, 1
      %v491 = vrot.slane %v425, 1
      %v492 = vsel %vm474, %v490, %v491
      %v493 = vrot.slane %v426, 1
      %v494 = vrot.slane %v427, 1
      %v495 = vsel %vm474, %v493, %v494
      %v496 = vrot.slane %v428, 1
      %v497 = vrot.slane %v429, 1
      %v498 = vsel %vm474, %v496, %v497
      %v499 = vrot.slane %v430, 1
      %v500 = vrot.slane %v431, 1
      %v501 = vsel %vm474, %v499, %v500
      %v502 = vrot.slane %v432, 1
      %v503 = vrot.slane %v433, 1
      %v504 = vsel %vm474, %v502, %v503
      %v505 = vrot.slane %v434, 1
      %v506 = vrot.slane %v435, 1
      %v507 = vsel %vm474, %v505, %v506
      %v508 = vrot.slane %v436, 1
      %v509 = vrot.slane %v437, 1
      %v510 = vsel %vm474, %v508, %v509
      %v511 = vrot.slane %v438, 1
      %v512 = vrot.slane %v439, 1
      %v513 = vsel %vm474, %v511, %v512
      %v514 = vrot.slane %v440, 1
      %v515 = vrot.slane %v441, 1
      %v516 = vsel %vm474, %v514, %v515
      %517 = vrot.lane.b32.xlu0 %v477, 3
      %v518 = vpop.permute.xlu0 %517
      %519 = vrot.lane.b32.xlu0 %v476, 3
      %v520 = vpop.permute.xlu0 %519
      %521 = vrot.lane.b32.xlu0 %v480, 3
      %v522 = vpop.permute.xlu0 %521
      %523 = vrot.lane.b32.xlu0 %v479, 3
      %v524 = vpop.permute.xlu0 %523
      %525 = vrot.lane.b32.xlu0 %v483, 3
      %v526 = vpop.permute.xlu0 %525
      %527 = vrot.lane.b32.xlu0 %v482, 3
      %v528 = vpop.permute.xlu0 %527
      %529 = vrot.lane.b32.xlu0 %v486, 3
      %v530 = vpop.permute.xlu0 %529
      %531 = vrot.lane.b32.xlu0 %v485, 3
      %v532 = vpop.permute.xlu0 %531
      %533 = vrot.lane.b32.xlu0 %v489, 3
      %v534 = vpop.permute.xlu0 %533
      %535 = vrot.lane.b32.xlu0 %v488, 3
      %v536 = vpop.permute.xlu0 %535
      %537 = vrot.lane.b32.xlu0 %v492, 3
      %v538 = vpop.permute.xlu0 %537
      %539 = vrot.lane.b32.xlu0 %v491, 3
      %v540 = vpop.permute.xlu0 %539
      %541 = vrot.lane.b32.xlu0 %v495, 3
      %v542 = vpop.permute.xlu0 %541
      %543 = vrot.lane.b32.xlu0 %v494, 3
      %v544 = vpop.permute.xlu0 %543
      %545 = vrot.lane.b32.xlu0 %v498, 3
      %v546 = vpop.permute.xlu0 %545
      %547 = vrot.lane.b32.xlu0 %v497, 3
      %v548 = vpop.permute.xlu0 %547
      %549 = vrot.lane.b32.xlu0 %v501, 3
      %v550 = vpop.permute.xlu0 %549
      %551 = vrot.lane.b32.xlu0 %v500, 3
      %v552 = vpop.permute.xlu0 %551
      %553 = vrot.lane.b32.xlu0 %v504, 3
      %v554 = vpop.permute.xlu0 %553
      %555 = vrot.lane.b32.xlu0 %v503, 3
      %v556 = vpop.permute.xlu0 %555
      %557 = vrot.lane.b32.xlu0 %v507, 3
      %v558 = vpop.permute.xlu0 %557
      %559 = vrot.lane.b32.xlu0 %v506, 3
      %v560 = vpop.permute.xlu0 %559
      %561 = vrot.lane.b32.xlu0 %v510, 3
      %v562 = vpop.permute.xlu0 %561
      %563 = vrot.lane.b32.xlu0 %v509, 3
      %v564 = vpop.permute.xlu0 %563
      %565 = vrot.lane.b32.xlu0 %v513, 3
      %v566 = vpop.permute.xlu0 %565
      %567 = vrot.lane.b32.xlu0 %v512, 3
      %v568 = vpop.permute.xlu0 %567
      %569 = vrot.lane.b32.xlu0 %v516, 3
      %v570 = vpop.permute.xlu0 %569
      %571 = vrot.lane.b32.xlu0 %v515, 3
      %v572 = vpop.permute.xlu0 %571
      %vm601 = vcmask 1045504
      %v602 = vrot.slane %v414, 2
      %v603 = vrot.slane %v415, 2
      %v604 = vsel %vm601, %v602, %v603
      %v605 = vrot.slane %v416, 2
      %v606 = vrot.slane %v417, 2
      %v607 = vsel %vm601, %v605, %v606
      %v608 = vrot.slane %v418, 2
      %v609 = vrot.slane %v419, 2
      %v610 = vsel %vm601, %v608, %v609
      %v611 = vrot.slane %v420, 2
      %v612 = vrot.slane %v421, 2
      %v613 = vsel %vm601, %v611, %v612
      %v614 = vrot.slane %v422, 2
      %v615 = vrot.slane %v423, 2
      %v616 = vsel %vm601, %v614, %v615
      %v617 = vrot.slane %v424, 2
      %v618 = vrot.slane %v425, 2
      %v619 = vsel %vm601, %v617, %v618
      %v620 = vrot.slane %v426, 2
      %v621 = vrot.slane %v427, 2
      %v622 = vsel %vm601, %v620, %v621
      %v623 = vrot.slane %v428, 2
      %v624 = vrot.slane %v429, 2
      %v625 = vsel %vm601, %v623, %v624
      %v626 = vrot.slane %v430, 2
      %v627 = vrot.slane %v431, 2
      %v628 = vsel %vm601, %v626, %v627
      %v629 = vrot.slane %v432, 2
      %v630 = vrot.slane %v433, 2
      %v631 = vsel %vm601, %v629, %v630
      %v632 = vrot.slane %v434, 2
      %v633 = vrot.slane %v435, 2
      %v634 = vsel %vm601, %v632, %v633
      %v635 = vrot.slane %v436, 2
      %v636 = vrot.slane %v437, 2
      %v637 = vsel %vm601, %v635, %v636
      %v638 = vrot.slane %v438, 2
      %v639 = vrot.slane %v439, 2
      %v640 = vsel %vm601, %v638, %v639
      %v641 = vrot.slane %v440, 2
      %v642 = vrot.slane %v441, 2
      %v643 = vsel %vm601, %v641, %v642
      %644 = vrot.lane.b32.xlu0 %v604, 6
      %v645 = vpop.permute.xlu0 %644
      %646 = vrot.lane.b32.xlu0 %v603, 6
      %v647 = vpop.permute.xlu0 %646
      %648 = vrot.lane.b32.xlu0 %v607, 6
      %v649 = vpop.permute.xlu0 %648
      %650 = vrot.lane.b32.xlu0 %v606, 6
      %v651 = vpop.permute.xlu0 %650
      %652 = vrot.lane.b32.xlu0 %v610, 6
      %v653 = vpop.permute.xlu0 %652
      %654 = vrot.lane.b32.xlu0 %v609, 6
      %v655 = vpop.permute.xlu0 %654
      %656 = vrot.lane.b32.xlu0 %v613, 6
      %v657 = vpop.permute.xlu0 %656
      %658 = vrot.lane.b32.xlu0 %v612, 6
      %v659 = vpop.permute.xlu0 %658
      %660 = vrot.lane.b32.xlu0 %v616, 6
      %v661 = vpop.permute.xlu0 %660
      %662 = vrot.lane.b32.xlu0 %v615, 6
      %v663 = vpop.permute.xlu0 %662
      %664 = vrot.lane.b32.xlu0 %v619, 6
      %v665 = vpop.permute.xlu0 %664
      %666 = vrot.lane.b32.xlu0 %v618, 6
      %v667 = vpop.permute.xlu0 %666
      %668 = vrot.lane.b32.xlu0 %v622, 6
      %v669 = vpop.permute.xlu0 %668
      %670 = vrot.lane.b32.xlu0 %v621, 6
      %v671 = vpop.permute.xlu0 %670
      %672 = vrot.lane.b32.xlu0 %v625, 6
      %v673 = vpop.permute.xlu0 %672
      %674 = vrot.lane.b32.xlu0 %v624, 6
      %v675 = vpop.permute.xlu0 %674
      %676 = vrot.lane.b32.xlu0 %v628, 6
      %v677 = vpop.permute.xlu0 %676
      %678 = vrot.lane.b32.xlu0 %v627, 6
      %v679 = vpop.permute.xlu0 %678
      %680 = vrot.lane.b32.xlu0 %v631, 6
      %v681 = vpop.permute.xlu0 %680
      %682 = vrot.lane.b32.xlu0 %v630, 6
      %v683 = vpop.permute.xlu0 %682
      %684 = vrot.lane.b32.xlu0 %v634, 6
      %v685 = vpop.permute.xlu0 %684
      %686 = vrot.lane.b32.xlu0 %v633, 6
      %v687 = vpop.permute.xlu0 %686
      %688 = vrot.lane.b32.xlu0 %v637, 6
      %v689 = vpop.permute.xlu0 %688
      %690 = vrot.lane.b32.xlu0 %v636, 6
      %v691 = vpop.permute.xlu0 %690
      %692 = vrot.lane.b32.xlu0 %v640, 6
      %v693 = vpop.permute.xlu0 %692
      %694 = vrot.lane.b32.xlu0 %v639, 6
      %v695 = vpop.permute.xlu0 %694
      %696 = vrot.lane.b32.xlu0 %v643, 6
      %v697 = vpop.permute.xlu0 %696
      %698 = vrot.lane.b32.xlu0 %v642, 6
      %v699 = vpop.permute.xlu0 %698
      %730 = vrot.lane.b32.xlu0 %v416, 9
      %v731 = vpop.permute.xlu0 %730
      %732 = vrot.lane.b32.xlu0 %v417, 9
      %v733 = vpop.permute.xlu0 %732
      %734 = vrot.lane.b32.xlu0 %v418, 9
      %v735 = vpop.permute.xlu0 %734
      %736 = vrot.lane.b32.xlu0 %v419, 9
      %v737 = vpop.permute.xlu0 %736
      %738 = vrot.lane.b32.xlu0 %v420, 9
      %v739 = vpop.permute.xlu0 %738
      %740 = vrot.lane.b32.xlu0 %v421, 9
      %v741 = vpop.permute.xlu0 %740
      %742 = vrot.lane.b32.xlu0 %v422, 9
      %v743 = vpop.permute.xlu0 %742
      %744 = vrot.lane.b32.xlu0 %v423, 9
      %v745 = vpop.permute.xlu0 %744
      %746 = vrot.lane.b32.xlu0 %v424, 9
      %v747 = vpop.permute.xlu0 %746
      %748 = vrot.lane.b32.xlu0 %v425, 9
      %v749 = vpop.permute.xlu0 %748
      %750 = vrot.lane.b32.xlu0 %v426, 9
      %v751 = vpop.permute.xlu0 %750
      %752 = vrot.lane.b32.xlu0 %v427, 9
      %v753 = vpop.permute.xlu0 %752
      %754 = vrot.lane.b32.xlu0 %v428, 9
      %v755 = vpop.permute.xlu0 %754
      %756 = vrot.lane.b32.xlu0 %v429, 9
      %v757 = vpop.permute.xlu0 %756
      %758 = vrot.lane.b32.xlu0 %v430, 9
      %v759 = vpop.permute.xlu0 %758
      %760 = vrot.lane.b32.xlu0 %v431, 9
      %v761 = vpop.permute.xlu0 %760
      %762 = vrot.lane.b32.xlu0 %v432, 9
      %v763 = vpop.permute.xlu0 %762
      %764 = vrot.lane.b32.xlu0 %v433, 9
      %v765 = vpop.permute.xlu0 %764
      %766 = vrot.lane.b32.xlu0 %v434, 9
      %v767 = vpop.permute.xlu0 %766
      %768 = vrot.lane.b32.xlu0 %v435, 9
      %v769 = vpop.permute.xlu0 %768
      %770 = vrot.lane.b32.xlu0 %v436, 9
      %v771 = vpop.permute.xlu0 %770
      %772 = vrot.lane.b32.xlu0 %v437, 9
      %v773 = vpop.permute.xlu0 %772
      %774 = vrot.lane.b32.xlu0 %v438, 9
      %v775 = vpop.permute.xlu0 %774
      %776 = vrot.lane.b32.xlu0 %v439, 9
      %v777 = vpop.permute.xlu0 %776
      %778 = vrot.lane.b32.xlu0 %v440, 9
      %v779 = vpop.permute.xlu0 %778
      %780 = vrot.lane.b32.xlu0 %v441, 9
      %v781 = vpop.permute.xlu0 %780
      %782 = vrot.lane.b32.xlu0 %v442, 9
      %v783 = vpop.permute.xlu0 %782
      %784 = vrot.lane.b32.xlu0 %v443, 9
      %v785 = vpop.permute.xlu0 %784
      %v814 = vrot.slane %v442, 1
      %v815 = vrot.slane %v443, 1
      %v816 = vsel %vm474, %v814, %v815
      %817 = vrot.lane.b32.xlu0 %v480, 12
      %v818 = vpop.permute.xlu0 %817
      %819 = vrot.lane.b32.xlu0 %v479, 12
      %v820 = vpop.permute.xlu0 %819
      %821 = vrot.lane.b32.xlu0 %v483, 12
      %v822 = vpop.permute.xlu0 %821
      %823 = vrot.lane.b32.xlu0 %v482, 12
      %v824 = vpop.permute.xlu0 %823
      %825 = vrot.lane.b32.xlu0 %v486, 12
      %v826 = vpop.permute.xlu0 %825
      %827 = vrot.lane.b32.xlu0 %v485, 12
      %v828 = vpop.permute.xlu0 %827
      %829 = vrot.lane.b32.xlu0 %v489, 12
      %v830 = vpop.permute.xlu0 %829
      %831 = vrot.lane.b32.xlu0 %v488, 12
      %v832 = vpop.permute.xlu0 %831
      %833 = vrot.lane.b32.xlu0 %v492, 12
      %v834 = vpop.permute.xlu0 %833
      %835 = vrot.lane.b32.xlu0 %v491, 12
      %v836 = vpop.permute.xlu0 %835
      %837 = vrot.lane.b32.xlu0 %v495, 12
      %v838 = vpop.permute.xlu0 %837
      %839 = vrot.lane.b32.xlu0 %v494, 12
      %v840 = vpop.permute.xlu0 %839
      %841 = vrot.lane.b32.xlu0 %v498, 12
      %v842 = vpop.permute.xlu0 %841
      %843 = vrot.lane.b32.xlu0 %v497, 12
      %v844 = vpop.permute.xlu0 %843
      %845 = vrot.lane.b32.xlu0 %v501, 12
      %v846 = vpop.permute.xlu0 %845
      %847 = vrot.lane.b32.xlu0 %v500, 12
      %v848 = vpop.permute.xlu0 %847
      %849 = vrot.lane.b32.xlu0 %v504, 12
      %v850 = vpop.permute.xlu0 %849
      %851 = vrot.lane.b32.xlu0 %v503, 12
      %v852 = vpop.permute.xlu0 %851
      %853 = vrot.lane.b32.xlu0 %v507, 12
      %v854 = vpop.permute.xlu0 %853
      %855 = vrot.lane.b32.xlu0 %v506, 12
      %v856 = vpop.permute.xlu0 %855
      %857 = vrot.lane.b32.xlu0 %v510, 12
      %v858 = vpop.permute.xlu0 %857
      %859 = vrot.lane.b32.xlu0 %v509, 12
      %v860 = vpop.permute.xlu0 %859
      %861 = vrot.lane.b32.xlu0 %v513, 12
      %v862 = vpop.permute.xlu0 %861
      %863 = vrot.lane.b32.xlu0 %v512, 12
      %v864 = vpop.permute.xlu0 %863
      %865 = vrot.lane.b32.xlu0 %v516, 12
      %v866 = vpop.permute.xlu0 %865
      %867 = vrot.lane.b32.xlu0 %v515, 12
      %v868 = vpop.permute.xlu0 %867
      %869 = vrot.lane.b32.xlu0 %v816, 12
      %v870 = vpop.permute.xlu0 %869
      %871 = vrot.lane.b32.xlu0 %v815, 12
      %v872 = vpop.permute.xlu0 %871
      %v901 = vrot.slane %v442, 2
      %v902 = vrot.slane %v443, 2
      %v903 = vsel %vm601, %v901, %v902
      %904 = vrot.lane.b32.xlu0 %v607, 15
      %v905 = vpop.permute.xlu0 %904
      %906 = vrot.lane.b32.xlu0 %v606, 15
      %v907 = vpop.permute.xlu0 %906
      %908 = vrot.lane.b32.xlu0 %v610, 15
      %v909 = vpop.permute.xlu0 %908
      %910 = vrot.lane.b32.xlu0 %v609, 15
      %v911 = vpop.permute.xlu0 %910
      %912 = vrot.lane.b32.xlu0 %v613, 15
      %v913 = vpop.permute.xlu0 %912
      %914 = vrot.lane.b32.xlu0 %v612, 15
      %v915 = vpop.permute.xlu0 %914
      %916 = vrot.lane.b32.xlu0 %v616, 15
      %v917 = vpop.permute.xlu0 %916
      %918 = vrot.lane.b32.xlu0 %v615, 15
      %v919 = vpop.permute.xlu0 %918
      %920 = vrot.lane.b32.xlu0 %v619, 15
      %v921 = vpop.permute.xlu0 %920
      %922 = vrot.lane.b32.xlu0 %v618, 15
      %v923 = vpop.permute.xlu0 %922
      %924 = vrot.lane.b32.xlu0 %v622, 15
      %v925 = vpop.permute.xlu0 %924
      %926 = vrot.lane.b32.xlu0 %v621, 15
      %v927 = vpop.permute.xlu0 %926
      %928 = vrot.lane.b32.xlu0 %v625, 15
      %v929 = vpop.permute.xlu0 %928
      %930 = vrot.lane.b32.xlu0 %v624, 15
      %v931 = vpop.permute.xlu0 %930
      %932 = vrot.lane.b32.xlu0 %v628, 15
      %v933 = vpop.permute.xlu0 %932
      %934 = vrot.lane.b32.xlu0 %v627, 15
      %v935 = vpop.permute.xlu0 %934
      %936 = vrot.lane.b32.xlu0 %v631, 15
      %v937 = vpop.permute.xlu0 %936
      %938 = vrot.lane.b32.xlu0 %v630, 15
      %v939 = vpop.permute.xlu0 %938
      %940 = vrot.lane.b32.xlu0 %v634, 15
      %v941 = vpop.permute.xlu0 %940
      %942 = vrot.lane.b32.xlu0 %v633, 15
      %v943 = vpop.permute.xlu0 %942
      %944 = vrot.lane.b32.xlu0 %v637, 15
      %v945 = vpop.permute.xlu0 %944
      %946 = vrot.lane.b32.xlu0 %v636, 15
      %v947 = vpop.permute.xlu0 %946
      %948 = vrot.lane.b32.xlu0 %v640, 15
      %v949 = vpop.permute.xlu0 %948
      %950 = vrot.lane.b32.xlu0 %v639, 15
      %v951 = vpop.permute.xlu0 %950
      %952 = vrot.lane.b32.xlu0 %v643, 15
      %v953 = vpop.permute.xlu0 %952
      %954 = vrot.lane.b32.xlu0 %v642, 15
      %v955 = vpop.permute.xlu0 %954
      %956 = vrot.lane.b32.xlu0 %v903, 15
      %v957 = vpop.permute.xlu0 %956
      %958 = vrot.lane.b32.xlu0 %v902, 15
      %v959 = vpop.permute.xlu0 %958
      %990 = vrot.lane.b32.xlu0 %v418, 18
      %v991 = vpop.permute.xlu0 %990
      %992 = vrot.lane.b32.xlu0 %v419, 18
      %v993 = vpop.permute.xlu0 %992
      %994 = vrot.lane.b32.xlu0 %v420, 18
      %v995 = vpop.permute.xlu0 %994
      %996 = vrot.lane.b32.xlu0 %v421, 18
      %v997 = vpop.permute.xlu0 %996
      %998 = vrot.lane.b32.xlu0 %v422, 18
      %v999 = vpop.permute.xlu0 %998
      %1000 = vrot.lane.b32.xlu0 %v423, 18
      %v1001 = vpop.permute.xlu0 %1000
      %1002 = vrot.lane.b32.xlu0 %v424, 18
      %v1003 = vpop.permute.xlu0 %1002
      %1004 = vrot.lane.b32.xlu0 %v425, 18
      %v1005 = vpop.permute.xlu0 %1004
      %1006 = vrot.lane.b32.xlu0 %v426, 18
      %v1007 = vpop.permute.xlu0 %1006
      %1008 = vrot.lane.b32.xlu0 %v427, 18
      %v1009 = vpop.permute.xlu0 %1008
      %1010 = vrot.lane.b32.xlu0 %v428, 18
      %v1011 = vpop.permute.xlu0 %1010
      %1012 = vrot.lane.b32.xlu0 %v429, 18
      %v1013 = vpop.permute.xlu0 %1012
      %1014 = vrot.lane.b32.xlu0 %v430, 18
      %v1015 = vpop.permute.xlu0 %1014
      %1016 = vrot.lane.b32.xlu0 %v431, 18
      %v1017 = vpop.permute.xlu0 %1016
      %1018 = vrot.lane.b32.xlu0 %v432, 18
      %v1019 = vpop.permute.xlu0 %1018
      %1020 = vrot.lane.b32.xlu0 %v433, 18
      %v1021 = vpop.permute.xlu0 %1020
      %1022 = vrot.lane.b32.xlu0 %v434, 18
      %v1023 = vpop.permute.xlu0 %1022
      %1024 = vrot.lane.b32.xlu0 %v435, 18
      %v1025 = vpop.permute.xlu0 %1024
      %1026 = vrot.lane.b32.xlu0 %v436, 18
      %v1027 = vpop.permute.xlu0 %1026
      %1028 = vrot.lane.b32.xlu0 %v437, 18
      %v1029 = vpop.permute.xlu0 %1028
      %1030 = vrot.lane.b32.xlu0 %v438, 18
      %v1031 = vpop.permute.xlu0 %1030
      %1032 = vrot.lane.b32.xlu0 %v439, 18
      %v1033 = vpop.permute.xlu0 %1032
      %1034 = vrot.lane.b32.xlu0 %v440, 18
      %v1035 = vpop.permute.xlu0 %1034
      %1036 = vrot.lane.b32.xlu0 %v441, 18
      %v1037 = vpop.permute.xlu0 %1036
      %1038 = vrot.lane.b32.xlu0 %v442, 18
      %v1039 = vpop.permute.xlu0 %1038
      %1040 = vrot.lane.b32.xlu0 %v443, 18
      %v1041 = vpop.permute.xlu0 %1040
      %1042 = vrot.lane.b32.xlu0 %v444, 18
      %v1043 = vpop.permute.xlu0 %1042
      %1044 = vrot.lane.b32.xlu0 %v445, 18
      %v1045 = vpop.permute.xlu0 %1044
      %v1074 = vrot.slane %v444, 1
      %v1075 = vrot.slane %v445, 1
      %v1076 = vsel %vm474, %v1074, %v1075
      %1077 = vrot.lane.b32.xlu0 %v483, 21
      %v1078 = vpop.permute.xlu0 %1077
      %1079 = vrot.lane.b32.xlu0 %v482, 21
      %v1080 = vpop.permute.xlu0 %1079
      %1081 = vrot.lane.b32.xlu0 %v486, 21
      %v1082 = vpop.permute.xlu0 %1081
      %1083 = vrot.lane.b32.xlu0 %v485, 21
      %v1084 = vpop.permute.xlu0 %1083
      %1085 = vrot.lane.b32.xlu0 %v489, 21
      %v1086 = vpop.permute.xlu0 %1085
      %1087 = vrot.lane.b32.xlu0 %v488, 21
      %v1088 = vpop.permute.xlu0 %1087
      %1089 = vrot.lane.b32.xlu0 %v492, 21
      %v1090 = vpop.permute.xlu0 %1089
      %1091 = vrot.lane.b32.xlu0 %v491, 21
      %v1092 = vpop.permute.xlu0 %1091
      %1093 = vrot.lane.b32.xlu0 %v495, 21
      %v1094 = vpop.permute.xlu0 %1093
      %1095 = vrot.lane.b32.xlu0 %v494, 21
      %v1096 = vpop.permute.xlu0 %1095
      %1097 = vrot.lane.b32.xlu0 %v498, 21
      %v1098 = vpop.permute.xlu0 %1097
      %1099 = vrot.lane.b32.xlu0 %v497, 21
      %v1100 = vpop.permute.xlu0 %1099
      %1101 = vrot.lane.b32.xlu0 %v501, 21
      %v1102 = vpop.permute.xlu0 %1101
      %1103 = vrot.lane.b32.xlu0 %v500, 21
      %v1104 = vpop.permute.xlu0 %1103
      %1105 = vrot.lane.b32.xlu0 %v504, 21
      %v1106 = vpop.permute.xlu0 %1105
      %1107 = vrot.lane.b32.xlu0 %v503, 21
      %v1108 = vpop.permute.xlu0 %1107
      %1109 = vrot.lane.b32.xlu0 %v507, 21
      %v1110 = vpop.permute.xlu0 %1109
      %1111 = vrot.lane.b32.xlu0 %v506, 21
      %v1112 = vpop.permute.xlu0 %1111
      %1113 = vrot.lane.b32.xlu0 %v510, 21
      %v1114 = vpop.permute.xlu0 %1113
      %1115 = vrot.lane.b32.xlu0 %v509, 21
      %v1116 = vpop.permute.xlu0 %1115
      %1117 = vrot.lane.b32.xlu0 %v513, 21
      %v1118 = vpop.permute.xlu0 %1117
      %1119 = vrot.lane.b32.xlu0 %v512, 21
      %v1120 = vpop.permute.xlu0 %1119
      %1121 = vrot.lane.b32.xlu0 %v516, 21
      %v1122 = vpop.permute.xlu0 %1121
      %1123 = vrot.lane.b32.xlu0 %v515, 21
      %v1124 = vpop.permute.xlu0 %1123
      %1125 = vrot.lane.b32.xlu0 %v816, 21
      %v1126 = vpop.permute.xlu0 %1125
      %1127 = vrot.lane.b32.xlu0 %v815, 21
      %v1128 = vpop.permute.xlu0 %1127
      %1129 = vrot.lane.b32.xlu0 %v1076, 21
      %v1130 = vpop.permute.xlu0 %1129
      %1131 = vrot.lane.b32.xlu0 %v1075, 21
      %v1132 = vpop.permute.xlu0 %1131
      %v1161 = vrot.slane %v444, 2
      %v1162 = vrot.slane %v445, 2
      %v1163 = vsel %vm601, %v1161, %v1162
      %1164 = vrot.lane.b32.xlu0 %v610, 24
      %v1165 = vpop.permute.xlu0 %1164
      %1166 = vrot.lane.b32.xlu0 %v609, 24
      %v1167 = vpop.permute.xlu0 %1166
      %1168 = vrot.lane.b32.xlu0 %v613, 24
      %v1169 = vpop.permute.xlu0 %1168
      %1170 = vrot.lane.b32.xlu0 %v612, 24
      %v1171 = vpop.permute.xlu0 %1170
      %1172 = vrot.lane.b32.xlu0 %v616, 24
      %v1173 = vpop.permute.xlu0 %1172
      %1174 = vrot.lane.b32.xlu0 %v615, 24
      %v1175 = vpop.permute.xlu0 %1174
      %1176 = vrot.lane.b32.xlu0 %v619, 24
      %v1177 = vpop.permute.xlu0 %1176
      %1178 = vrot.lane.b32.xlu0 %v618, 24
      %v1179 = vpop.permute.xlu0 %1178
      %1180 = vrot.lane.b32.xlu0 %v622, 24
      %v1181 = vpop.permute.xlu0 %1180
      %1182 = vrot.lane.b32.xlu0 %v621, 24
      %v1183 = vpop.permute.xlu0 %1182
      %1184 = vrot.lane.b32.xlu0 %v625, 24
      %v1185 = vpop.permute.xlu0 %1184
      %1186 = vrot.lane.b32.xlu0 %v624, 24
      %v1187 = vpop.permute.xlu0 %1186
      %1188 = vrot.lane.b32.xlu0 %v628, 24
      %v1189 = vpop.permute.xlu0 %1188
      %1190 = vrot.lane.b32.xlu0 %v627, 24
      %v1191 = vpop.permute.xlu0 %1190
      %1192 = vrot.lane.b32.xlu0 %v631, 24
      %v1193 = vpop.permute.xlu0 %1192
      %1194 = vrot.lane.b32.xlu0 %v630, 24
      %v1195 = vpop.permute.xlu0 %1194
      %1196 = vrot.lane.b32.xlu0 %v634, 24
      %v1197 = vpop.permute.xlu0 %1196
      %1198 = vrot.lane.b32.xlu0 %v633, 24
      %v1199 = vpop.permute.xlu0 %1198
      %1200 = vrot.lane.b32.xlu0 %v637, 24
      %v1201 = vpop.permute.xlu0 %1200
      %1202 = vrot.lane.b32.xlu0 %v636, 24
      %v1203 = vpop.permute.xlu0 %1202
      %1204 = vrot.lane.b32.xlu0 %v640, 24
      %v1205 = vpop.permute.xlu0 %1204
      %1206 = vrot.lane.b32.xlu0 %v639, 24
      %v1207 = vpop.permute.xlu0 %1206
      %1208 = vrot.lane.b32.xlu0 %v643, 24
      %v1209 = vpop.permute.xlu0 %1208
      %1210 = vrot.lane.b32.xlu0 %v642, 24
      %v1211 = vpop.permute.xlu0 %1210
      %1212 = vrot.lane.b32.xlu0 %v903, 24
      %v1213 = vpop.permute.xlu0 %1212
      %1214 = vrot.lane.b32.xlu0 %v902, 24
      %v1215 = vpop.permute.xlu0 %1214
      %1216 = vrot.lane.b32.xlu0 %v1163, 24
      %v1217 = vpop.permute.xlu0 %1216
      %1218 = vrot.lane.b32.xlu0 %v1162, 24
      %v1219 = vpop.permute.xlu0 %1218
      %vm1248 = vcmask 23552
      %v1249 = vsel %vm1248, %v414, %v518
      %v1250 = vsel %vm1248, %v415, %v520
      %v1251 = vsel %vm1248, %v416, %v522
      %v1252 = vsel %vm1248, %v417, %v524
      %v1253 = vsel %vm1248, %v418, %v526
      %v1254 = vsel %vm1248, %v419, %v528
      %v1255 = vsel %vm1248, %v420, %v530
      %v1256 = vsel %vm1248, %v421, %v532
      %v1257 = vsel %vm1248, %v422, %v534
      %v1258 = vsel %vm1248, %v423, %v536
      %v1259 = vsel %vm1248, %v424, %v538
      %v1260 = vsel %vm1248, %v425, %v540
      %v1261 = vsel %vm1248, %v426, %v542
      %v1262 = vsel %vm1248, %v427, %v544
      %v1263 = vsel %vm1248, %v428, %v546
      %v1264 = vsel %vm1248, %v429, %v548
      %v1265 = vsel %vm1248, %v430, %v550
      %v1266 = vsel %vm1248, %v431, %v552
      %v1267 = vsel %vm1248, %v432, %v554
      %v1268 = vsel %vm1248, %v433, %v556
      %v1269 = vsel %vm1248, %v434, %v558
      %v1270 = vsel %vm1248, %v435, %v560
      %v1271 = vsel %vm1248, %v436, %v562
      %v1272 = vsel %vm1248, %v437, %v564
      %v1273 = vsel %vm1248, %v438, %v566
      %v1274 = vsel %vm1248, %v439, %v568
      %v1275 = vsel %vm1248, %v440, %v570
      %v1276 = vsel %vm1248, %v441, %v572
      %vm1277 = vcmask 48128
      %v1278 = vsel %vm1277, %v1249, %v645
      %v1279 = vsel %vm1277, %v1250, %v647
      %v1280 = vsel %vm1277, %v1251, %v649
      %v1281 = vsel %vm1277, %v1252, %v651
      %v1282 = vsel %vm1277, %v1253, %v653
      %v1283 = vsel %vm1277, %v1254, %v655
      %v1284 = vsel %vm1277, %v1255, %v657
      %v1285 = vsel %vm1277, %v1256, %v659
      %v1286 = vsel %vm1277, %v1257, %v661
      %v1287 = vsel %vm1277, %v1258, %v663
      %v1288 = vsel %vm1277, %v1259, %v665
      %v1289 = vsel %vm1277, %v1260, %v667
      %v1290 = vsel %vm1277, %v1261, %v669
      %v1291 = vsel %vm1277, %v1262, %v671
      %v1292 = vsel %vm1277, %v1263, %v673
      %v1293 = vsel %vm1277, %v1264, %v675
      %v1294 = vsel %vm1277, %v1265, %v677
      %v1295 = vsel %vm1277, %v1266, %v679
      %v1296 = vsel %vm1277, %v1267, %v681
      %v1297 = vsel %vm1277, %v1268, %v683
      %v1298 = vsel %vm1277, %v1269, %v685
      %v1299 = vsel %vm1277, %v1270, %v687
      %v1300 = vsel %vm1277, %v1271, %v689
      %v1301 = vsel %vm1277, %v1272, %v691
      %v1302 = vsel %vm1277, %v1273, %v693
      %v1303 = vsel %vm1277, %v1274, %v695
      %v1304 = vsel %vm1277, %v1275, %v697
      %v1305 = vsel %vm1277, %v1276, %v699
      %vm1306 = vcmask 72704
      %v1307 = vsel %vm1306, %v1278, %v731
      %v1308 = vsel %vm1306, %v1279, %v733
      %v1309 = vsel %vm1306, %v1280, %v735
      %v1310 = vsel %vm1306, %v1281, %v737
      %v1311 = vsel %vm1306, %v1282, %v739
      %v1312 = vsel %vm1306, %v1283, %v741
      %v1313 = vsel %vm1306, %v1284, %v743
      %v1314 = vsel %vm1306, %v1285, %v745
      %v1315 = vsel %vm1306, %v1286, %v747
      %v1316 = vsel %vm1306, %v1287, %v749
      %v1317 = vsel %vm1306, %v1288, %v751
      %v1318 = vsel %vm1306, %v1289, %v753
      %v1319 = vsel %vm1306, %v1290, %v755
      %v1320 = vsel %vm1306, %v1291, %v757
      %v1321 = vsel %vm1306, %v1292, %v759
      %v1322 = vsel %vm1306, %v1293, %v761
      %v1323 = vsel %vm1306, %v1294, %v763
      %v1324 = vsel %vm1306, %v1295, %v765
      %v1325 = vsel %vm1306, %v1296, %v767
      %v1326 = vsel %vm1306, %v1297, %v769
      %v1327 = vsel %vm1306, %v1298, %v771
      %v1328 = vsel %vm1306, %v1299, %v773
      %v1329 = vsel %vm1306, %v1300, %v775
      %v1330 = vsel %vm1306, %v1301, %v777
      %v1331 = vsel %vm1306, %v1302, %v779
      %v1332 = vsel %vm1306, %v1303, %v781
      %v1333 = vsel %vm1306, %v1304, %v783
      %v1334 = vsel %vm1306, %v1305, %v785
      %vm1335 = vcmask 97280
      %v1336 = vsel %vm1335, %v1307, %v818
      %v1337 = vsel %vm1335, %v1308, %v820
      %v1338 = vsel %vm1335, %v1309, %v822
      %v1339 = vsel %vm1335, %v1310, %v824
      %v1340 = vsel %vm1335, %v1311, %v826
      %v1341 = vsel %vm1335, %v1312, %v828
      %v1342 = vsel %vm1335, %v1313, %v830
      %v1343 = vsel %vm1335, %v1314, %v832
      %v1344 = vsel %vm1335, %v1315, %v834
      %v1345 = vsel %vm1335, %v1316, %v836
      %v1346 = vsel %vm1335, %v1317, %v838
      %v1347 = vsel %vm1335, %v1318, %v840
      %v1348 = vsel %vm1335, %v1319, %v842
      %v1349 = vsel %vm1335, %v1320, %v844
      %v1350 = vsel %vm1335, %v1321, %v846
      %v1351 = vsel %vm1335, %v1322, %v848
      %v1352 = vsel %vm1335, %v1323, %v850
      %v1353 = vsel %vm1335, %v1324, %v852
      %v1354 = vsel %vm1335, %v1325, %v854
      %v1355 = vsel %vm1335, %v1326, %v856
      %v1356 = vsel %vm1335, %v1327, %v858
      %v1357 = vsel %vm1335, %v1328, %v860
      %v1358 = vsel %vm1335, %v1329, %v862
      %v1359 = vsel %vm1335, %v1330, %v864
      %v1360 = vsel %vm1335, %v1331, %v866
      %v1361 = vsel %vm1335, %v1332, %v868
      %v1362 = vsel %vm1335, %v1333, %v870
      %v1363 = vsel %vm1335, %v1334, %v872
      %vm1364 = vcmask 121856
      %v1365 = vsel %vm1364, %v1336, %v905
      %v1366 = vsel %vm1364, %v1337, %v907
      %v1367 = vsel %vm1364, %v1338, %v909
      %v1368 = vsel %vm1364, %v1339, %v911
      %v1369 = vsel %vm1364, %v1340, %v913
      %v1370 = vsel %vm1364, %v1341, %v915
      %v1371 = vsel %vm1364, %v1342, %v917
      %v1372 = vsel %vm1364, %v1343, %v919
      %v1373 = vsel %vm1364, %v1344, %v921
      %v1374 = vsel %vm1364, %v1345, %v923
      %v1375 = vsel %vm1364, %v1346, %v925
      %v1376 = vsel %vm1364, %v1347, %v927
      %v1377 = vsel %vm1364, %v1348, %v929
      %v1378 = vsel %vm1364, %v1349, %v931
      %v1379 = vsel %vm1364, %v1350, %v933
      %v1380 = vsel %vm1364, %v1351, %v935
      %v1381 = vsel %vm1364, %v1352, %v937
      %v1382 = vsel %vm1364, %v1353, %v939
      %v1383 = vsel %vm1364, %v1354, %v941
      %v1384 = vsel %vm1364, %v1355, %v943
      %v1385 = vsel %vm1364, %v1356, %v945
      %v1386 = vsel %vm1364, %v1357, %v947
      %v1387 = vsel %vm1364, %v1358, %v949
      %v1388 = vsel %vm1364, %v1359, %v951
      %v1389 = vsel %vm1364, %v1360, %v953
      %v1390 = vsel %vm1364, %v1361, %v955
      %v1391 = vsel %vm1364, %v1362, %v957
      %v1392 = vsel %vm1364, %v1363, %v959
      %vm1393 = vcmask 146432
      %v1394 = vsel %vm1393, %v1365, %v991
      %v1395 = vsel %vm1393, %v1366, %v993
      %v1396 = vsel %vm1393, %v1367, %v995
      %v1397 = vsel %vm1393, %v1368, %v997
      %v1398 = vsel %vm1393, %v1369, %v999
      %v1399 = vsel %vm1393, %v1370, %v1001
      %v1400 = vsel %vm1393, %v1371, %v1003
      %v1401 = vsel %vm1393, %v1372, %v1005
      %v1402 = vsel %vm1393, %v1373, %v1007
      %v1403 = vsel %vm1393, %v1374, %v1009
      %v1404 = vsel %vm1393, %v1375, %v1011
      %v1405 = vsel %vm1393, %v1376, %v1013
      %v1406 = vsel %vm1393, %v1377, %v1015
      %v1407 = vsel %vm1393, %v1378, %v1017
      %v1408 = vsel %vm1393, %v1379, %v1019
      %v1409 = vsel %vm1393, %v1380, %v1021
      %v1410 = vsel %vm1393, %v1381, %v1023
      %v1411 = vsel %vm1393, %v1382, %v1025
      %v1412 = vsel %vm1393, %v1383, %v1027
      %v1413 = vsel %vm1393, %v1384, %v1029
      %v1414 = vsel %vm1393, %v1385, %v1031
      %v1415 = vsel %vm1393, %v1386, %v1033
      %v1416 = vsel %vm1393, %v1387, %v1035
      %v1417 = vsel %vm1393, %v1388, %v1037
      %v1418 = vsel %vm1393, %v1389, %v1039
      %v1419 = vsel %vm1393, %v1390, %v1041
      %v1420 = vsel %vm1393, %v1391, %v1043
      %v1421 = vsel %vm1393, %v1392, %v1045
      %vm1422 = vcmask 171008
      %v1423 = vsel %vm1422, %v1394, %v1078
      %v1424 = vsel %vm1422, %v1395, %v1080
      %v1425 = vsel %vm1422, %v1396, %v1082
      %v1426 = vsel %vm1422, %v1397, %v1084
      %v1427 = vsel %vm1422, %v1398, %v1086
      %v1428 = vsel %vm1422, %v1399, %v1088
      %v1429 = vsel %vm1422, %v1400, %v1090
      %v1430 = vsel %vm1422, %v1401, %v1092
      %v1431 = vsel %vm1422, %v1402, %v1094
      %v1432 = vsel %vm1422, %v1403, %v1096
      %v1433 = vsel %vm1422, %v1404, %v1098
      %v1434 = vsel %vm1422, %v1405, %v1100
      %v1435 = vsel %vm1422, %v1406, %v1102
      %v1436 = vsel %vm1422, %v1407, %v1104
      %v1437 = vsel %vm1422, %v1408, %v1106
      %v1438 = vsel %vm1422, %v1409, %v1108
      %v1439 = vsel %vm1422, %v1410, %v1110
      %v1440 = vsel %vm1422, %v1411, %v1112
      %v1441 = vsel %vm1422, %v1412, %v1114
      %v1442 = vsel %vm1422, %v1413, %v1116
      %v1443 = vsel %vm1422, %v1414, %v1118
      %v1444 = vsel %vm1422, %v1415, %v1120
      %v1445 = vsel %vm1422, %v1416, %v1122
      %v1446 = vsel %vm1422, %v1417, %v1124
      %v1447 = vsel %vm1422, %v1418, %v1126
      %v1448 = vsel %vm1422, %v1419, %v1128
      %v1449 = vsel %vm1422, %v1420, %v1130
      %v1450 = vsel %vm1422, %v1421, %v1132
      %vm1451 = vcmask 195584
      %v1452 = vsel %vm1451, %v1423, %v1165
      %v1453 = vsel %vm1451, %v1424, %v1167
      %v1454 = vsel %vm1451, %v1425, %v1169
      %v1455 = vsel %vm1451, %v1426, %v1171
      %v1456 = vsel %vm1451, %v1427, %v1173
      %v1457 = vsel %vm1451, %v1428, %v1175
      %v1458 = vsel %vm1451, %v1429, %v1177
      %v1459 = vsel %vm1451, %v1430, %v1179
      %v1460 = vsel %vm1451, %v1431, %v1181
      %v1461 = vsel %vm1451, %v1432, %v1183
      %v1462 = vsel %vm1451, %v1433, %v1185
      %v1463 = vsel %vm1451, %v1434, %v1187
      %v1464 = vsel %vm1451, %v1435, %v1189
      %v1465 = vsel %vm1451, %v1436, %v1191
      %v1466 = vsel %vm1451, %v1437, %v1193
      %v1467 = vsel %vm1451, %v1438, %v1195
      %v1468 = vsel %vm1451, %v1439, %v1197
      %v1469 = vsel %vm1451, %v1440, %v1199
      %v1470 = vsel %vm1451, %v1441, %v1201
      %v1471 = vsel %vm1451, %v1442, %v1203
      %v1472 = vsel %vm1451, %v1443, %v1205
      %v1473 = vsel %vm1451, %v1444, %v1207
      %v1474 = vsel %vm1451, %v1445, %v1209
      %v1475 = vsel %vm1451, %v1446, %v1211
      %v1476 = vsel %vm1451, %v1447, %v1213
      %v1477 = vsel %vm1451, %v1448, %v1215
      %v1478 = vsel %vm1451, %v1449, %v1217
      %v1479 = vsel %vm1451, %v1450, %v1219
      %v1508 = vcombine.high %v1452, %v1452
      %v1510 = vunpack.c.l.s4 1983009808
      %v1511 = vunpack.c.0.s8 %v1510
      %v1512 = vlaneseq
      %v1513 = vshrl.u32 %v1512, 7
      %v1514 = vsub.s32 %v1511, %v1513
      %v1515 = vrot.slane %v1452, %v1514
      %v1517 = vunpack.c.l.s4 1983009808
      %v1518 = vunpack.c.0.s8 %v1517
      %v1519 = vlaneseq
      %v1520 = vshrl.u32 %v1519, 7
      %v1521 = vsub.s32 %v1518, %v1520
      %v1522 = vrot.slane %v1508, %v1521
      %v1523 = vcombine.high %v1515, %v1515
      %v1524 = vcombine.high %v1522, %v1522
      %v1525 = vcombine.high %v1453, %v1453
      %v1527 = vunpack.c.l.s4 1983009808
      %v1528 = vunpack.c.0.s8 %v1527
      %v1529 = vlaneseq
      %v1530 = vshrl.u32 %v1529, 7
      %v1531 = vsub.s32 %v1528, %v1530
      %v1532 = vrot.slane %v1453, %v1531
      %v1534 = vunpack.c.l.s4 1983009808
      %v1535 = vunpack.c.0.s8 %v1534
      %v1536 = vlaneseq
      %v1537 = vshrl.u32 %v1536, 7
      %v1538 = vsub.s32 %v1535, %v1537
      %v1539 = vrot.slane %v1525, %v1538
      %v1540 = vcombine.high %v1532, %v1532
      %v1541 = vcombine.high %v1454, %v1454
      %v1543 = vunpack.c.l.s4 1983009808
      %v1544 = vunpack.c.0.s8 %v1543
      %v1545 = vlaneseq
      %v1546 = vshrl.u32 %v1545, 7
      %v1547 = vsub.s32 %v1544, %v1546
      %v1548 = vrot.slane %v1454, %v1547
      %v1550 = vunpack.c.l.s4 1983009808
      %v1551 = vunpack.c.0.s8 %v1550
      %v1552 = vlaneseq
      %v1553 = vshrl.u32 %v1552, 7
      %v1554 = vsub.s32 %v1551, %v1553
      %v1555 = vrot.slane %v1541, %v1554
      %v1556 = vcombine.high %v1548, %v1548
      %v1557 = vcombine.high %v1555, %v1555
      %v1558 = vcombine.high %v1455, %v1455
      %v1560 = vunpack.c.l.s4 1983009808
      %v1561 = vunpack.c.0.s8 %v1560
      %v1562 = vlaneseq
      %v1563 = vshrl.u32 %v1562, 7
      %v1564 = vsub.s32 %v1561, %v1563
      %v1565 = vrot.slane %v1455, %v1564
      %v1567 = vunpack.c.l.s4 1983009808
      %v1568 = vunpack.c.0.s8 %v1567
      %v1569 = vlaneseq
      %v1570 = vshrl.u32 %v1569, 7
      %v1571 = vsub.s32 %v1568, %v1570
      %v1572 = vrot.slane %v1558, %v1571
      %v1573 = vcombine.high %v1565, %v1565
      %v1574 = vcombine.high %v1456, %v1456
      %v1576 = vunpack.c.l.s4 1983009808
      %v1577 = vunpack.c.0.s8 %v1576
      %v1578 = vlaneseq
      %v1579 = vshrl.u32 %v1578, 7
      %v1580 = vsub.s32 %v1577, %v1579
      %v1581 = vrot.slane %v1456, %v1580
      %v1583 = vunpack.c.l.s4 1983009808
      %v1584 = vunpack.c.0.s8 %v1583
      %v1585 = vlaneseq
      %v1586 = vshrl.u32 %v1585, 7
      %v1587 = vsub.s32 %v1584, %v1586
      %v1588 = vrot.slane %v1574, %v1587
      %v1589 = vcombine.high %v1581, %v1581
      %v1590 = vcombine.high %v1588, %v1588
      %v1591 = vcombine.high %v1457, %v1457
      %v1593 = vunpack.c.l.s4 1983009808
      %v1594 = vunpack.c.0.s8 %v1593
      %v1595 = vlaneseq
      %v1596 = vshrl.u32 %v1595, 7
      %v1597 = vsub.s32 %v1594, %v1596
      %v1598 = vrot.slane %v1457, %v1597
      %v1600 = vunpack.c.l.s4 1983009808
      %v1601 = vunpack.c.0.s8 %v1600
      %v1602 = vlaneseq
      %v1603 = vshrl.u32 %v1602, 7
      %v1604 = vsub.s32 %v1601, %v1603
      %v1605 = vrot.slane %v1591, %v1604
      %v1606 = vcombine.high %v1598, %v1598
      %v1607 = vcombine.high %v1458, %v1458
      %v1609 = vunpack.c.l.s4 1983009808
      %v1610 = vunpack.c.0.s8 %v1609
      %v1611 = vlaneseq
      %v1612 = vshrl.u32 %v1611, 7
      %v1613 = vsub.s32 %v1610, %v1612
      %v1614 = vrot.slane %v1458, %v1613
      %v1616 = vunpack.c.l.s4 1983009808
      %v1617 = vunpack.c.0.s8 %v1616
      %v1618 = vlaneseq
      %v1619 = vshrl.u32 %v1618, 7
      %v1620 = vsub.s32 %v1617, %v1619
      %v1621 = vrot.slane %v1607, %v1620
      %v1622 = vcombine.high %v1614, %v1614
      %v1623 = vcombine.high %v1621, %v1621
      %v1624 = vcombine.high %v1459, %v1459
      %v1626 = vunpack.c.l.s4 1983009808
      %v1627 = vunpack.c.0.s8 %v1626
      %v1628 = vlaneseq
      %v1629 = vshrl.u32 %v1628, 7
      %v1630 = vsub.s32 %v1627, %v1629
      %v1631 = vrot.slane %v1459, %v1630
      %v1633 = vunpack.c.l.s4 1983009808
      %v1634 = vunpack.c.0.s8 %v1633
      %v1635 = vlaneseq
      %v1636 = vshrl.u32 %v1635, 7
      %v1637 = vsub.s32 %v1634, %v1636
      %v1638 = vrot.slane %v1624, %v1637
      %v1639 = vcombine.high %v1631, %v1631
      %v1640 = vcombine.high %v1460, %v1460
      %v1642 = vunpack.c.l.s4 1983009808
      %v1643 = vunpack.c.0.s8 %v1642
      %v1644 = vlaneseq
      %v1645 = vshrl.u32 %v1644, 7
      %v1646 = vsub.s32 %v1643, %v1645
      %v1647 = vrot.slane %v1460, %v1646
      %v1649 = vunpack.c.l.s4 1983009808
      %v1650 = vunpack.c.0.s8 %v1649
      %v1651 = vlaneseq
      %v1652 = vshrl.u32 %v1651, 7
      %v1653 = vsub.s32 %v1650, %v1652
      %v1654 = vrot.slane %v1640, %v1653
      %v1655 = vcombine.high %v1647, %v1647
      %v1656 = vcombine.high %v1654, %v1654
      %v1657 = vcombine.high %v1461, %v1461
      %v1659 = vunpack.c.l.s4 1983009808
      %v1660 = vunpack.c.0.s8 %v1659
      %v1661 = vlaneseq
      %v1662 = vshrl.u32 %v1661, 7
      %v1663 = vsub.s32 %v1660, %v1662
      %v1664 = vrot.slane %v1461, %v1663
      %v1666 = vunpack.c.l.s4 1983009808
      %v1667 = vunpack.c.0.s8 %v1666
      %v1668 = vlaneseq
      %v1669 = vshrl.u32 %v1668, 7
      %v1670 = vsub.s32 %v1667, %v1669
      %v1671 = vrot.slane %v1657, %v1670
      %v1672 = vcombine.high %v1664, %v1664
      %v1673 = vcombine.high %v1462, %v1462
      %v1675 = vunpack.c.l.s4 1983009808
      %v1676 = vunpack.c.0.s8 %v1675
      %v1677 = vlaneseq
      %v1678 = vshrl.u32 %v1677, 7
      %v1679 = vsub.s32 %v1676, %v1678
      %v1680 = vrot.slane %v1462, %v1679
      %v1682 = vunpack.c.l.s4 1983009808
      %v1683 = vunpack.c.0.s8 %v1682
      %v1684 = vlaneseq
      %v1685 = vshrl.u32 %v1684, 7
      %v1686 = vsub.s32 %v1683, %v1685
      %v1687 = vrot.slane %v1673, %v1686
      %v1688 = vcombine.high %v1680, %v1680
      %v1689 = vcombine.high %v1687, %v1687
      %v1690 = vcombine.high %v1463, %v1463
      %v1692 = vunpack.c.l.s4 1983009808
      %v1693 = vunpack.c.0.s8 %v1692
      %v1694 = vlaneseq
      %v1695 = vshrl.u32 %v1694, 7
      %v1696 = vsub.s32 %v1693, %v1695
      %v1697 = vrot.slane %v1463, %v1696
      %v1699 = vunpack.c.l.s4 1983009808
      %v1700 = vunpack.c.0.s8 %v1699
      %v1701 = vlaneseq
      %v1702 = vshrl.u32 %v1701, 7
      %v1703 = vsub.s32 %v1700, %v1702
      %v1704 = vrot.slane %v1690, %v1703
      %v1705 = vcombine.high %v1697, %v1697
      %v1706 = vcombine.high %v1464, %v1464
      %v1708 = vunpack.c.l.s4 1983009808
      %v1709 = vunpack.c.0.s8 %v1708
      %v1710 = vlaneseq
      %v1711 = vshrl.u32 %v1710, 7
      %v1712 = vsub.s32 %v1709, %v1711
      %v1713 = vrot.slane %v1464, %v1712
      %v1715 = vunpack.c.l.s4 1983009808
      %v1716 = vunpack.c.0.s8 %v1715
      %v1717 = vlaneseq
      %v1718 = vshrl.u32 %v1717, 7
      %v1719 = vsub.s32 %v1716, %v1718
      %v1720 = vrot.slane %v1706, %v1719
      %v1721 = vcombine.high %v1713, %v1713
      %v1722 = vcombine.high %v1720, %v1720
      %v1723 = vcombine.high %v1465, %v1465
      %v1725 = vunpack.c.l.s4 1983009808
      %v1726 = vunpack.c.0.s8 %v1725
      %v1727 = vlaneseq
      %v1728 = vshrl.u32 %v1727, 7
      %v1729 = vsub.s32 %v1726, %v1728
      %v1730 = vrot.slane %v1465, %v1729
      %v1732 = vunpack.c.l.s4 1983009808
      %v1733 = vunpack.c.0.s8 %v1732
      %v1734 = vlaneseq
      %v1735 = vshrl.u32 %v1734, 7
      %v1736 = vsub.s32 %v1733, %v1735
      %v1737 = vrot.slane %v1723, %v1736
      %v1738 = vcombine.high %v1730, %v1730
      %v1739 = vcombine.high %v1466, %v1466
      %v1741 = vunpack.c.l.s4 1983009808
      %v1742 = vunpack.c.0.s8 %v1741
      %v1743 = vlaneseq
      %v1744 = vshrl.u32 %v1743, 7
      %v1745 = vsub.s32 %v1742, %v1744
      %v1746 = vrot.slane %v1466, %v1745
      %v1748 = vunpack.c.l.s4 1983009808
      %v1749 = vunpack.c.0.s8 %v1748
      %v1750 = vlaneseq
      %v1751 = vshrl.u32 %v1750, 7
      %v1752 = vsub.s32 %v1749, %v1751
      %v1753 = vrot.slane %v1739, %v1752
      %v1754 = vcombine.high %v1746, %v1746
      %v1755 = vcombine.high %v1753, %v1753
      %v1756 = vcombine.high %v1467, %v1467
      %v1758 = vunpack.c.l.s4 1983009808
      %v1759 = vunpack.c.0.s8 %v1758
      %v1760 = vlaneseq
      %v1761 = vshrl.u32 %v1760, 7
      %v1762 = vsub.s32 %v1759, %v1761
      %v1763 = vrot.slane %v1467, %v1762
      %v1765 = vunpack.c.l.s4 1983009808
      %v1766 = vunpack.c.0.s8 %v1765
      %v1767 = vlaneseq
      %v1768 = vshrl.u32 %v1767, 7
      %v1769 = vsub.s32 %v1766, %v1768
      %v1770 = vrot.slane %v1756, %v1769
      %v1771 = vcombine.high %v1763, %v1763
      %v1772 = vcombine.high %v1468, %v1468
      %v1774 = vunpack.c.l.s4 1983009808
      %v1775 = vunpack.c.0.s8 %v1774
      %v1776 = vlaneseq
      %v1777 = vshrl.u32 %v1776, 7
      %v1778 = vsub.s32 %v1775, %v1777
      %v1779 = vrot.slane %v1468, %v1778
      %v1781 = vunpack.c.l.s4 1983009808
      %v1782 = vunpack.c.0.s8 %v1781
      %v1783 = vlaneseq
      %v1784 = vshrl.u32 %v1783, 7
      %v1785 = vsub.s32 %v1782, %v1784
      %v1786 = vrot.slane %v1772, %v1785
      %v1787 = vcombine.high %v1779, %v1779
      %v1788 = vcombine.high %v1786, %v1786
      %v1789 = vcombine.high %v1469, %v1469
      %v1791 = vunpack.c.l.s4 1983009808
      %v1792 = vunpack.c.0.s8 %v1791
      %v1793 = vlaneseq
      %v1794 = vshrl.u32 %v1793, 7
      %v1795 = vsub.s32 %v1792, %v1794
      %v1796 = vrot.slane %v1469, %v1795
      %v1798 = vunpack.c.l.s4 1983009808
      %v1799 = vunpack.c.0.s8 %v1798
      %v1800 = vlaneseq
      %v1801 = vshrl.u32 %v1800, 7
      %v1802 = vsub.s32 %v1799, %v1801
      %v1803 = vrot.slane %v1789, %v1802
      %v1804 = vcombine.high %v1796, %v1796
      %v1805 = vcombine.high %v1470, %v1470
      %v1807 = vunpack.c.l.s4 1983009808
      %v1808 = vunpack.c.0.s8 %v1807
      %v1809 = vlaneseq
      %v1810 = vshrl.u32 %v1809, 7
      %v1811 = vsub.s32 %v1808, %v1810
      %v1812 = vrot.slane %v1470, %v1811
      %v1814 = vunpack.c.l.s4 1983009808
      %v1815 = vunpack.c.0.s8 %v1814
      %v1816 = vlaneseq
      %v1817 = vshrl.u32 %v1816, 7
      %v1818 = vsub.s32 %v1815, %v1817
      %v1819 = vrot.slane %v1805, %v1818
      %v1820 = vcombine.high %v1812, %v1812
      %v1821 = vcombine.high %v1819, %v1819
      %v1822 = vcombine.high %v1471, %v1471
      %v1824 = vunpack.c.l.s4 1983009808
      %v1825 = vunpack.c.0.s8 %v1824
      %v1826 = vlaneseq
      %v1827 = vshrl.u32 %v1826, 7
      %v1828 = vsub.s32 %v1825, %v1827
      %v1829 = vrot.slane %v1471, %v1828
      %v1831 = vunpack.c.l.s4 1983009808
      %v1832 = vunpack.c.0.s8 %v1831
      %v1833 = vlaneseq
      %v1834 = vshrl.u32 %v1833, 7
      %v1835 = vsub.s32 %v1832, %v1834
      %v1836 = vrot.slane %v1822, %v1835
      %v1837 = vcombine.high %v1829, %v1829
      %v1838 = vcombine.high %v1472, %v1472
      %v1840 = vunpack.c.l.s4 1983009808
      %v1841 = vunpack.c.0.s8 %v1840
      %v1842 = vlaneseq
      %v1843 = vshrl.u32 %v1842, 7
      %v1844 = vsub.s32 %v1841, %v1843
      %v1845 = vrot.slane %v1472, %v1844
      %v1847 = vunpack.c.l.s4 1983009808
      %v1848 = vunpack.c.0.s8 %v1847
      %v1849 = vlaneseq
      %v1850 = vshrl.u32 %v1849, 7
      %v1851 = vsub.s32 %v1848, %v1850
      %v1852 = vrot.slane %v1838, %v1851
      %v1853 = vcombine.high %v1845, %v1845
      %v1854 = vcombine.high %v1852, %v1852
      %v1855 = vcombine.high %v1473, %v1473
      %v1857 = vunpack.c.l.s4 1983009808
      %v1858 = vunpack.c.0.s8 %v1857
      %v1859 = vlaneseq
      %v1860 = vshrl.u32 %v1859, 7
      %v1861 = vsub.s32 %v1858, %v1860
      %v1862 = vrot.slane %v1473, %v1861
      %v1864 = vunpack.c.l.s4 1983009808
      %v1865 = vunpack.c.0.s8 %v1864
      %v1866 = vlaneseq
      %v1867 = vshrl.u32 %v1866, 7
      %v1868 = vsub.s32 %v1865, %v1867
      %v1869 = vrot.slane %v1855, %v1868
      %v1870 = vcombine.high %v1862, %v1862
      %v1871 = vcombine.high %v1474, %v1474
      %v1873 = vunpack.c.l.s4 1983009808
      %v1874 = vunpack.c.0.s8 %v1873
      %v1875 = vlaneseq
      %v1876 = vshrl.u32 %v1875, 7
      %v1877 = vsub.s32 %v1874, %v1876
      %v1878 = vrot.slane %v1474, %v1877
      %v1880 = vunpack.c.l.s4 1983009808
      %v1881 = vunpack.c.0.s8 %v1880
      %v1882 = vlaneseq
      %v1883 = vshrl.u32 %v1882, 7
      %v1884 = vsub.s32 %v1881, %v1883
      %v1885 = vrot.slane %v1871, %v1884
      %v1886 = vcombine.high %v1878, %v1878
      %v1887 = vcombine.high %v1885, %v1885
      %v1888 = vcombine.high %v1475, %v1475
      %v1890 = vunpack.c.l.s4 1983009808
      %v1891 = vunpack.c.0.s8 %v1890
      %v1892 = vlaneseq
      %v1893 = vshrl.u32 %v1892, 7
      %v1894 = vsub.s32 %v1891, %v1893
      %v1895 = vrot.slane %v1475, %v1894
      %v1897 = vunpack.c.l.s4 1983009808
      %v1898 = vunpack.c.0.s8 %v1897
      %v1899 = vlaneseq
      %v1900 = vshrl.u32 %v1899, 7
      %v1901 = vsub.s32 %v1898, %v1900
      %v1902 = vrot.slane %v1888, %v1901
      %v1903 = vcombine.high %v1895, %v1895
      %v1904 = vcombine.high %v1476, %v1476
      %v1906 = vunpack.c.l.s4 1983009808
      %v1907 = vunpack.c.0.s8 %v1906
      %v1908 = vlaneseq
      %v1909 = vshrl.u32 %v1908, 7
      %v1910 = vsub.s32 %v1907, %v1909
      %v1911 = vrot.slane %v1476, %v1910
      %v1913 = vunpack.c.l.s4 1983009808
      %v1914 = vunpack.c.0.s8 %v1913
      %v1915 = vlaneseq
      %v1916 = vshrl.u32 %v1915, 7
      %v1917 = vsub.s32 %v1914, %v1916
      %v1918 = vrot.slane %v1904, %v1917
      %v1919 = vcombine.high %v1911, %v1911
      %v1920 = vcombine.high %v1918, %v1918
      %v1921 = vcombine.high %v1477, %v1477
      %v1923 = vunpack.c.l.s4 1983009808
      %v1924 = vunpack.c.0.s8 %v1923
      %v1925 = vlaneseq
      %v1926 = vshrl.u32 %v1925, 7
      %v1927 = vsub.s32 %v1924, %v1926
      %v1928 = vrot.slane %v1477, %v1927
      %v1930 = vunpack.c.l.s4 1983009808
      %v1931 = vunpack.c.0.s8 %v1930
      %v1932 = vlaneseq
      %v1933 = vshrl.u32 %v1932, 7
      %v1934 = vsub.s32 %v1931, %v1933
      %v1935 = vrot.slane %v1921, %v1934
      %v1936 = vcombine.high %v1928, %v1928
      %v1937 = vcombine.high %v1478, %v1478
      %v1939 = vunpack.c.l.s4 1983009808
      %v1940 = vunpack.c.0.s8 %v1939
      %v1941 = vlaneseq
      %v1942 = vshrl.u32 %v1941, 7
      %v1943 = vsub.s32 %v1940, %v1942
      %v1944 = vrot.slane %v1478, %v1943
      %v1946 = vunpack.c.l.s4 1983009808
      %v1947 = vunpack.c.0.s8 %v1946
      %v1948 = vlaneseq
      %v1949 = vshrl.u32 %v1948, 7
      %v1950 = vsub.s32 %v1947, %v1949
      %v1951 = vrot.slane %v1937, %v1950
      %v1952 = vcombine.high %v1944, %v1944
      %v1953 = vcombine.high %v1951, %v1951
      %v1954 = vcombine.high %v1479, %v1479
      %v1956 = vunpack.c.l.s4 1983009808
      %v1957 = vunpack.c.0.s8 %v1956
      %v1958 = vlaneseq
      %v1959 = vshrl.u32 %v1958, 7
      %v1960 = vsub.s32 %v1957, %v1959
      %v1961 = vrot.slane %v1479, %v1960
      %v1963 = vunpack.c.l.s4 1983009808
      %v1964 = vunpack.c.0.s8 %v1963
      %v1965 = vlaneseq
      %v1966 = vshrl.u32 %v1965, 7
      %v1967 = vsub.s32 %v1964, %v1966
      %v1968 = vrot.slane %v1954, %v1967
      %v1969 = vcombine.high %v1961, %v1961
      %v1970 = vld [vmem:[%s1] sm:$0xff]
      %v1971 = vld [vmem:[%s1 + $0x8] sm:$0xff]
      %v1972 = vld [vmem:[%s1 + $0x10] sm:$0xff]
      %v1973 = vld [vmem:[%s1 + $0x18] sm:$0x7]
      %v1974 = vld [vmem:[%s2] sm:$0x1]
      %v1976 = vlaneseq
      %v1977 = vshrl.u32 %v1976, 7
      %v1978 = vsub.s32 0, %v1977
      %v1979 = vrot.slane %v1974, %v1978
      %v1981 = vcombine.low %v1515, %v1523
      %v1982 = vcombine.low %v1522, %v1524
      %v1984 = vunpack.c.l.s4 1983009808
      %v1985 = vunpack.c.0.s8 %v1984
      %v1986 = vlaneseq
      %v1987 = vshrl.u32 %v1986, 7
      %v1988 = vsub.s32 %v1985, %v1987
      %v1989 = vrot.slane %v1981, %v1988
      %v1991 = vunpack.c.l.s4 1983009808
      %v1992 = vunpack.c.0.s8 %v1991
      %v1993 = vlaneseq
      %v1994 = vshrl.u32 %v1993, 7
      %v1995 = vsub.s32 %v1992, %v1994
      %v1996 = vrot.slane %v1982, %v1995
      %v1997 = vcombine.low %v1989, %v1996
      %v1998 = vcombine.low %v1532, %v1540
      %v1999 = vcombine.low %v1539, %v1548
      %v2001 = vunpack.c.l.s4 1983009808
      %v2002 = vunpack.c.0.s8 %v2001
      %v2003 = vlaneseq
      %v2004 = vshrl.u32 %v2003, 7
      %v2005 = vsub.s32 %v2002, %v2004
      %v2006 = vrot.slane %v1998, %v2005
      %v2008 = vunpack.c.l.s4 1983009808
      %v2009 = vunpack.c.0.s8 %v2008
      %v2010 = vlaneseq
      %v2011 = vshrl.u32 %v2010, 7
      %v2012 = vsub.s32 %v2009, %v2011
      %v2013 = vrot.slane %v1999, %v2012
      %v2014 = vcombine.low %v2006, %v2013
      %v2015 = vcombine.low %v1556, %v1555
      %v2016 = vcombine.low %v1557, %v1565
      %v2018 = vunpack.c.l.s4 1983009808
      %v2019 = vunpack.c.0.s8 %v2018
      %v2020 = vlaneseq
      %v2021 = vshrl.u32 %v2020, 7
      %v2022 = vsub.s32 %v2019, %v2021
      %v2023 = vrot.slane %v2015, %v2022
      %v2025 = vunpack.c.l.s4 1983009808
      %v2026 = vunpack.c.0.s8 %v2025
      %v2027 = vlaneseq
      %v2028 = vshrl.u32 %v2027, 7
      %v2029 = vsub.s32 %v2026, %v2028
      %v2030 = vrot.slane %v2016, %v2029
      %v2031 = vcombine.low %v2023, %v2030
      %v2032 = vcombine.low %v1573, %v1572
      %v2033 = vcombine.low %v1581, %v1589
      %v2035 = vunpack.c.l.s4 1983009808
      %v2036 = vunpack.c.0.s8 %v2035
      %v2037 = vlaneseq
      %v2038 = vshrl.u32 %v2037, 7
      %v2039 = vsub.s32 %v2036, %v2038
      %v2040 = vrot.slane %v2032, %v2039
      %v2042 = vunpack.c.l.s4 1983009808
      %v2043 = vunpack.c.0.s8 %v2042
      %v2044 = vlaneseq
      %v2045 = vshrl.u32 %v2044, 7
      %v2046 = vsub.s32 %v2043, %v2045
      %v2047 = vrot.slane %v2033, %v2046
      %v2048 = vcombine.low %v2040, %v2047
      %v2049 = vcombine.low %v1588, %v1590
      %v2050 = vcombine.low %v1598, %v1606
      %v2052 = vunpack.c.l.s4 1983009808
      %v2053 = vunpack.c.0.s8 %v2052
      %v2054 = vlaneseq
      %v2055 = vshrl.u32 %v2054, 7
      %v2056 = vsub.s32 %v2053, %v2055
      %v2057 = vrot.slane %v2049, %v2056
      %v2059 = vunpack.c.l.s4 1983009808
      %v2060 = vunpack.c.0.s8 %v2059
      %v2061 = vlaneseq
      %v2062 = vshrl.u32 %v2061, 7
      %v2063 = vsub.s32 %v2060, %v2062
      %v2064 = vrot.slane %v2050, %v2063
      %v2065 = vcombine.low %v2057, %v2064
      %v2066 = vcombine.low %v1605, %v1614
      %v2067 = vcombine.low %v1622, %v1621
      %v2069 = vunpack.c.l.s4 1983009808
      %v2070 = vunpack.c.0.s8 %v2069
      %v2071 = vlaneseq
      %v2072 = vshrl.u32 %v2071, 7
      %v2073 = vsub.s32 %v2070, %v2072
      %v2074 = vrot.slane %v2066, %v2073
      %v2076 = vunpack.c.l.s4 1983009808
      %v2077 = vunpack.c.0.s8 %v2076
      %v2078 = vlaneseq
      %v2079 = vshrl.u32 %v2078, 7
      %v2080 = vsub.s32 %v2077, %v2079
      %v2081 = vrot.slane %v2067, %v2080
      %v2082 = vcombine.low %v2074, %v2081
      %v2083 = vcombine.low %v1623, %v1631
      %v2084 = vcombine.low %v1639, %v1638
      %v2086 = vunpack.c.l.s4 1983009808
      %v2087 = vunpack.c.0.s8 %v2086
      %v2088 = vlaneseq
      %v2089 = vshrl.u32 %v2088, 7
      %v2090 = vsub.s32 %v2087, %v2089
      %v2091 = vrot.slane %v2083, %v2090
      %v2093 = vunpack.c.l.s4 1983009808
      %v2094 = vunpack.c.0.s8 %v2093
      %v2095 = vlaneseq
      %v2096 = vshrl.u32 %v2095, 7
      %v2097 = vsub.s32 %v2094, %v2096
      %v2098 = vrot.slane %v2084, %v2097
      %v2099 = vcombine.low %v2091, %v2098
      %v2100 = vcombine.low %v1647, %v1655
      %v2101 = vcombine.low %v1654, %v1656
      %v2103 = vunpack.c.l.s4 1983009808
      %v2104 = vunpack.c.0.s8 %v2103
      %v2105 = vlaneseq
      %v2106 = vshrl.u32 %v2105, 7
      %v2107 = vsub.s32 %v2104, %v2106
      %v2108 = vrot.slane %v2100, %v2107
      %v2110 = vunpack.c.l.s4 1983009808
      %v2111 = vunpack.c.0.s8 %v2110
      %v2112 = vlaneseq
      %v2113 = vshrl.u32 %v2112, 7
      %v2114 = vsub.s32 %v2111, %v2113
      %v2115 = vrot.slane %v2101, %v2114
      %v2116 = vcombine.low %v2108, %v2115
      %v2117 = vcombine.low %v1664, %v1672
      %v2118 = vcombine.low %v1671, %v1680
      %v2120 = vunpack.c.l.s4 1983009808
      %v2121 = vunpack.c.0.s8 %v2120
      %v2122 = vlaneseq
      %v2123 = vshrl.u32 %v2122, 7
      %v2124 = vsub.s32 %v2121, %v2123
      %v2125 = vrot.slane %v2117, %v2124
      %v2127 = vunpack.c.l.s4 1983009808
      %v2128 = vunpack.c.0.s8 %v2127
      %v2129 = vlaneseq
      %v2130 = vshrl.u32 %v2129, 7
      %v2131 = vsub.s32 %v2128, %v2130
      %v2132 = vrot.slane %v2118, %v2131
      %v2133 = vcombine.low %v2125, %v2132
      %v2134 = vcombine.low %v1688, %v1687
      %v2135 = vcombine.low %v1689, %v1697
      %v2137 = vunpack.c.l.s4 1983009808
      %v2138 = vunpack.c.0.s8 %v2137
      %v2139 = vlaneseq
      %v2140 = vshrl.u32 %v2139, 7
      %v2141 = vsub.s32 %v2138, %v2140
      %v2142 = vrot.slane %v2134, %v2141
      %v2144 = vunpack.c.l.s4 1983009808
      %v2145 = vunpack.c.0.s8 %v2144
      %v2146 = vlaneseq
      %v2147 = vshrl.u32 %v2146, 7
      %v2148 = vsub.s32 %v2145, %v2147
      %v2149 = vrot.slane %v2135, %v2148
      %v2150 = vcombine.low %v2142, %v2149
      %v2151 = vcombine.low %v1705, %v1704
      %v2152 = vcombine.low %v1713, %v1721
      %v2154 = vunpack.c.l.s4 1983009808
      %v2155 = vunpack.c.0.s8 %v2154
      %v2156 = vlaneseq
      %v2157 = vshrl.u32 %v2156, 7
      %v2158 = vsub.s32 %v2155, %v2157
      %v2159 = vrot.slane %v2151, %v2158
      %v2161 = vunpack.c.l.s4 1983009808
      %v2162 = vunpack.c.0.s8 %v2161
      %v2163 = vlaneseq
      %v2164 = vshrl.u32 %v2163, 7
      %v2165 = vsub.s32 %v2162, %v2164
      %v2166 = vrot.slane %v2152, %v2165
      %v2167 = vcombine.low %v2159, %v2166
      %v2168 = vcombine.low %v1720, %v1722
      %v2169 = vcombine.low %v1730, %v1738
      %v2171 = vunpack.c.l.s4 1983009808
      %v2172 = vunpack.c.0.s8 %v2171
      %v2173 = vlaneseq
      %v2174 = vshrl.u32 %v2173, 7
      %v2175 = vsub.s32 %v2172, %v2174
      %v2176 = vrot.slane %v2168, %v2175
      %v2178 = vunpack.c.l.s4 1983009808
      %v2179 = vunpack.c.0.s8 %v2178
      %v2180 = vlaneseq
      %v2181 = vshrl.u32 %v2180, 7
      %v2182 = vsub.s32 %v2179, %v2181
      %v2183 = vrot.slane %v2169, %v2182
      %v2184 = vcombine.low %v2176, %v2183
      %v2185 = vcombine.low %v1737, %v1746
      %v2186 = vcombine.low %v1754, %v1753
      %v2188 = vunpack.c.l.s4 1983009808
      %v2189 = vunpack.c.0.s8 %v2188
      %v2190 = vlaneseq
      %v2191 = vshrl.u32 %v2190, 7
      %v2192 = vsub.s32 %v2189, %v2191
      %v2193 = vrot.slane %v2185, %v2192
      %v2195 = vunpack.c.l.s4 1983009808
      %v2196 = vunpack.c.0.s8 %v2195
      %v2197 = vlaneseq
      %v2198 = vshrl.u32 %v2197, 7
      %v2199 = vsub.s32 %v2196, %v2198
      %v2200 = vrot.slane %v2186, %v2199
      %v2201 = vcombine.low %v2193, %v2200
      %v2202 = vcombine.low %v1755, %v1763
      %v2203 = vcombine.low %v1771, %v1770
      %v2205 = vunpack.c.l.s4 1983009808
      %v2206 = vunpack.c.0.s8 %v2205
      %v2207 = vlaneseq
      %v2208 = vshrl.u32 %v2207, 7
      %v2209 = vsub.s32 %v2206, %v2208
      %v2210 = vrot.slane %v2202, %v2209
      %v2212 = vunpack.c.l.s4 1983009808
      %v2213 = vunpack.c.0.s8 %v2212
      %v2214 = vlaneseq
      %v2215 = vshrl.u32 %v2214, 7
      %v2216 = vsub.s32 %v2213, %v2215
      %v2217 = vrot.slane %v2203, %v2216
      %v2218 = vcombine.low %v2210, %v2217
      %v2219 = vcombine.low %v1779, %v1787
      %v2220 = vcombine.low %v1786, %v1788
      %v2222 = vunpack.c.l.s4 1983009808
      %v2223 = vunpack.c.0.s8 %v2222
      %v2224 = vlaneseq
      %v2225 = vshrl.u32 %v2224, 7
      %v2226 = vsub.s32 %v2223, %v2225
      %v2227 = vrot.slane %v2219, %v2226
      %v2229 = vunpack.c.l.s4 1983009808
      %v2230 = vunpack.c.0.s8 %v2229
      %v2231 = vlaneseq
      %v2232 = vshrl.u32 %v2231, 7
      %v2233 = vsub.s32 %v2230, %v2232
      %v2234 = vrot.slane %v2220, %v2233
      %v2235 = vcombine.low %v2227, %v2234
      %v2236 = vcombine.low %v1796, %v1804
      %v2237 = vcombine.low %v1803, %v1812
      %v2239 = vunpack.c.l.s4 1983009808
      %v2240 = vunpack.c.0.s8 %v2239
      %v2241 = vlaneseq
      %v2242 = vshrl.u32 %v2241, 7
      %v2243 = vsub.s32 %v2240, %v2242
      %v2244 = vrot.slane %v2236, %v2243
      %v2246 = vunpack.c.l.s4 1983009808
      %v2247 = vunpack.c.0.s8 %v2246
      %v2248 = vlaneseq
      %v2249 = vshrl.u32 %v2248, 7
      %v2250 = vsub.s32 %v2247, %v2249
      %v2251 = vrot.slane %v2237, %v2250
      %v2252 = vcombine.low %v2244, %v2251
      %v2253 = vcombine.low %v1820, %v1819
      %v2254 = vcombine.low %v1821, %v1829
      %v2256 = vunpack.c.l.s4 1983009808
      %v2257 = vunpack.c.0.s8 %v2256
      %v2258 = vlaneseq
      %v2259 = vshrl.u32 %v2258, 7
      %v2260 = vsub.s32 %v2257, %v2259
      %v2261 = vrot.slane %v2253, %v2260
      %v2263 = vunpack.c.l.s4 1983009808
      %v2264 = vunpack.c.0.s8 %v2263
      %v2265 = vlaneseq
      %v2266 = vshrl.u32 %v2265, 7
      %v2267 = vsub.s32 %v2264, %v2266
      %v2268 = vrot.slane %v2254, %v2267
      %v2269 = vcombine.low %v2261, %v2268
      %v2270 = vcombine.low %v1837, %v1836
      %v2271 = vcombine.low %v1845, %v1853
      %v2273 = vunpack.c.l.s4 1983009808
      %v2274 = vunpack.c.0.s8 %v2273
      %v2275 = vlaneseq
      %v2276 = vshrl.u32 %v2275, 7
      %v2277 = vsub.s32 %v2274, %v2276
      %v2278 = vrot.slane %v2270, %v2277
      %v2280 = vunpack.c.l.s4 1983009808
      %v2281 = vunpack.c.0.s8 %v2280
      %v2282 = vlaneseq
      %v2283 = vshrl.u32 %v2282, 7
      %v2284 = vsub.s32 %v2281, %v2283
      %v2285 = vrot.slane %v2271, %v2284
      %v2286 = vcombine.low %v2278, %v2285
      %v2287 = vcombine.low %v1852, %v1854
      %v2288 = vcombine.low %v1862, %v1870
      %v2290 = vunpack.c.l.s4 1983009808
      %v2291 = vunpack.c.0.s8 %v2290
      %v2292 = vlaneseq
      %v2293 = vshrl.u32 %v2292, 7
      %v2294 = vsub.s32 %v2291, %v2293
      %v2295 = vrot.slane %v2287, %v2294
      %v2297 = vunpack.c.l.s4 1983009808
      %v2298 = vunpack.c.0.s8 %v2297
      %v2299 = vlaneseq
      %v2300 = vshrl.u32 %v2299, 7
      %v2301 = vsub.s32 %v2298, %v2300
      %v2302 = vrot.slane %v2288, %v2301
      %v2303 = vcombine.low %v2295, %v2302
      %v2304 = vcombine.low %v1869, %v1878
      %v2305 = vcombine.low %v1886, %v1885
      %v2307 = vunpack.c.l.s4 1983009808
      %v2308 = vunpack.c.0.s8 %v2307
      %v2309 = vlaneseq
      %v2310 = vshrl.u32 %v2309, 7
      %v2311 = vsub.s32 %v2308, %v2310
      %v2312 = vrot.slane %v2304, %v2311
      %v2314 = vunpack.c.l.s4 1983009808
      %v2315 = vunpack.c.0.s8 %v2314
      %v2316 = vlaneseq
      %v2317 = vshrl.u32 %v2316, 7
      %v2318 = vsub.s32 %v2315, %v2317
      %v2319 = vrot.slane %v2305, %v2318
      %v2320 = vcombine.low %v2312, %v2319
      %v2321 = vcombine.low %v1887, %v1895
      %v2322 = vcombine.low %v1903, %v1902
      %v2324 = vunpack.c.l.s4 1983009808
      %v2325 = vunpack.c.0.s8 %v2324
      %v2326 = vlaneseq
      %v2327 = vshrl.u32 %v2326, 7
      %v2328 = vsub.s32 %v2325, %v2327
      %v2329 = vrot.slane %v2321, %v2328
      %v2331 = vunpack.c.l.s4 1983009808
      %v2332 = vunpack.c.0.s8 %v2331
      %v2333 = vlaneseq
      %v2334 = vshrl.u32 %v2333, 7
      %v2335 = vsub.s32 %v2332, %v2334
      %v2336 = vrot.slane %v2322, %v2335
      %v2337 = vcombine.low %v2329, %v2336
      %v2338 = vcombine.low %v1911, %v1919
      %v2339 = vcombine.low %v1918, %v1920
      %v2341 = vunpack.c.l.s4 1983009808
      %v2342 = vunpack.c.0.s8 %v2341
      %v2343 = vlaneseq
      %v2344 = vshrl.u32 %v2343, 7
      %v2345 = vsub.s32 %v2342, %v2344
      %v2346 = vrot.slane %v2338, %v2345
      %v2348 = vunpack.c.l.s4 1983009808
      %v2349 = vunpack.c.0.s8 %v2348
      %v2350 = vlaneseq
      %v2351 = vshrl.u32 %v2350, 7
      %v2352 = vsub.s32 %v2349, %v2351
      %v2353 = vrot.slane %v2339, %v2352
      %v2354 = vcombine.low %v2346, %v2353
      %v2355 = vcombine.low %v1928, %v1936
      %v2356 = vcombine.low %v1935, %v1944
      %v2358 = vunpack.c.l.s4 1983009808
      %v2359 = vunpack.c.0.s8 %v2358
      %v2360 = vlaneseq
      %v2361 = vshrl.u32 %v2360, 7
      %v2362 = vsub.s32 %v2359, %v2361
      %v2363 = vrot.slane %v2355, %v2362
      %v2365 = vunpack.c.l.s4 1983009808
      %v2366 = vunpack.c.0.s8 %v2365
      %v2367 = vlaneseq
      %v2368 = vshrl.u32 %v2367, 7
      %v2369 = vsub.s32 %v2366, %v2368
      %v2370 = vrot.slane %v2356, %v2369
      %v2371 = vcombine.low %v2363, %v2370
      %v2372 = vcombine.low %v1952, %v1951
      %v2373 = vcombine.low %v1953, %v1961
      %v2375 = vunpack.c.l.s4 1983009808
      %v2376 = vunpack.c.0.s8 %v2375
      %v2377 = vlaneseq
      %v2378 = vshrl.u32 %v2377, 7
      %v2379 = vsub.s32 %v2376, %v2378
      %v2380 = vrot.slane %v2372, %v2379
      %v2382 = vunpack.c.l.s4 1983009808
      %v2383 = vunpack.c.0.s8 %v2382
      %v2384 = vlaneseq
      %v2385 = vshrl.u32 %v2384, 7
      %v2386 = vsub.s32 %v2383, %v2385
      %v2387 = vrot.slane %v2373, %v2386
      %v2388 = vcombine.low %v2380, %v2387
      %v2389 = vcombine.low %v1969, %v1968
      %v2391 = vunpack.c.l.s4 1983009808
      %v2392 = vunpack.c.0.s8 %v2391
      %v2393 = vlaneseq
      %v2394 = vshrl.u32 %v2393, 7
      %v2395 = vsub.s32 %v2392, %v2394
      %v2396 = vrot.slane %v2389, %v2395
      %vm2397 = vcmask 220160
      %v2398 = vsel %vm2397, %v1997, 0
      %v2400 = vsel %vm2397, %v2014, 0
      %v2402 = vsel %vm2397, %v2031, 0
      %v2404 = vsel %vm2397, %v2048, 0
      %v2406 = vsel %vm2397, %v2065, 0
      %v2408 = vsel %vm2397, %v2082, 0
      %v2410 = vsel %vm2397, %v2099, 0
      %v2412 = vsel %vm2397, %v2116, 0
      %v2414 = vsel %vm2397, %v2133, 0
      %v2416 = vsel %vm2397, %v2150, 0
      %v2418 = vsel %vm2397, %v2167, 0
      %v2420 = vsel %vm2397, %v2184, 0
      %v2422 = vsel %vm2397, %v2201, 0
      %v2424 = vsel %vm2397, %v2218, 0
      %v2426 = vsel %vm2397, %v2235, 0
      %v2428 = vsel %vm2397, %v2252, 0
      %v2430 = vsel %vm2397, %v2269, 0
      %v2432 = vsel %vm2397, %v2286, 0
      %v2434 = vsel %vm2397, %v2303, 0
      %v2436 = vsel %vm2397, %v2320, 0
      %v2438 = vsel %vm2397, %v2337, 0
      %v2440 = vsel %vm2397, %v2354, 0
      %v2442 = vsel %vm2397, %v2371, 0
      %v2444 = vsel %vm2397, %v2388, 0
      %v2446 = vsel %vm2397, %v2396, 0
      %vm2448 = vcmask 1042432
      %v2450 = vsel %vm2448, %v1973, 0
      %2452 = vmatprep.subr.mxu0 0.0
      %2453 = vmatpush1.msra.mxu0 %v1970
      %2454 = vmatprep.subr.mxu0 0.0
      %2455 = vmatpush1.msra.mxu0 %v1971
      %2456 = vmatprep.subr.mxu0 0.0
      %2457 = vmatpush1.msra.mxu0 %v1972
      %2458 = vmatprep.subr.mxu0 0.0
      %2459 = vmatpush1.msra.mxu0 %v2450
      %2460 = vmatprep.subr.mxu0 0.0
      %2461 = vmatpush1.msra.mxu0 0.0
      %2462 = vmatprep.subr.mxu0 0.0
      %2463 = vmatpush1.msra.mxu0 0.0
      %2464 = vmatprep.subr.mxu0 0.0
      %2465 = vmatpush1.msra.mxu0 0.0
      %2466 = vmatprep.subr.mxu0 0.0
      %2467 = vmatpush1.msra.mxu0 0.0
      %2468 = vmatprep.subr.mxu0 0.0
      %2469 = vmatpush1.msra.mxu0 0.0
      %2470 = vmatprep.subr.mxu0 0.0
      %2471 = vmatpush1.msra.mxu0 0.0
      %2472 = vmatprep.subr.mxu0 0.0
      %2473 = vmatpush1.msra.mxu0 0.0
      %2474 = vmatprep.subr.mxu0 0.0
      %2475 = vmatpush1.msra.mxu0 0.0
      %2476 = vmatprep.subr.mxu0 0.0
      %2477 = vmatpush1.msra.mxu0 0.0
      %2478 = vmatprep.subr.mxu0 0.0
      %2479 = vmatpush1.msra.mxu0 0.0
      %2480 = vmatprep.subr.mxu0 0.0
      %2481 = vmatpush1.msra.mxu0 0.0
      %2482 = vmatprep.subr.mxu0 0.0
      %2483 = vmatpush1.msra.mxu0 0.0
      %2484 = vmatprep.subr.mxu0 0.0
      %2485 = vmatpush1.msra.mxu0 0.0
      %2486 = vmatprep.subr.mxu0 0.0
      %2487 = vmatpush1.msra.mxu0 0.0
      %2488 = vmatprep.subr.mxu0 0.0
      %2489 = vmatpush1.msra.mxu0 0.0
      %2490 = vmatprep.subr.mxu0 0.0
      %2491 = vmatpush1.msra.mxu0 0.0
      %2492 = vmatprep.subr.mxu0 0.0
      %2493 = vmatpush1.msra.mxu0 0.0
      %2494 = vmatprep.subr.mxu0 0.0
      %2495 = vmatpush1.msra.mxu0 0.0
      %2496 = vmatprep.subr.mxu0 0.0
      %2497 = vmatpush1.msra.mxu0 0.0
      %2498 = vmatprep.subr.mxu0 0.0
      %2499 = vmatpush1.msra.mxu0 0.0
      %2500 = vmatprep.subr.mxu0 0.0
      %2501 = vmatpush1.msra.mxu0 0.0
      %2502 = vmatprep.subr.mxu0 0.0
      %2503 = vmatpush1.msra.mxu0 0.0
      %2504 = vmatprep.subr.mxu0 0.0
      %2505 = vmatpush1.msra.mxu0 0.0
      %2506 = vmatprep.subr.mxu0 0.0
      %2507 = vmatpush1.msra.mxu0 0.0
      %2508 = vmatprep.subr.mxu0 0.0
      %2509 = vmatpush1.msra.mxu0 0.0
      %2510 = vmatprep.subr.mxu0 0.0
      %2511 = vmatpush1.msra.mxu0 0.0
      %2512 = vmatprep.subr.mxu0 0.0
      %2513 = vmatpush1.msra.mxu0 0.0
      %2514 = vmatprep.subr.mxu0 0.0
      %2515 = vmatpush1.msra.mxu0 0.0
      %2516 = vmatprep.mubr.f32.mxu0 0.0
      %2517 = vmatmul.mubr.f32.gmra.mrb[0].mxu0 %v2398
      %v2518 = vpop.f32.mrb[0].mxu0
      %v2519 = vadd.f32 %v1979, %v2518
      %v2520 = vpop.f32.mrb[0].mxu0
      %2521 = vmatprep.mubr.f32.mxu0 0.0
      %2522 = vmatmul.mubr.f32.gmra.mrb[0].mxu0 %v2400
      %v2523 = vpop.f32.mrb[0].mxu0
      %v2524 = vadd.f32 %v1979, %v2523
      %v2525 = vpop.f32.mrb[0].mxu0
      %2526 = vmatprep.mubr.f32.mxu0 0.0
      %2527 = vmatmul.mubr.f32.gmra.mrb[0].mxu0 %v2402
      %v2528 = vpop.f32.mrb[0].mxu0
      %v2529 = vadd.f32 %v1979, %v2528
      %v2530 = vpop.f32.mrb[0].mxu0
      %2531 = vmatprep.mubr.f32.mxu0 0.0
      %2532 = vmatmul.mubr.f32.gmra.mrb[0].mxu0 %v2404
      %v2533 = vpop.f32.mrb[0].mxu0
      %v2534 = vadd.f32 %v1979, %v2533
      %v2535 = vpop.f32.mrb[0].mxu0
      %2536 = vmatprep.mubr.f32.mxu0 0.0
      %2537 = vmatmul.mubr.f32.gmra.mrb[0].mxu0 %v2406
      %v2538 = vpop.f32.mrb[0].mxu0
      %v2539 = vadd.f32 %v1979, %v2538
      %v2540 = vpop.f32.mrb[0].mxu0
      %2541 = vmatprep.mubr.f32.mxu0 0.0
      %2542 = vmatmul.mubr.f32.gmra.mrb[0].mxu0 %v2408
      %v2543 = vpop.f32.mrb[0].mxu0
      %v2544 = vadd.f32 %v1979, %v2543
      %v2545 = vpop.f32.mrb[0].mxu0
      %2546 = vmatprep.mubr.f32.mxu0 0.0
      %2547 = vmatmul.mubr.f32.gmra.mrb[0].mxu0 %v2410
      %v2548 = vpop.f32.mrb[0].mxu0
      %v2549 = vadd.f32 %v1979, %v2548
      %v2550 = vpop.f32.mrb[0].mxu0
      %2551 = vmatprep.mubr.f32.mxu0 0.0
      %2552 = vmatmul.mubr.f32.gmra.mrb[0].mxu0 %v2412
      %v2553 = vpop.f32.mrb[0].mxu0
      %v2554 = vadd.f32 %v1979, %v2553
      %v2555 = vpop.f32.mrb[0].mxu0
      %2556 = vmatprep.mubr.f32.mxu0 0.0
      %2557 = vmatmul.mubr.f32.gmra.mrb[0].mxu0 %v2414
      %v2558 = vpop.f32.mrb[0].mxu0
      %v2559 = vadd.f32 %v1979, %v2558
      %v2560 = vpop.f32.mrb[0].mxu0
      %2561 = vmatprep.mubr.f32.mxu0 0.0
      %2562 = vmatmul.mubr.f32.gmra.mrb[0].mxu0 %v2416
      %v2563 = vpop.f32.mrb[0].mxu0
      %v2564 = vadd.f32 %v1979, %v2563
      %v2565 = vpop.f32.mrb[0].mxu0
      %2566 = vmatprep.mubr.f32.mxu0 0.0
      %2567 = vmatmul.mubr.f32.gmra.mrb[0].mxu0 %v2418
      %v2568 = vpop.f32.mrb[0].mxu0
      %v2569 = vadd.f32 %v1979, %v2568
      %v2570 = vpop.f32.mrb[0].mxu0
      %2571 = vmatprep.mubr.f32.mxu0 0.0
      %2572 = vmatmul.mubr.f32.gmra.mrb[0].mxu0 %v2420
      %v2573 = vpop.f32.mrb[0].mxu0
      %v2574 = vadd.f32 %v1979, %v2573
      %v2575 = vpop.f32.mrb[0].mxu0
      %2576 = vmatprep.mubr.f32.mxu0 0.0
      %2577 = vmatmul.mubr.f32.gmra.mrb[0].mxu0 %v2422
      %v2578 = vpop.f32.mrb[0].mxu0
      %v2579 = vadd.f32 %v1979, %v2578
      %v2580 = vpop.f32.mrb[0].mxu0
      %2581 = vmatprep.mubr.f32.mxu0 0.0
      %2582 = vmatmul.mubr.f32.gmra.mrb[0].mxu0 %v2424
      %v2583 = vpop.f32.mrb[0].mxu0
      %v2584 = vadd.f32 %v1979, %v2583
      %v2585 = vpop.f32.mrb[0].mxu0
      %2586 = vmatprep.mubr.f32.mxu0 0.0
      %2587 = vmatmul.mubr.f32.gmra.mrb[0].mxu0 %v2426
      %v2588 = vpop.f32.mrb[0].mxu0
      %v2589 = vadd.f32 %v1979, %v2588
      %v2590 = vpop.f32.mrb[0].mxu0
      %2591 = vmatprep.mubr.f32.mxu0 0.0
      %2592 = vmatmul.mubr.f32.gmra.mrb[0].mxu0 %v2428
      %v2593 = vpop.f32.mrb[0].mxu0
      %v2594 = vadd.f32 %v1979, %v2593
      %v2595 = vpop.f32.mrb[0].mxu0
      %2596 = vmatprep.mubr.f32.mxu0 0.0
      %2597 = vmatmul.mubr.f32.gmra.mrb[0].mxu0 %v2430
      %v2598 = vpop.f32.mrb[0].mxu0
      %v2599 = vadd.f32 %v1979, %v2598
      %v2600 = vpop.f32.mrb[0].mxu0
      %2601 = vmatprep.mubr.f32.mxu0 0.0
      %2602 = vmatmul.mubr.f32.gmra.mrb[0].mxu0 %v2432
      %v2603 = vpop.f32.mrb[0].mxu0
      %v2604 = vadd.f32 %v1979, %v2603
      %v2605 = vpop.f32.mrb[0].mxu0
      %2606 = vmatprep.mubr.f32.mxu0 0.0
      %2607 = vmatmul.mubr.f32.gmra.mrb[0].mxu0 %v2434
      %v2608 = vpop.f32.mrb[0].mxu0
      %v2609 = vadd.f32 %v1979, %v2608
      %v2610 = vpop.f32.mrb[0].mxu0
      %2611 = vmatprep.mubr.f32.mxu0 0.0
      %2612 = vmatmul.mubr.f32.gmra.mrb[0].mxu0 %v2436
      %v2613 = vpop.f32.mrb[0].mxu0
      %v2614 = vadd.f32 %v1979, %v2613
      %v2615 = vpop.f32.mrb[0].mxu0
      %2616 = vmatprep.mubr.f32.mxu0 0.0
      %2617 = vmatmul.mubr.f32.gmra.mrb[0].mxu0 %v2438
      %v2618 = vpop.f32.mrb[0].mxu0
      %v2619 = vadd.f32 %v1979, %v2618
      %v2620 = vpop.f32.mrb[0].mxu0
      %2621 = vmatprep.mubr.f32.mxu0 0.0
      %2622 = vmatmul.mubr.f32.gmra.mrb[0].mxu0 %v2440
      %v2623 = vpop.f32.mrb[0].mxu0
      %v2624 = vadd.f32 %v1979, %v2623
      %v2625 = vpop.f32.mrb[0].mxu0
      %2626 = vmatprep.mubr.f32.mxu0 0.0
      %2627 = vmatmul.mubr.f32.gmra.mrb[0].mxu0 %v2442
      %v2628 = vpop.f32.mrb[0].mxu0
      %v2629 = vadd.f32 %v1979, %v2628
      %v2630 = vpop.f32.mrb[0].mxu0
      %2631 = vmatprep.mubr.f32.mxu0 0.0
      %2632 = vmatmul.mubr.f32.gmra.mrb[0].mxu0 %v2444
      %v2633 = vpop.f32.mrb[0].mxu0
      %v2634 = vadd.f32 %v1979, %v2633
      %v2635 = vpop.f32.mrb[0].mxu0
      %2636 = vmatprep.mubr.f32.mxu0 0.0
      %2637 = vmatmul.mubr.f32.gmra.mrb[0].mxu0 %v2446
      %v2638 = vpop.f32.mrb[0].mxu0
      %v2639 = vadd.f32 %v1979, %v2638
      %v2640 = vpop.f32.mrb[0].mxu0
      %2641 = vdwg.mxu0
      %v2642 = vld [vmem:[%s3] sm:$0x1]
      %vm2643 = vcmp.ge.f32.partialorder %v2519, 0.0
      %vm2644 = vcmp.ge.f32.partialorder %v2524, 0.0
      %vm2645 = vcmp.ge.f32.partialorder %v2529, 0.0
      %vm2646 = vcmp.ge.f32.partialorder %v2534, 0.0
      %vm2647 = vcmp.ge.f32.partialorder %v2539, 0.0
      %vm2648 = vcmp.ge.f32.partialorder %v2544, 0.0
      %vm2649 = vcmp.ge.f32.partialorder %v2549, 0.0
      %vm2650 = vcmp.ge.f32.partialorder %v2554, 0.0
      %vm2651 = vcmp.ge.f32.partialorder %v2559, 0.0
      %vm2652 = vcmp.ge.f32.partialorder %v2564, 0.0
      %vm2653 = vcmp.ge.f32.partialorder %v2569, 0.0
      %vm2654 = vcmp.ge.f32.partialorder %v2574, 0.0
      %vm2655 = vcmp.ge.f32.partialorder %v2579, 0.0
      %vm2656 = vcmp.ge.f32.partialorder %v2584, 0.0
      %vm2657 = vcmp.ge.f32.partialorder %v2589, 0.0
      %vm2658 = vcmp.ge.f32.partialorder %v2594, 0.0
      %vm2659 = vcmp.ge.f32.partialorder %v2599, 0.0
      %vm2660 = vcmp.ge.f32.partialorder %v2604, 0.0
      %vm2661 = vcmp.ge.f32.partialorder %v2609, 0.0
      %vm2662 = vcmp.ge.f32.partialorder %v2614, 0.0
      %vm2663 = vcmp.ge.f32.partialorder %v2619, 0.0
      %vm2664 = vcmp.ge.f32.partialorder %v2624, 0.0
      %vm2665 = vcmp.ge.f32.partialorder %v2629, 0.0
      %vm2666 = vcmp.ge.f32.partialorder %v2634, 0.0
      %vm2667 = vcmp.ge.f32.partialorder %v2639, 0.0
      %v2669 = vlaneseq
      %v2670 = vshrl.u32 %v2669, 7
      %v2671 = vsub.s32 0, %v2670
      %v2672 = vrot.slane %v2642, %v2671
      %v2674 = vmul.f32 %v2519, %v2672
      %v2675 = vmul.f32 %v2524, %v2672
      %v2676 = vmul.f32 %v2529, %v2672
      %v2677 = vmul.f32 %v2534, %v2672
      %v2678 = vmul.f32 %v2539, %v2672
      %v2679 = vmul.f32 %v2544, %v2672
      %v2680 = vmul.f32 %v2549, %v2672
      %v2681 = vmul.f32 %v2554, %v2672
      %v2682 = vmul.f32 %v2559, %v2672
      %v2683 = vmul.f32 %v2564, %v2672
      %v2684 = vmul.f32 %v2569, %v2672
      %v2685 = vmul.f32 %v2574, %v2672
      %v2686 = vmul.f32 %v2579, %v2672
      %v2687 = vmul.f32 %v2584, %v2672
      %v2688 = vmul.f32 %v2589, %v2672
      %v2689 = vmul.f32 %v2594, %v2672
      %v2690 = vmul.f32 %v2599, %v2672
      %v2691 = vmul.f32 %v2604, %v2672
      %v2692 = vmul.f32 %v2609, %v2672
      %v2693 = vmul.f32 %v2614, %v2672
      %v2694 = vmul.f32 %v2619, %v2672
      %v2695 = vmul.f32 %v2624, %v2672
      %v2696 = vmul.f32 %v2629, %v2672
      %v2697 = vmul.f32 %v2634, %v2672
      %v2698 = vmul.f32 %v2639, %v2672
      %v2699 = vsel %vm2643, %v2519, %v2674
      %v2700 = vsel %vm2644, %v2524, %v2675
      %v2701 = vsel %vm2645, %v2529, %v2676
      %v2702 = vsel %vm2646, %v2534, %v2677
      %v2703 = vsel %vm2647, %v2539, %v2678
      %v2704 = vsel %vm2648, %v2544, %v2679
      %v2705 = vsel %vm2649, %v2549, %v2680
      %v2706 = vsel %vm2650, %v2554, %v2681
      %v2707 = vsel %vm2651, %v2559, %v2682
      %v2708 = vsel %vm2652, %v2564, %v2683
      %v2709 = vsel %vm2653, %v2569, %v2684
      %v2710 = vsel %vm2654, %v2574, %v2685
      %v2711 = vsel %vm2655, %v2579, %v2686
      %v2712 = vsel %vm2656, %v2584, %v2687
      %v2713 = vsel %vm2657, %v2589, %v2688
      %v2714 = vsel %vm2658, %v2594, %v2689
      %v2715 = vsel %vm2659, %v2599, %v2690
      %v2716 = vsel %vm2660, %v2604, %v2691
      %v2717 = vsel %vm2661, %v2609, %v2692
      %v2718 = vsel %vm2662, %v2614, %v2693
      %v2719 = vsel %vm2663, %v2619, %v2694
      %v2720 = vsel %vm2664, %v2624, %v2695
      %v2721 = vsel %vm2665, %v2629, %v2696
      %v2722 = vsel %vm2666, %v2634, %v2697
      %v2723 = vsel %vm2667, %v2639, %v2698
      %v2749 = vcombine.high %v2699, %v2699
      %v2751 = vunpack.c.l.s4 1983009808
      %v2752 = vunpack.c.0.s8 %v2751
      %v2753 = vlaneseq
      %v2754 = vshrl.u32 %v2753, 7
      %v2755 = vsub.s32 %v2752, %v2754
      %v2756 = vrot.slane %v2699, %v2755
      %v2758 = vunpack.c.l.s4 1983009808
      %v2759 = vunpack.c.0.s8 %v2758
      %v2760 = vlaneseq
      %v2761 = vshrl.u32 %v2760, 7
      %v2762 = vsub.s32 %v2759, %v2761
      %v2763 = vrot.slane %v2749, %v2762
      %v2764 = vcombine.high %v2756, %v2756
      %v2765 = vcombine.high %v2763, %v2763
      %v2766 = vcombine.high %v2700, %v2700
      %v2768 = vunpack.c.l.s4 1983009808
      %v2769 = vunpack.c.0.s8 %v2768
      %v2770 = vlaneseq
      %v2771 = vshrl.u32 %v2770, 7
      %v2772 = vsub.s32 %v2769, %v2771
      %v2773 = vrot.slane %v2700, %v2772
      %v2775 = vunpack.c.l.s4 1983009808
      %v2776 = vunpack.c.0.s8 %v2775
      %v2777 = vlaneseq
      %v2778 = vshrl.u32 %v2777, 7
      %v2779 = vsub.s32 %v2776, %v2778
      %v2780 = vrot.slane %v2766, %v2779
      %v2781 = vcombine.high %v2773, %v2773
      %v2782 = vcombine.high %v2780, %v2780
      %v2783 = vcombine.high %v2701, %v2701
      %v2785 = vunpack.c.l.s4 1983009808
      %v2786 = vunpack.c.0.s8 %v2785
      %v2787 = vlaneseq
      %v2788 = vshrl.u32 %v2787, 7
      %v2789 = vsub.s32 %v2786, %v2788
      %v2790 = vrot.slane %v2701, %v2789
      %v2792 = vunpack.c.l.s4 1983009808
      %v2793 = vunpack.c.0.s8 %v2792
      %v2794 = vlaneseq
      %v2795 = vshrl.u32 %v2794, 7
      %v2796 = vsub.s32 %v2793, %v2795
      %v2797 = vrot.slane %v2783, %v2796
      %v2798 = vcombine.high %v2790, %v2790
      %v2799 = vcombine.high %v2797, %v2797
      %v2800 = vcombine.high %v2702, %v2702
      %v2802 = vunpack.c.l.s4 1983009808
      %v2803 = vunpack.c.0.s8 %v2802
      %v2804 = vlaneseq
      %v2805 = vshrl.u32 %v2804, 7
      %v2806 = vsub.s32 %v2803, %v2805
      %v2807 = vrot.slane %v2702, %v2806
      %v2809 = vunpack.c.l.s4 1983009808
      %v2810 = vunpack.c.0.s8 %v2809
      %v2811 = vlaneseq
      %v2812 = vshrl.u32 %v2811, 7
      %v2813 = vsub.s32 %v2810, %v2812
      %v2814 = vrot.slane %v2800, %v2813
      %v2815 = vcombine.high %v2807, %v2807
      %v2816 = vcombine.high %v2814, %v2814
      %v2817 = vcombine.high %v2703, %v2703
      %v2819 = vunpack.c.l.s4 1983009808
      %v2820 = vunpack.c.0.s8 %v2819
      %v2821 = vlaneseq
      %v2822 = vshrl.u32 %v2821, 7
      %v2823 = vsub.s32 %v2820, %v2822
      %v2824 = vrot.slane %v2703, %v2823
      %v2826 = vunpack.c.l.s4 1983009808
      %v2827 = vunpack.c.0.s8 %v2826
      %v2828 = vlaneseq
      %v2829 = vshrl.u32 %v2828, 7
      %v2830 = vsub.s32 %v2827, %v2829
      %v2831 = vrot.slane %v2817, %v2830
      %v2832 = vcombine.high %v2824, %v2824
      %v2833 = vcombine.high %v2831, %v2831
      %v2834 = vcombine.high %v2704, %v2704
      %v2836 = vunpack.c.l.s4 1983009808
      %v2837 = vunpack.c.0.s8 %v2836
      %v2838 = vlaneseq
      %v2839 = vshrl.u32 %v2838, 7
      %v2840 = vsub.s32 %v2837, %v2839
      %v2841 = vrot.slane %v2704, %v2840
      %v2843 = vunpack.c.l.s4 1983009808
      %v2844 = vunpack.c.0.s8 %v2843
      %v2845 = vlaneseq
      %v2846 = vshrl.u32 %v2845, 7
      %v2847 = vsub.s32 %v2844, %v2846
      %v2848 = vrot.slane %v2834, %v2847
      %v2849 = vcombine.high %v2841, %v2841
      %v2850 = vcombine.high %v2848, %v2848
      %v2851 = vcombine.high %v2705, %v2705
      %v2853 = vunpack.c.l.s4 1983009808
      %v2854 = vunpack.c.0.s8 %v2853
      %v2855 = vlaneseq
      %v2856 = vshrl.u32 %v2855, 7
      %v2857 = vsub.s32 %v2854, %v2856
      %v2858 = vrot.slane %v2705, %v2857
      %v2860 = vunpack.c.l.s4 1983009808
      %v2861 = vunpack.c.0.s8 %v2860
      %v2862 = vlaneseq
      %v2863 = vshrl.u32 %v2862, 7
      %v2864 = vsub.s32 %v2861, %v2863
      %v2865 = vrot.slane %v2851, %v2864
      %v2866 = vcombine.high %v2858, %v2858
      %v2867 = vcombine.high %v2865, %v2865
      %v2868 = vcombine.high %v2706, %v2706
      %v2870 = vunpack.c.l.s4 1983009808
      %v2871 = vunpack.c.0.s8 %v2870
      %v2872 = vlaneseq
      %v2873 = vshrl.u32 %v2872, 7
      %v2874 = vsub.s32 %v2871, %v2873
      %v2875 = vrot.slane %v2706, %v2874
      %v2877 = vunpack.c.l.s4 1983009808
      %v2878 = vunpack.c.0.s8 %v2877
      %v2879 = vlaneseq
      %v2880 = vshrl.u32 %v2879, 7
      %v2881 = vsub.s32 %v2878, %v2880
      %v2882 = vrot.slane %v2868, %v2881
      %v2883 = vcombine.high %v2875, %v2875
      %v2884 = vcombine.high %v2882, %v2882
      %v2885 = vcombine.high %v2707, %v2707
      %v2887 = vunpack.c.l.s4 1983009808
      %v2888 = vunpack.c.0.s8 %v2887
      %v2889 = vlaneseq
      %v2890 = vshrl.u32 %v2889, 7
      %v2891 = vsub.s32 %v2888, %v2890
      %v2892 = vrot.slane %v2707, %v2891
      %v2894 = vunpack.c.l.s4 1983009808
      %v2895 = vunpack.c.0.s8 %v2894
      %v2896 = vlaneseq
      %v2897 = vshrl.u32 %v2896, 7
      %v2898 = vsub.s32 %v2895, %v2897
      %v2899 = vrot.slane %v2885, %v2898
      %v2900 = vcombine.high %v2892, %v2892
      %v2901 = vcombine.high %v2899, %v2899
      %v2902 = vcombine.high %v2708, %v2708
      %v2904 = vunpack.c.l.s4 1983009808
      %v2905 = vunpack.c.0.s8 %v2904
      %v2906 = vlaneseq
      %v2907 = vshrl.u32 %v2906, 7
      %v2908 = vsub.s32 %v2905, %v2907
      %v2909 = vrot.slane %v2708, %v2908
      %v2911 = vunpack.c.l.s4 1983009808
      %v2912 = vunpack.c.0.s8 %v2911
      %v2913 = vlaneseq
      %v2914 = vshrl.u32 %v2913, 7
      %v2915 = vsub.s32 %v2912, %v2914
      %v2916 = vrot.slane %v2902, %v2915
      %v2917 = vcombine.high %v2909, %v2909
      %v2918 = vcombine.high %v2916, %v2916
      %v2919 = vcombine.high %v2709, %v2709
      %v2921 = vunpack.c.l.s4 1983009808
      %v2922 = vunpack.c.0.s8 %v2921
      %v2923 = vlaneseq
      %v2924 = vshrl.u32 %v2923, 7
      %v2925 = vsub.s32 %v2922, %v2924
      %v2926 = vrot.slane %v2709, %v2925
      %v2928 = vunpack.c.l.s4 1983009808
      %v2929 = vunpack.c.0.s8 %v2928
      %v2930 = vlaneseq
      %v2931 = vshrl.u32 %v2930, 7
      %v2932 = vsub.s32 %v2929, %v2931
      %v2933 = vrot.slane %v2919, %v2932
      %v2934 = vcombine.high %v2926, %v2926
      %v2935 = vcombine.high %v2933, %v2933
      %v2936 = vcombine.high %v2710, %v2710
      %v2938 = vunpack.c.l.s4 1983009808
      %v2939 = vunpack.c.0.s8 %v2938
      %v2940 = vlaneseq
      %v2941 = vshrl.u32 %v2940, 7
      %v2942 = vsub.s32 %v2939, %v2941
      %v2943 = vrot.slane %v2710, %v2942
      %v2945 = vunpack.c.l.s4 1983009808
      %v2946 = vunpack.c.0.s8 %v2945
      %v2947 = vlaneseq
      %v2948 = vshrl.u32 %v2947, 7
      %v2949 = vsub.s32 %v2946, %v2948
      %v2950 = vrot.slane %v2936, %v2949
      %v2951 = vcombine.high %v2943, %v2943
      %v2952 = vcombine.high %v2950, %v2950
      %v2953 = vcombine.high %v2711, %v2711
      %v2955 = vunpack.c.l.s4 1983009808
      %v2956 = vunpack.c.0.s8 %v2955
      %v2957 = vlaneseq
      %v2958 = vshrl.u32 %v2957, 7
      %v2959 = vsub.s32 %v2956, %v2958
      %v2960 = vrot.slane %v2711, %v2959
      %v2962 = vunpack.c.l.s4 1983009808
      %v2963 = vunpack.c.0.s8 %v2962
      %v2964 = vlaneseq
      %v2965 = vshrl.u32 %v2964, 7
      %v2966 = vsub.s32 %v2963, %v2965
      %v2967 = vrot.slane %v2953, %v2966
      %v2968 = vcombine.high %v2960, %v2960
      %v2969 = vcombine.high %v2967, %v2967
      %v2970 = vcombine.high %v2712, %v2712
      %v2972 = vunpack.c.l.s4 1983009808
      %v2973 = vunpack.c.0.s8 %v2972
      %v2974 = vlaneseq
      %v2975 = vshrl.u32 %v2974, 7
      %v2976 = vsub.s32 %v2973, %v2975
      %v2977 = vrot.slane %v2712, %v2976
      %v2979 = vunpack.c.l.s4 1983009808
      %v2980 = vunpack.c.0.s8 %v2979
      %v2981 = vlaneseq
      %v2982 = vshrl.u32 %v2981, 7
      %v2983 = vsub.s32 %v2980, %v2982
      %v2984 = vrot.slane %v2970, %v2983
      %v2985 = vcombine.high %v2977, %v2977
      %v2986 = vcombine.high %v2984, %v2984
      %v2987 = vcombine.high %v2713, %v2713
      %v2989 = vunpack.c.l.s4 1983009808
      %v2990 = vunpack.c.0.s8 %v2989
      %v2991 = vlaneseq
      %v2992 = vshrl.u32 %v2991, 7
      %v2993 = vsub.s32 %v2990, %v2992
      %v2994 = vrot.slane %v2713, %v2993
      %v2996 = vunpack.c.l.s4 1983009808
      %v2997 = vunpack.c.0.s8 %v2996
      %v2998 = vlaneseq
      %v2999 = vshrl.u32 %v2998, 7
      %v3000 = vsub.s32 %v2997, %v2999
      %v3001 = vrot.slane %v2987, %v3000
      %v3002 = vcombine.high %v2994, %v2994
      %v3003 = vcombine.high %v3001, %v3001
      %v3004 = vcombine.high %v2714, %v2714
      %v3006 = vunpack.c.l.s4 1983009808
      %v3007 = vunpack.c.0.s8 %v3006
      %v3008 = vlaneseq
      %v3009 = vshrl.u32 %v3008, 7
      %v3010 = vsub.s32 %v3007, %v3009
      %v3011 = vrot.slane %v2714, %v3010
      %v3013 = vunpack.c.l.s4 1983009808
      %v3014 = vunpack.c.0.s8 %v3013
      %v3015 = vlaneseq
      %v3016 = vshrl.u32 %v3015, 7
      %v3017 = vsub.s32 %v3014, %v3016
      %v3018 = vrot.slane %v3004, %v3017
      %v3019 = vcombine.high %v3011, %v3011
      %v3020 = vcombine.high %v3018, %v3018
      %v3021 = vcombine.high %v2715, %v2715
      %v3023 = vunpack.c.l.s4 1983009808
      %v3024 = vunpack.c.0.s8 %v3023
      %v3025 = vlaneseq
      %v3026 = vshrl.u32 %v3025, 7
      %v3027 = vsub.s32 %v3024, %v3026
      %v3028 = vrot.slane %v2715, %v3027
      %v3030 = vunpack.c.l.s4 1983009808
      %v3031 = vunpack.c.0.s8 %v3030
      %v3032 = vlaneseq
      %v3033 = vshrl.u32 %v3032, 7
      %v3034 = vsub.s32 %v3031, %v3033
      %v3035 = vrot.slane %v3021, %v3034
      %v3036 = vcombine.high %v3028, %v3028
      %v3037 = vcombine.high %v3035, %v3035
      %v3038 = vcombine.high %v2716, %v2716
      %v3040 = vunpack.c.l.s4 1983009808
      %v3041 = vunpack.c.0.s8 %v3040
      %v3042 = vlaneseq
      %v3043 = vshrl.u32 %v3042, 7
      %v3044 = vsub.s32 %v3041, %v3043
      %v3045 = vrot.slane %v2716, %v3044
      %v3047 = vunpack.c.l.s4 1983009808
      %v3048 = vunpack.c.0.s8 %v3047
      %v3049 = vlaneseq
      %v3050 = vshrl.u32 %v3049, 7
      %v3051 = vsub.s32 %v3048, %v3050
      %v3052 = vrot.slane %v3038, %v3051
      %v3053 = vcombine.high %v3045, %v3045
      %v3054 = vcombine.high %v3052, %v3052
      %v3055 = vcombine.high %v2717, %v2717
      %v3057 = vunpack.c.l.s4 1983009808
      %v3058 = vunpack.c.0.s8 %v3057
      %v3059 = vlaneseq
      %v3060 = vshrl.u32 %v3059, 7
      %v3061 = vsub.s32 %v3058, %v3060
      %v3062 = vrot.slane %v2717, %v3061
      %v3064 = vunpack.c.l.s4 1983009808
      %v3065 = vunpack.c.0.s8 %v3064
      %v3066 = vlaneseq
      %v3067 = vshrl.u32 %v3066, 7
      %v3068 = vsub.s32 %v3065, %v3067
      %v3069 = vrot.slane %v3055, %v3068
      %v3070 = vcombine.high %v3062, %v3062
      %v3071 = vcombine.high %v3069, %v3069
      %v3072 = vcombine.high %v2718, %v2718
      %v3074 = vunpack.c.l.s4 1983009808
      %v3075 = vunpack.c.0.s8 %v3074
      %v3076 = vlaneseq
      %v3077 = vshrl.u32 %v3076, 7
      %v3078 = vsub.s32 %v3075, %v3077
      %v3079 = vrot.slane %v2718, %v3078
      %v3081 = vunpack.c.l.s4 1983009808
      %v3082 = vunpack.c.0.s8 %v3081
      %v3083 = vlaneseq
      %v3084 = vshrl.u32 %v3083, 7
      %v3085 = vsub.s32 %v3082, %v3084
      %v3086 = vrot.slane %v3072, %v3085
      %v3087 = vcombine.high %v3079, %v3079
      %v3088 = vcombine.high %v3086, %v3086
      %v3089 = vcombine.high %v2719, %v2719
      %v3091 = vunpack.c.l.s4 1983009808
      %v3092 = vunpack.c.0.s8 %v3091
      %v3093 = vlaneseq
      %v3094 = vshrl.u32 %v3093, 7
      %v3095 = vsub.s32 %v3092, %v3094
      %v3096 = vrot.slane %v2719, %v3095
      %v3098 = vunpack.c.l.s4 1983009808
      %v3099 = vunpack.c.0.s8 %v3098
      %v3100 = vlaneseq
      %v3101 = vshrl.u32 %v3100, 7
      %v3102 = vsub.s32 %v3099, %v3101
      %v3103 = vrot.slane %v3089, %v3102
      %v3104 = vcombine.high %v3096, %v3096
      %v3105 = vcombine.high %v3103, %v3103
      %v3106 = vcombine.high %v2720, %v2720
      %v3108 = vunpack.c.l.s4 1983009808
      %v3109 = vunpack.c.0.s8 %v3108
      %v3110 = vlaneseq
      %v3111 = vshrl.u32 %v3110, 7
      %v3112 = vsub.s32 %v3109, %v3111
      %v3113 = vrot.slane %v2720, %v3112
      %v3115 = vunpack.c.l.s4 1983009808
      %v3116 = vunpack.c.0.s8 %v3115
      %v3117 = vlaneseq
      %v3118 = vshrl.u32 %v3117, 7
      %v3119 = vsub.s32 %v3116, %v3118
      %v3120 = vrot.slane %v3106, %v3119
      %v3121 = vcombine.high %v3113, %v3113
      %v3122 = vcombine.high %v3120, %v3120
      %v3123 = vcombine.high %v2721, %v2721
      %v3125 = vunpack.c.l.s4 1983009808
      %v3126 = vunpack.c.0.s8 %v3125
      %v3127 = vlaneseq
      %v3128 = vshrl.u32 %v3127, 7
      %v3129 = vsub.s32 %v3126, %v3128
      %v3130 = vrot.slane %v2721, %v3129
      %v3132 = vunpack.c.l.s4 1983009808
      %v3133 = vunpack.c.0.s8 %v3132
      %v3134 = vlaneseq
      %v3135 = vshrl.u32 %v3134, 7
      %v3136 = vsub.s32 %v3133, %v3135
      %v3137 = vrot.slane %v3123, %v3136
      %v3138 = vcombine.high %v3130, %v3130
      %v3139 = vcombine.high %v3137, %v3137
      %v3140 = vcombine.high %v2722, %v2722
      %v3142 = vunpack.c.l.s4 1983009808
      %v3143 = vunpack.c.0.s8 %v3142
      %v3144 = vlaneseq
      %v3145 = vshrl.u32 %v3144, 7
      %v3146 = vsub.s32 %v3143, %v3145
      %v3147 = vrot.slane %v2722, %v3146
      %v3149 = vunpack.c.l.s4 1983009808
      %v3150 = vunpack.c.0.s8 %v3149
      %v3151 = vlaneseq
      %v3152 = vshrl.u32 %v3151, 7
      %v3153 = vsub.s32 %v3150, %v3152
      %v3154 = vrot.slane %v3140, %v3153
      %v3155 = vcombine.high %v3147, %v3147
      %v3156 = vcombine.high %v3154, %v3154
      %v3158 = vunpack.c.l.s4 1983009808
      %v3159 = vunpack.c.0.s8 %v3158
      %v3160 = vlaneseq
      %v3161 = vshrl.u32 %v3160, 7
      %v3162 = vsub.s32 %v3159, %v3161
      %v3163 = vrot.slane %v2723, %v3162
      %v3164 = vcombine.high %v3163, %v3163
      %v3263 = vmax.f32 %v2756, %v2782
      %v3264 = vmax.f32 %v2764, %v2790
      %v3265 = vmax.f32 %v2763, %v2798
      %v3266 = vmax.f32 %v2765, %v2797
      %v3267 = vmax.f32 %v2773, %v2799
      %v3268 = vmax.f32 %v2781, %v2807
      %v3269 = vmax.f32 %v2780, %v2815
      %v3270 = vmax.f32 %v2814, %v2849
      %v3271 = vmax.f32 %v2816, %v2848
      %v3272 = vmax.f32 %v2824, %v2850
      %v3273 = vmax.f32 %v2832, %v2858
      %v3274 = vmax.f32 %v2831, %v2866
      %v3275 = vmax.f32 %v2833, %v2865
      %v3276 = vmax.f32 %v2841, %v2867
      %v3277 = vmax.f32 %v2875, %v2901
      %v3278 = vmax.f32 %v2883, %v2909
      %v3279 = vmax.f32 %v2882, %v2917
      %v3280 = vmax.f32 %v2884, %v2916
      %v3281 = vmax.f32 %v2892, %v2918
      %v3282 = vmax.f32 %v2900, %v2926
      %v3283 = vmax.f32 %v2899, %v2934
      %v3284 = vmax.f32 %v2933, %v2968
      %v3285 = vmax.f32 %v2935, %v2967
      %v3286 = vmax.f32 %v2943, %v2969
      %v3287 = vmax.f32 %v2951, %v2977
      %v3288 = vmax.f32 %v2950, %v2985
      %v3289 = vmax.f32 %v2952, %v2984
      %v3290 = vmax.f32 %v2960, %v2986
      %v3291 = vmax.f32 %v2994, %v3020
      %v3292 = vmax.f32 %v3002, %v3028
      %v3293 = vmax.f32 %v3001, %v3036
      %v3294 = vmax.f32 %v3003, %v3035
      %v3295 = vmax.f32 %v3011, %v3037
      %v3296 = vmax.f32 %v3019, %v3045
      %v3297 = vmax.f32 %v3018, %v3053
      %v3298 = vmax.f32 %v3052, %v3087
      %v3299 = vmax.f32 %v3054, %v3086
      %v3300 = vmax.f32 %v3062, %v3088
      %v3301 = vmax.f32 %v3070, %v3096
      %v3302 = vmax.f32 %v3069, %v3104
      %v3303 = vmax.f32 %v3071, %v3103
      %v3304 = vmax.f32 %v3079, %v3105
      %v3305 = vmax.f32 %v3113, %v3139
      %v3306 = vmax.f32 %v3121, %v3147
      %v3307 = vmax.f32 %v3120, %v3155
      %v3308 = vmax.f32 %v3122, %v3154
      %v3309 = vmax.f32 %v3130, %v3156
      %v3310 = vmax.f32 %v3138, %v3163
      %v3311 = vmax.f32 %v3137, %v3164
      %v3319 = vrot.slane %v3263, 7
      %v3320 = vrot.slane %v3319, 2
      %v3321 = vrot.slane %v3270, 7
      %v3322 = vrot.slane %v3321, 2
      %v3323 = vrot.slane %v3277, 7
      %v3324 = vrot.slane %v3323, 2
      %v3325 = vrot.slane %v3284, 7
      %v3326 = vrot.slane %v3325, 2
      %v3327 = vrot.slane %v3291, 7
      %v3328 = vrot.slane %v3327, 2
      %v3329 = vrot.slane %v3298, 7
      %v3330 = vrot.slane %v3329, 2
      %v3331 = vrot.slane %v3305, 7
      %v3332 = vrot.slane %v3331, 2
      %v3340 = vmax.f32 %v3263, %v3320
      %v3341 = vmax.f32 %v3270, %v3322
      %v3342 = vmax.f32 %v3277, %v3324
      %v3343 = vmax.f32 %v3284, %v3326
      %v3344 = vmax.f32 %v3291, %v3328
      %v3345 = vmax.f32 %v3298, %v3330
      %v3346 = vmax.f32 %v3305, %v3332
      %v3354 = vrot.slane %v3264, 7
      %v3355 = vrot.slane %v3354, 2
      %v3356 = vrot.slane %v3271, 7
      %v3357 = vrot.slane %v3356, 2
      %v3358 = vrot.slane %v3278, 7
      %v3359 = vrot.slane %v3358, 2
      %v3360 = vrot.slane %v3285, 7
      %v3361 = vrot.slane %v3360, 2
      %v3362 = vrot.slane %v3292, 7
      %v3363 = vrot.slane %v3362, 2
      %v3364 = vrot.slane %v3299, 7
      %v3365 = vrot.slane %v3364, 2
      %v3366 = vrot.slane %v3306, 7
      %v3367 = vrot.slane %v3366, 2
      %v3375 = vmax.f32 %v3264, %v3355
      %v3376 = vmax.f32 %v3271, %v3357
      %v3377 = vmax.f32 %v3278, %v3359
      %v3378 = vmax.f32 %v3285, %v3361
      %v3379 = vmax.f32 %v3292, %v3363
      %v3380 = vmax.f32 %v3299, %v3365
      %v3381 = vmax.f32 %v3306, %v3367
      %v3389 = vrot.slane %v3265, 7
      %v3390 = vrot.slane %v3389, 2
      %v3391 = vrot.slane %v3272, 7
      %v3392 = vrot.slane %v3391, 2
      %v3393 = vrot.slane %v3279, 7
      %v3394 = vrot.slane %v3393, 2
      %v3395 = vrot.slane %v3286, 7
      %v3396 = vrot.slane %v3395, 2
      %v3397 = vrot.slane %v3293, 7
      %v3398 = vrot.slane %v3397, 2
      %v3399 = vrot.slane %v3300, 7
      %v3400 = vrot.slane %v3399, 2
      %v3401 = vrot.slane %v3307, 7
      %v3402 = vrot.slane %v3401, 2
      %v3410 = vmax.f32 %v3265, %v3390
      %v3411 = vmax.f32 %v3272, %v3392
      %v3412 = vmax.f32 %v3279, %v3394
      %v3413 = vmax.f32 %v3286, %v3396
      %v3414 = vmax.f32 %v3293, %v3398
      %v3415 = vmax.f32 %v3300, %v3400
      %v3416 = vmax.f32 %v3307, %v3402
      %v3424 = vrot.slane %v3266, 7
      %v3425 = vrot.slane %v3424, 2
      %v3426 = vrot.slane %v3273, 7
      %v3427 = vrot.slane %v3426, 2
      %v3428 = vrot.slane %v3280, 7
      %v3429 = vrot.slane %v3428, 2
      %v3430 = vrot.slane %v3287, 7
      %v3431 = vrot.slane %v3430, 2
      %v3432 = vrot.slane %v3294, 7
      %v3433 = vrot.slane %v3432, 2
      %v3434 = vrot.slane %v3301, 7
      %v3435 = vrot.slane %v3434, 2
      %v3436 = vrot.slane %v3308, 7
      %v3437 = vrot.slane %v3436, 2
      %v3445 = vmax.f32 %v3266, %v3425
      %v3446 = vmax.f32 %v3273, %v3427
      %v3447 = vmax.f32 %v3280, %v3429
      %v3448 = vmax.f32 %v3287, %v3431
      %v3449 = vmax.f32 %v3294, %v3433
      %v3450 = vmax.f32 %v3301, %v3435
      %v3451 = vmax.f32 %v3308, %v3437
      %v3459 = vrot.slane %v3267, 7
      %v3460 = vrot.slane %v3459, 2
      %v3461 = vrot.slane %v3274, 7
      %v3462 = vrot.slane %v3461, 2
      %v3463 = vrot.slane %v3281, 7
      %v3464 = vrot.slane %v3463, 2
      %v3465 = vrot.slane %v3288, 7
      %v3466 = vrot.slane %v3465, 2
      %v3467 = vrot.slane %v3295, 7
      %v3468 = vrot.slane %v3467, 2
      %v3469 = vrot.slane %v3302, 7
      %v3470 = vrot.slane %v3469, 2
      %v3471 = vrot.slane %v3309, 7
      %v3472 = vrot.slane %v3471, 2
      %v3480 = vmax.f32 %v3267, %v3460
      %v3481 = vmax.f32 %v3274, %v3462
      %v3482 = vmax.f32 %v3281, %v3464
      %v3483 = vmax.f32 %v3288, %v3466
      %v3484 = vmax.f32 %v3295, %v3468
      %v3485 = vmax.f32 %v3302, %v3470
      %v3486 = vmax.f32 %v3309, %v3472
      %v3494 = vrot.slane %v3268, 7
      %v3495 = vrot.slane %v3494, 2
      %v3496 = vrot.slane %v3275, 7
      %v3497 = vrot.slane %v3496, 2
      %v3498 = vrot.slane %v3282, 7
      %v3499 = vrot.slane %v3498, 2
      %v3500 = vrot.slane %v3289, 7
      %v3501 = vrot.slane %v3500, 2
      %v3502 = vrot.slane %v3296, 7
      %v3503 = vrot.slane %v3502, 2
      %v3504 = vrot.slane %v3303, 7
      %v3505 = vrot.slane %v3504, 2
      %v3506 = vrot.slane %v3310, 7
      %v3507 = vrot.slane %v3506, 2
      %v3515 = vmax.f32 %v3268, %v3495
      %v3516 = vmax.f32 %v3275, %v3497
      %v3517 = vmax.f32 %v3282, %v3499
      %v3518 = vmax.f32 %v3289, %v3501
      %v3519 = vmax.f32 %v3296, %v3503
      %v3520 = vmax.f32 %v3303, %v3505
      %v3521 = vmax.f32 %v3310, %v3507
      %v3529 = vrot.slane %v3269, 7
      %v3530 = vrot.slane %v3529, 2
      %v3531 = vrot.slane %v3276, 7
      %v3532 = vrot.slane %v3531, 2
      %v3533 = vrot.slane %v3283, 7
      %v3534 = vrot.slane %v3533, 2
      %v3535 = vrot.slane %v3290, 7
      %v3536 = vrot.slane %v3535, 2
      %v3537 = vrot.slane %v3297, 7
      %v3538 = vrot.slane %v3537, 2
      %v3539 = vrot.slane %v3304, 7
      %v3540 = vrot.slane %v3539, 2
      %v3541 = vrot.slane %v3311, 7
      %v3542 = vrot.slane %v3541, 2
      %v3550 = vmax.f32 %v3269, %v3530
      %v3551 = vmax.f32 %v3276, %v3532
      %v3552 = vmax.f32 %v3283, %v3534
      %v3553 = vmax.f32 %v3290, %v3536
      %v3554 = vmax.f32 %v3297, %v3538
      %v3555 = vmax.f32 %v3304, %v3540
      %v3556 = vmax.f32 %v3311, %v3542
      %v3564 = vlaneseq
      %v3565 = vshrl.u32 %v3564, 7
      %v3566 = vsub.s32 0, %v3565
      %v3567 = vrot.slane %v3375, %v3566
      %v3568 = vlaneseq
      %v3569 = vshrl.u32 %v3568, 7
      %v3570 = vsub.s32 0, %v3569
      %v3571 = vrot.slane %v3376, %v3570
      %v3572 = vlaneseq
      %v3573 = vshrl.u32 %v3572, 7
      %v3574 = vsub.s32 0, %v3573
      %v3575 = vrot.slane %v3377, %v3574
      %v3576 = vlaneseq
      %v3577 = vshrl.u32 %v3576, 7
      %v3578 = vsub.s32 0, %v3577
      %v3579 = vrot.slane %v3378, %v3578
      %v3580 = vlaneseq
      %v3581 = vshrl.u32 %v3580, 7
      %v3582 = vsub.s32 0, %v3581
      %v3583 = vrot.slane %v3379, %v3582
      %v3584 = vlaneseq
      %v3585 = vshrl.u32 %v3584, 7
      %v3586 = vsub.s32 0, %v3585
      %v3587 = vrot.slane %v3380, %v3586
      %v3588 = vlaneseq
      %v3589 = vshrl.u32 %v3588, 7
      %v3590 = vsub.s32 0, %v3589
      %v3591 = vrot.slane %v3381, %v3590
      %v3606 = vlaneseq
      %v3607 = vshrl.u32 %v3606, 7
      %v3608 = vsub.s32 0, %v3607
      %v3609 = vrot.slane %v3410, %v3608
      %v3610 = vlaneseq
      %v3611 = vshrl.u32 %v3610, 7
      %v3612 = vsub.s32 0, %v3611
      %v3613 = vrot.slane %v3411, %v3612
      %v3614 = vlaneseq
      %v3615 = vshrl.u32 %v3614, 7
      %v3616 = vsub.s32 0, %v3615
      %v3617 = vrot.slane %v3412, %v3616
      %v3618 = vlaneseq
      %v3619 = vshrl.u32 %v3618, 7
      %v3620 = vsub.s32 0, %v3619
      %v3621 = vrot.slane %v3413, %v3620
      %v3622 = vlaneseq
      %v3623 = vshrl.u32 %v3622, 7
      %v3624 = vsub.s32 0, %v3623
      %v3625 = vrot.slane %v3414, %v3624
      %v3626 = vlaneseq
      %v3627 = vshrl.u32 %v3626, 7
      %v3628 = vsub.s32 0, %v3627
      %v3629 = vrot.slane %v3415, %v3628
      %v3630 = vlaneseq
      %v3631 = vshrl.u32 %v3630, 7
      %v3632 = vsub.s32 0, %v3631
      %v3633 = vrot.slane %v3416, %v3632
      %v3648 = vlaneseq
      %v3649 = vshrl.u32 %v3648, 7
      %v3650 = vsub.s32 0, %v3649
      %v3651 = vrot.slane %v3445, %v3650
      %v3652 = vlaneseq
      %v3653 = vshrl.u32 %v3652, 7
      %v3654 = vsub.s32 0, %v3653
      %v3655 = vrot.slane %v3446, %v3654
      %v3656 = vlaneseq
      %v3657 = vshrl.u32 %v3656, 7
      %v3658 = vsub.s32 0, %v3657
      %v3659 = vrot.slane %v3447, %v3658
      %v3660 = vlaneseq
      %v3661 = vshrl.u32 %v3660, 7
      %v3662 = vsub.s32 0, %v3661
      %v3663 = vrot.slane %v3448, %v3662
      %v3664 = vlaneseq
      %v3665 = vshrl.u32 %v3664, 7
      %v3666 = vsub.s32 0, %v3665
      %v3667 = vrot.slane %v3449, %v3666
      %v3668 = vlaneseq
      %v3669 = vshrl.u32 %v3668, 7
      %v3670 = vsub.s32 0, %v3669
      %v3671 = vrot.slane %v3450, %v3670
      %v3672 = vlaneseq
      %v3673 = vshrl.u32 %v3672, 7
      %v3674 = vsub.s32 0, %v3673
      %v3675 = vrot.slane %v3451, %v3674
      %v3690 = vlaneseq
      %v3691 = vshrl.u32 %v3690, 7
      %v3692 = vsub.s32 0, %v3691
      %v3693 = vrot.slane %v3480, %v3692
      %v3694 = vlaneseq
      %v3695 = vshrl.u32 %v3694, 7
      %v3696 = vsub.s32 0, %v3695
      %v3697 = vrot.slane %v3481, %v3696
      %v3698 = vlaneseq
      %v3699 = vshrl.u32 %v3698, 7
      %v3700 = vsub.s32 0, %v3699
      %v3701 = vrot.slane %v3482, %v3700
      %v3702 = vlaneseq
      %v3703 = vshrl.u32 %v3702, 7
      %v3704 = vsub.s32 0, %v3703
      %v3705 = vrot.slane %v3483, %v3704
      %v3706 = vlaneseq
      %v3707 = vshrl.u32 %v3706, 7
      %v3708 = vsub.s32 0, %v3707
      %v3709 = vrot.slane %v3484, %v3708
      %v3710 = vlaneseq
      %v3711 = vshrl.u32 %v3710, 7
      %v3712 = vsub.s32 0, %v3711
      %v3713 = vrot.slane %v3485, %v3712
      %v3714 = vlaneseq
      %v3715 = vshrl.u32 %v3714, 7
      %v3716 = vsub.s32 0, %v3715
      %v3717 = vrot.slane %v3486, %v3716
      %v3732 = vlaneseq
      %v3733 = vshrl.u32 %v3732, 7
      %v3734 = vsub.s32 0, %v3733
      %v3735 = vrot.slane %v3515, %v3734
      %v3736 = vlaneseq
      %v3737 = vshrl.u32 %v3736, 7
      %v3738 = vsub.s32 0, %v3737
      %v3739 = vrot.slane %v3516, %v3738
      %v3740 = vlaneseq
      %v3741 = vshrl.u32 %v3740, 7
      %v3742 = vsub.s32 0, %v3741
      %v3743 = vrot.slane %v3517, %v3742
      %v3744 = vlaneseq
      %v3745 = vshrl.u32 %v3744, 7
      %v3746 = vsub.s32 0, %v3745
      %v3747 = vrot.slane %v3518, %v3746
      %v3748 = vlaneseq
      %v3749 = vshrl.u32 %v3748, 7
      %v3750 = vsub.s32 0, %v3749
      %v3751 = vrot.slane %v3519, %v3750
      %v3752 = vlaneseq
      %v3753 = vshrl.u32 %v3752, 7
      %v3754 = vsub.s32 0, %v3753
      %v3755 = vrot.slane %v3520, %v3754
      %v3756 = vlaneseq
      %v3757 = vshrl.u32 %v3756, 7
      %v3758 = vsub.s32 0, %v3757
      %v3759 = vrot.slane %v3521, %v3758
      %v3774 = vlaneseq
      %v3775 = vshrl.u32 %v3774, 7
      %v3776 = vsub.s32 0, %v3775
      %v3777 = vrot.slane %v3550, %v3776
      %v3778 = vlaneseq
      %v3779 = vshrl.u32 %v3778, 7
      %v3780 = vsub.s32 0, %v3779
      %v3781 = vrot.slane %v3551, %v3780
      %v3782 = vlaneseq
      %v3783 = vshrl.u32 %v3782, 7
      %v3784 = vsub.s32 0, %v3783
      %v3785 = vrot.slane %v3552, %v3784
      %v3786 = vlaneseq
      %v3787 = vshrl.u32 %v3786, 7
      %v3788 = vsub.s32 0, %v3787
      %v3789 = vrot.slane %v3553, %v3788
      %v3790 = vlaneseq
      %v3791 = vshrl.u32 %v3790, 7
      %v3792 = vsub.s32 0, %v3791
      %v3793 = vrot.slane %v3554, %v3792
      %v3794 = vlaneseq
      %v3795 = vshrl.u32 %v3794, 7
      %v3796 = vsub.s32 0, %v3795
      %v3797 = vrot.slane %v3555, %v3796
      %v3798 = vlaneseq
      %v3799 = vshrl.u32 %v3798, 7
      %v3800 = vsub.s32 0, %v3799
      %v3801 = vrot.slane %v3556, %v3800
      %vm3809 = vcmask 1040384
      %v3810 = vsel %vm3809, %v3340, %v3567
      %v3811 = vsel %vm3809, %v3341, %v3571
      %v3812 = vsel %vm3809, %v3342, %v3575
      %v3813 = vsel %vm3809, %v3343, %v3579
      %v3814 = vsel %vm3809, %v3344, %v3583
      %v3815 = vsel %vm3809, %v3345, %v3587
      %v3816 = vsel %vm3809, %v3346, %v3591
      %vm3817 = vcmask 1041408
      %v3818 = vsel %vm3817, %v3810, %v3609
      %v3819 = vsel %vm3817, %v3811, %v3613
      %v3820 = vsel %vm3817, %v3812, %v3617
      %v3821 = vsel %vm3817, %v3813, %v3621
      %v3822 = vsel %vm3817, %v3814, %v3625
      %v3823 = vsel %vm3817, %v3815, %v3629
      %v3824 = vsel %vm3817, %v3816, %v3633
      %v3825 = vsel %vm2448, %v3818, %v3651
      %v3826 = vsel %vm2448, %v3819, %v3655
      %v3827 = vsel %vm2448, %v3820, %v3659
      %v3828 = vsel %vm2448, %v3821, %v3663
      %v3829 = vsel %vm2448, %v3822, %v3667
      %v3830 = vsel %vm2448, %v3823, %v3671
      %v3831 = vsel %vm2448, %v3824, %v3675
      %vm3832 = vcmask 1043456
      %v3833 = vsel %vm3832, %v3825, %v3693
      %v3834 = vsel %vm3832, %v3826, %v3697
      %v3835 = vsel %vm3832, %v3827, %v3701
      %v3836 = vsel %vm3832, %v3828, %v3705
      %v3837 = vsel %vm3832, %v3829, %v3709
      %v3838 = vsel %vm3832, %v3830, %v3713
      %v3839 = vsel %vm3832, %v3831, %v3717
      %vm3840 = vcmask 1044480
      %v3841 = vsel %vm3840, %v3833, %v3735
      %v3842 = vsel %vm3840, %v3834, %v3739
      %v3843 = vsel %vm3840, %v3835, %v3743
      %v3844 = vsel %vm3840, %v3836, %v3747
      %v3845 = vsel %vm3840, %v3837, %v3751
      %v3846 = vsel %vm3840, %v3838, %v3755
      %v3847 = vsel %vm3840, %v3839, %v3759
      %v3848 = vsel %vm601, %v3841, %v3777
      %v3849 = vsel %vm601, %v3842, %v3781
      %v3850 = vsel %vm601, %v3843, %v3785
      %v3851 = vsel %vm601, %v3844, %v3789
      %v3852 = vsel %vm601, %v3845, %v3793
      %v3853 = vsel %vm601, %v3846, %v3797
      %v3854 = vsel %vm601, %v3847, %v3801
      %v3860 = vrot.slane %v3848, 1
      %v3861 = vrot.slane %v3849, 1
      %v3862 = vrot.slane %v3850, 1
      %v3863 = vrot.slane %v3851, 1
      %v3864 = vrot.slane %v3852, 1
      %3865 = vrot.lane.b32.xlu0 %v3860, 10
      %v3866 = vpop.permute.xlu0 %3865
      %3867 = vrot.lane.b32.xlu0 %v3861, 10
      %v3868 = vpop.permute.xlu0 %3867
      %3869 = vrot.lane.b32.xlu0 %v3862, 10
      %v3870 = vpop.permute.xlu0 %3869
      %3871 = vrot.lane.b32.xlu0 %v3863, 10
      %v3872 = vpop.permute.xlu0 %3871
      %3873 = vrot.lane.b32.xlu0 %v3864, 10
      %v3874 = vpop.permute.xlu0 %3873
      %v3880 = vrot.slane %v3848, 2
      %v3881 = vrot.slane %v3849, 2
      %v3882 = vrot.slane %v3850, 2
      %v3883 = vrot.slane %v3851, 2
      %v3884 = vrot.slane %v3852, 2
      %3885 = vrot.lane.b32.xlu0 %v3880, 20
      %v3886 = vpop.permute.xlu0 %3885
      %3887 = vrot.lane.b32.xlu0 %v3881, 20
      %v3888 = vpop.permute.xlu0 %3887
      %3889 = vrot.lane.b32.xlu0 %v3882, 20
      %v3890 = vpop.permute.xlu0 %3889
      %3891 = vrot.lane.b32.xlu0 %v3883, 20
      %v3892 = vpop.permute.xlu0 %3891
      %3893 = vrot.lane.b32.xlu0 %v3884, 20
      %v3894 = vpop.permute.xlu0 %3893
      %3901 = vrot.lane.b32.xlu0 %v3849, 30
      %v3902 = vpop.permute.xlu0 %3901
      %3903 = vrot.lane.b32.xlu0 %v3850, 30
      %v3904 = vpop.permute.xlu0 %3903
      %3905 = vrot.lane.b32.xlu0 %v3851, 30
      %v3906 = vpop.permute.xlu0 %3905
      %3907 = vrot.lane.b32.xlu0 %v3852, 30
      %v3908 = vpop.permute.xlu0 %3907
      %3909 = vrot.lane.b32.xlu0 %v3853, 30
      %v3910 = vpop.permute.xlu0 %3909
      %v3916 = vrot.slane %v3853, 1
      %3917 = vrot.lane.b32.xlu0 %v3861, 40
      %v3918 = vpop.permute.xlu0 %3917
      %3919 = vrot.lane.b32.xlu0 %v3862, 40
      %v3920 = vpop.permute.xlu0 %3919
      %3921 = vrot.lane.b32.xlu0 %v3863, 40
      %v3922 = vpop.permute.xlu0 %3921
      %3923 = vrot.lane.b32.xlu0 %v3864, 40
      %v3924 = vpop.permute.xlu0 %3923
      %3925 = vrot.lane.b32.xlu0 %v3916, 40
      %v3926 = vpop.permute.xlu0 %3925
      %v3932 = vrot.slane %v3853, 2
      %3933 = vrot.lane.b32.xlu0 %v3881, 50
      %v3934 = vpop.permute.xlu0 %3933
      %3935 = vrot.lane.b32.xlu0 %v3882, 50
      %v3936 = vpop.permute.xlu0 %3935
      %3937 = vrot.lane.b32.xlu0 %v3883, 50
      %v3938 = vpop.permute.xlu0 %3937
      %3939 = vrot.lane.b32.xlu0 %v3884, 50
      %v3940 = vpop.permute.xlu0 %3939
      %3941 = vrot.lane.b32.xlu0 %v3932, 50
      %v3942 = vpop.permute.xlu0 %3941
      %3949 = vrot.lane.b32.xlu0 %v3850, 60
      %v3950 = vpop.permute.xlu0 %3949
      %3951 = vrot.lane.b32.xlu0 %v3851, 60
      %v3952 = vpop.permute.xlu0 %3951
      %3953 = vrot.lane.b32.xlu0 %v3852, 60
      %v3954 = vpop.permute.xlu0 %3953
      %3955 = vrot.lane.b32.xlu0 %v3853, 60
      %v3956 = vpop.permute.xlu0 %3955
      %3957 = vrot.lane.b32.xlu0 %v3854, 60
      %v3958 = vpop.permute.xlu0 %3957
      %v3964 = vrot.slane %v3854, 1
      %3965 = vrot.lane.b32.xlu0 %v3862, 70
      %v3966 = vpop.permute.xlu0 %3965
      %3967 = vrot.lane.b32.xlu0 %v3863, 70
      %v3968 = vpop.permute.xlu0 %3967
      %3969 = vrot.lane.b32.xlu0 %v3864, 70
      %v3970 = vpop.permute.xlu0 %3969
      %3971 = vrot.lane.b32.xlu0 %v3916, 70
      %v3972 = vpop.permute.xlu0 %3971
      %3973 = vrot.lane.b32.xlu0 %v3964, 70
      %v3974 = vpop.permute.xlu0 %3973
      %v3980 = vrot.slane %v3854, 2
      %3981 = vrot.lane.b32.xlu0 %v3882, 80
      %v3982 = vpop.permute.xlu0 %3981
      %3983 = vrot.lane.b32.xlu0 %v3883, 80
      %v3984 = vpop.permute.xlu0 %3983
      %3985 = vrot.lane.b32.xlu0 %v3884, 80
      %v3986 = vpop.permute.xlu0 %3985
      %3987 = vrot.lane.b32.xlu0 %v3932, 80
      %v3988 = vpop.permute.xlu0 %3987
      %3989 = vrot.lane.b32.xlu0 %v3980, 80
      %v3990 = vpop.permute.xlu0 %3989
      %vm3996 = vcmask 80896
      %v3997 = vsel %vm3996, %v3848, %v3866
      %v3998 = vsel %vm3996, %v3849, %v3868
      %v3999 = vsel %vm3996, %v3850, %v3870
      %v4000 = vsel %vm3996, %v3851, %v3872
      %v4001 = vsel %vm3996, %v3852, %v3874
      %vm4002 = vcmask 162816
      %v4003 = vsel %vm4002, %v3997, %v3886
      %v4004 = vsel %vm4002, %v3998, %v3888
      %v4005 = vsel %vm4002, %v3999, %v3890
      %v4006 = vsel %vm4002, %v4000, %v3892
      %v4007 = vsel %vm4002, %v4001, %v3894
      %vm4008 = vcmask 244736
      %v4009 = vsel %vm4008, %v4003, %v3902
      %v4010 = vsel %vm4008, %v4004, %v3904
      %v4011 = vsel %vm4008, %v4005, %v3906
      %v4012 = vsel %vm4008, %v4006, %v3908
      %v4013 = vsel %vm4008, %v4007, %v3910
      %vm4014 = vcmask 326656
      %v4015 = vsel %vm4014, %v4009, %v3918
      %v4016 = vsel %vm4014, %v4010, %v3920
      %v4017 = vsel %vm4014, %v4011, %v3922
      %v4018 = vsel %vm4014, %v4012, %v3924
      %v4019 = vsel %vm4014, %v4013, %v3926
      %vm4020 = vcmask 408576
      %v4021 = vsel %vm4020, %v4015, %v3934
      %v4022 = vsel %vm4020, %v4016, %v3936
      %v4023 = vsel %vm4020, %v4017, %v3938
      %v4024 = vsel %vm4020, %v4018, %v3940
      %v4025 = vsel %vm4020, %v4019, %v3942
      %vm4026 = vcmask 490496
      %v4027 = vsel %vm4026, %v4021, %v3950
      %v4028 = vsel %vm4026, %v4022, %v3952
      %v4029 = vsel %vm4026, %v4023, %v3954
      %v4030 = vsel %vm4026, %v4024, %v3956
      %v4031 = vsel %vm4026, %v4025, %v3958
      %vm4032 = vcmask 572416
      %v4033 = vsel %vm4032, %v4027, %v3966
      %v4034 = vsel %vm4032, %v4028, %v3968
      %v4035 = vsel %vm4032, %v4029, %v3970
      %v4036 = vsel %vm4032, %v4030, %v3972
      %v4037 = vsel %vm4032, %v4031, %v3974
      %vm4038 = vcmask 654336
      %v4039 = vsel %vm4038, %v4033, %v3982
      %v4040 = vsel %vm4038, %v4034, %v3984
      %v4041 = vsel %vm4038, %v4035, %v3986
      %v4042 = vsel %vm4038, %v4036, %v3988
      %v4043 = vsel %vm4038, %v4037, %v3990
      %v4049 = vcombine.high %v4039, %v4039
      %v4051 = vunpack.c.l.s4 1966171168
      %v4052 = vunpack.c.0.s8 %v4051
      %v4053 = vlaneseq
      %v4054 = vshrl.u32 %v4053, 7
      %v4055 = vsub.s32 %v4052, %v4054
      %v4056 = vrot.slane %v4039, %v4055
      %v4058 = vunpack.c.l.s4 1966171168
      %v4059 = vunpack.c.0.s8 %v4058
      %v4060 = vlaneseq
      %v4061 = vshrl.u32 %v4060, 7
      %v4062 = vsub.s32 %v4059, %v4061
      %v4063 = vrot.slane %v4049, %v4062
      %v4064 = vcombine.high %v4056, %v4056
      %v4066 = vunpack.c.l.s4 1966171168
      %v4067 = vunpack.c.0.s8 %v4066
      %v4068 = vlaneseq
      %v4069 = vshrl.u32 %v4068, 7
      %v4070 = vsub.s32 %v4067, %v4069
      %v4071 = vrot.slane %v4056, %v4070
      %v4073 = vunpack.c.l.s4 1966171168
      %v4074 = vunpack.c.0.s8 %v4073
      %v4075 = vlaneseq
      %v4076 = vshrl.u32 %v4075, 7
      %v4077 = vsub.s32 %v4074, %v4076
      %v4078 = vrot.slane %v4063, %v4077
      %v4080 = vunpack.c.l.s4 1966171168
      %v4081 = vunpack.c.0.s8 %v4080
      %v4082 = vlaneseq
      %v4083 = vshrl.u32 %v4082, 7
      %v4084 = vsub.s32 %v4081, %v4083
      %v4085 = vrot.slane %v4064, %v4084
      %v4086 = vcombine.high %v4071, %v4071
      %v4087 = vcombine.high %v4085, %v4085
      %v4088 = vcombine.high %v4040, %v4040
      %v4090 = vunpack.c.l.s4 1966171168
      %v4091 = vunpack.c.0.s8 %v4090
      %v4092 = vlaneseq
      %v4093 = vshrl.u32 %v4092, 7
      %v4094 = vsub.s32 %v4091, %v4093
      %v4095 = vrot.slane %v4040, %v4094
      %v4097 = vunpack.c.l.s4 1966171168
      %v4098 = vunpack.c.0.s8 %v4097
      %v4099 = vlaneseq
      %v4100 = vshrl.u32 %v4099, 7
      %v4101 = vsub.s32 %v4098, %v4100
      %v4102 = vrot.slane %v4088, %v4101
      %v4103 = vcombine.high %v4095, %v4095
      %v4105 = vunpack.c.l.s4 1966171168
      %v4106 = vunpack.c.0.s8 %v4105
      %v4107 = vlaneseq
      %v4108 = vshrl.u32 %v4107, 7
      %v4109 = vsub.s32 %v4106, %v4108
      %v4110 = vrot.slane %v4095, %v4109
      %v4112 = vunpack.c.l.s4 1966171168
      %v4113 = vunpack.c.0.s8 %v4112
      %v4114 = vlaneseq
      %v4115 = vshrl.u32 %v4114, 7
      %v4116 = vsub.s32 %v4113, %v4115
      %v4117 = vrot.slane %v4102, %v4116
      %v4119 = vunpack.c.l.s4 1966171168
      %v4120 = vunpack.c.0.s8 %v4119
      %v4121 = vlaneseq
      %v4122 = vshrl.u32 %v4121, 7
      %v4123 = vsub.s32 %v4120, %v4122
      %v4124 = vrot.slane %v4103, %v4123
      %v4125 = vcombine.high %v4110, %v4110
      %v4126 = vcombine.high %v4124, %v4124
      %v4127 = vcombine.high %v4041, %v4041
      %v4129 = vunpack.c.l.s4 1966171168
      %v4130 = vunpack.c.0.s8 %v4129
      %v4131 = vlaneseq
      %v4132 = vshrl.u32 %v4131, 7
      %v4133 = vsub.s32 %v4130, %v4132
      %v4134 = vrot.slane %v4041, %v4133
      %v4136 = vunpack.c.l.s4 1966171168
      %v4137 = vunpack.c.0.s8 %v4136
      %v4138 = vlaneseq
      %v4139 = vshrl.u32 %v4138, 7
      %v4140 = vsub.s32 %v4137, %v4139
      %v4141 = vrot.slane %v4127, %v4140
      %v4142 = vcombine.high %v4134, %v4134
      %v4144 = vunpack.c.l.s4 1966171168
      %v4145 = vunpack.c.0.s8 %v4144
      %v4146 = vlaneseq
      %v4147 = vshrl.u32 %v4146, 7
      %v4148 = vsub.s32 %v4145, %v4147
      %v4149 = vrot.slane %v4134, %v4148
      %v4151 = vunpack.c.l.s4 1966171168
      %v4152 = vunpack.c.0.s8 %v4151
      %v4153 = vlaneseq
      %v4154 = vshrl.u32 %v4153, 7
      %v4155 = vsub.s32 %v4152, %v4154
      %v4156 = vrot.slane %v4141, %v4155
      %v4158 = vunpack.c.l.s4 1966171168
      %v4159 = vunpack.c.0.s8 %v4158
      %v4160 = vlaneseq
      %v4161 = vshrl.u32 %v4160, 7
      %v4162 = vsub.s32 %v4159, %v4161
      %v4163 = vrot.slane %v4142, %v4162
      %v4164 = vcombine.high %v4149, %v4149
      %v4165 = vcombine.high %v4163, %v4163
      %v4166 = vcombine.high %v4042, %v4042
      %v4168 = vunpack.c.l.s4 1966171168
      %v4169 = vunpack.c.0.s8 %v4168
      %v4170 = vlaneseq
      %v4171 = vshrl.u32 %v4170, 7
      %v4172 = vsub.s32 %v4169, %v4171
      %v4173 = vrot.slane %v4042, %v4172
      %v4175 = vunpack.c.l.s4 1966171168
      %v4176 = vunpack.c.0.s8 %v4175
      %v4177 = vlaneseq
      %v4178 = vshrl.u32 %v4177, 7
      %v4179 = vsub.s32 %v4176, %v4178
      %v4180 = vrot.slane %v4166, %v4179
      %v4181 = vcombine.high %v4173, %v4173
      %v4183 = vunpack.c.l.s4 1966171168
      %v4184 = vunpack.c.0.s8 %v4183
      %v4185 = vlaneseq
      %v4186 = vshrl.u32 %v4185, 7
      %v4187 = vsub.s32 %v4184, %v4186
      %v4188 = vrot.slane %v4173, %v4187
      %v4190 = vunpack.c.l.s4 1966171168
      %v4191 = vunpack.c.0.s8 %v4190
      %v4192 = vlaneseq
      %v4193 = vshrl.u32 %v4192, 7
      %v4194 = vsub.s32 %v4191, %v4193
      %v4195 = vrot.slane %v4180, %v4194
      %v4197 = vunpack.c.l.s4 1966171168
      %v4198 = vunpack.c.0.s8 %v4197
      %v4199 = vlaneseq
      %v4200 = vshrl.u32 %v4199, 7
      %v4201 = vsub.s32 %v4198, %v4200
      %v4202 = vrot.slane %v4181, %v4201
      %v4203 = vcombine.high %v4188, %v4188
      %v4204 = vcombine.high %v4202, %v4202
      %v4205 = vcombine.high %v4043, %v4043
      %v4207 = vunpack.c.l.s4 1966171168
      %v4208 = vunpack.c.0.s8 %v4207
      %v4209 = vlaneseq
      %v4210 = vshrl.u32 %v4209, 7
      %v4211 = vsub.s32 %v4208, %v4210
      %v4212 = vrot.slane %v4043, %v4211
      %v4214 = vunpack.c.l.s4 1966171168
      %v4215 = vunpack.c.0.s8 %v4214
      %v4216 = vlaneseq
      %v4217 = vshrl.u32 %v4216, 7
      %v4218 = vsub.s32 %v4215, %v4217
      %v4219 = vrot.slane %v4205, %v4218
      %v4220 = vcombine.high %v4212, %v4212
      %v4222 = vunpack.c.l.s4 1966171168
      %v4223 = vunpack.c.0.s8 %v4222
      %v4224 = vlaneseq
      %v4225 = vshrl.u32 %v4224, 7
      %v4226 = vsub.s32 %v4223, %v4225
      %v4227 = vrot.slane %v4212, %v4226
      %v4229 = vunpack.c.l.s4 1966171168
      %v4230 = vunpack.c.0.s8 %v4229
      %v4231 = vlaneseq
      %v4232 = vshrl.u32 %v4231, 7
      %v4233 = vsub.s32 %v4230, %v4232
      %v4234 = vrot.slane %v4219, %v4233
      %v4236 = vunpack.c.l.s4 1966171168
      %v4237 = vunpack.c.0.s8 %v4236
      %v4238 = vlaneseq
      %v4239 = vshrl.u32 %v4238, 7
      %v4240 = vsub.s32 %v4237, %v4239
      %v4241 = vrot.slane %v4220, %v4240
      %v4242 = vcombine.high %v4227, %v4227
      %v4243 = vcombine.high %v4241, %v4241
      %v4244 = vld [vmem:[%s4] sm:$0xff]
      %v4245 = vld [vmem:[%s4 + $0x8] sm:$0xff]
      %v4246 = vld [vmem:[%s4 + $0x10] sm:$0xff]
      %v4247 = vld [vmem:[%s4 + $0x18] sm:$0xff]
      %v4248 = vld [vmem:[%s4 + $0x20] sm:$0xff]
      %v4249 = vld [vmem:[%s4 + $0x28] sm:$0xff]
      %v4250 = vld [vmem:[%s4 + $0x30] sm:$0xff]
      %v4251 = vld [vmem:[%s4 + $0x38] sm:$0xff]
      %v4252 = vld [vmem:[%s4 + $0x40] sm:$0xff]
      %v4253 = vld [vmem:[%s4 + $0x48] sm:$0xff]
      %v4254 = vld [vmem:[%s4 + $0x50] sm:$0xff]
      %v4255 = vld [vmem:[%s4 + $0x58] sm:$0x3]
      %v4256 = vld [vmem:[%s5] sm:$0x1]
      %v4258 = vlaneseq
      %v4259 = vshrl.u32 %v4258, 7
      %v4260 = vsub.s32 0, %v4259
      %v4261 = vrot.slane %v4256, %v4260
      %v4263 = vcombine.low %v4071, %v4085
      %v4264 = vcombine.low %v4086, %v4087
      %v4265 = vcombine.low %v4078, %v4110
      %v4266 = vcombine.low %v4124, %v4125
      %v4268 = vunpack.c.l.s4 1966171168
      %v4269 = vunpack.c.0.s8 %v4268
      %v4270 = vlaneseq
      %v4271 = vshrl.u32 %v4270, 7
      %v4272 = vsub.s32 %v4269, %v4271
      %v4273 = vrot.slane %v4263, %v4272
      %v4275 = vunpack.c.l.s4 1966171168
      %v4276 = vunpack.c.0.s8 %v4275
      %v4277 = vlaneseq
      %v4278 = vshrl.u32 %v4277, 7
      %v4279 = vsub.s32 %v4276, %v4278
      %v4280 = vrot.slane %v4264, %v4279
      %v4282 = vunpack.c.l.s4 1966171168
      %v4283 = vunpack.c.0.s8 %v4282
      %v4284 = vlaneseq
      %v4285 = vshrl.u32 %v4284, 7
      %v4286 = vsub.s32 %v4283, %v4285
      %v4287 = vrot.slane %v4265, %v4286
      %v4289 = vunpack.c.l.s4 1966171168
      %v4290 = vunpack.c.0.s8 %v4289
      %v4291 = vlaneseq
      %v4292 = vshrl.u32 %v4291, 7
      %v4293 = vsub.s32 %v4290, %v4292
      %v4294 = vrot.slane %v4266, %v4293
      %v4295 = vcombine.low %v4273, %v4280
      %v4296 = vcombine.low %v4287, %v4294
      %v4298 = vunpack.c.l.s4 1966171168
      %v4299 = vunpack.c.0.s8 %v4298
      %v4300 = vlaneseq
      %v4301 = vshrl.u32 %v4300, 7
      %v4302 = vsub.s32 %v4299, %v4301
      %v4303 = vrot.slane %v4295, %v4302
      %v4305 = vunpack.c.l.s4 1966171168
      %v4306 = vunpack.c.0.s8 %v4305
      %v4307 = vlaneseq
      %v4308 = vshrl.u32 %v4307, 7
      %v4309 = vsub.s32 %v4306, %v4308
      %v4310 = vrot.slane %v4296, %v4309
      %v4311 = vcombine.low %v4303, %v4310
      %v4312 = vcombine.low %v4126, %v4117
      %v4313 = vcombine.low %v4149, %v4163
      %v4314 = vcombine.low %v4164, %v4165
      %v4315 = vcombine.low %v4156, %v4188
      %v4317 = vunpack.c.l.s4 1966171168
      %v4318 = vunpack.c.0.s8 %v4317
      %v4319 = vlaneseq
      %v4320 = vshrl.u32 %v4319, 7
      %v4321 = vsub.s32 %v4318, %v4320
      %v4322 = vrot.slane %v4312, %v4321
      %v4324 = vunpack.c.l.s4 1966171168
      %v4325 = vunpack.c.0.s8 %v4324
      %v4326 = vlaneseq
      %v4327 = vshrl.u32 %v4326, 7
      %v4328 = vsub.s32 %v4325, %v4327
      %v4329 = vrot.slane %v4313, %v4328
      %v4331 = vunpack.c.l.s4 1966171168
      %v4332 = vunpack.c.0.s8 %v4331
      %v4333 = vlaneseq
      %v4334 = vshrl.u32 %v4333, 7
      %v4335 = vsub.s32 %v4332, %v4334
      %v4336 = vrot.slane %v4314, %v4335
      %v4338 = vunpack.c.l.s4 1966171168
      %v4339 = vunpack.c.0.s8 %v4338
      %v4340 = vlaneseq
      %v4341 = vshrl.u32 %v4340, 7
      %v4342 = vsub.s32 %v4339, %v4341
      %v4343 = vrot.slane %v4315, %v4342
      %v4344 = vcombine.low %v4322, %v4329
      %v4345 = vcombine.low %v4336, %v4343
      %v4347 = vunpack.c.l.s4 1966171168
      %v4348 = vunpack.c.0.s8 %v4347
      %v4349 = vlaneseq
      %v4350 = vshrl.u32 %v4349, 7
      %v4351 = vsub.s32 %v4348, %v4350
      %v4352 = vrot.slane %v4344, %v4351
      %v4354 = vunpack.c.l.s4 1966171168
      %v4355 = vunpack.c.0.s8 %v4354
      %v4356 = vlaneseq
      %v4357 = vshrl.u32 %v4356, 7
      %v4358 = vsub.s32 %v4355, %v4357
      %v4359 = vrot.slane %v4345, %v4358
      %v4360 = vcombine.low %v4352, %v4359
      %v4361 = vcombine.low %v4202, %v4203
      %v4362 = vcombine.low %v4204, %v4195
      %v4363 = vcombine.low %v4227, %v4241
      %v4364 = vcombine.low %v4242, %v4243
      %v4366 = vunpack.c.l.s4 1966171168
      %v4367 = vunpack.c.0.s8 %v4366
      %v4368 = vlaneseq
      %v4369 = vshrl.u32 %v4368, 7
      %v4370 = vsub.s32 %v4367, %v4369
      %v4371 = vrot.slane %v4361, %v4370
      %v4373 = vunpack.c.l.s4 1966171168
      %v4374 = vunpack.c.0.s8 %v4373
      %v4375 = vlaneseq
      %v4376 = vshrl.u32 %v4375, 7
      %v4377 = vsub.s32 %v4374, %v4376
      %v4378 = vrot.slane %v4362, %v4377
      %v4380 = vunpack.c.l.s4 1966171168
      %v4381 = vunpack.c.0.s8 %v4380
      %v4382 = vlaneseq
      %v4383 = vshrl.u32 %v4382, 7
      %v4384 = vsub.s32 %v4381, %v4383
      %v4385 = vrot.slane %v4363, %v4384
      %v4387 = vunpack.c.l.s4 1966171168
      %v4388 = vunpack.c.0.s8 %v4387
      %v4389 = vlaneseq
      %v4390 = vshrl.u32 %v4389, 7
      %v4391 = vsub.s32 %v4388, %v4390
      %v4392 = vrot.slane %v4364, %v4391
      %v4393 = vcombine.low %v4371, %v4378
      %v4394 = vcombine.low %v4385, %v4392
      %v4396 = vunpack.c.l.s4 1966171168
      %v4397 = vunpack.c.0.s8 %v4396
      %v4398 = vlaneseq
      %v4399 = vshrl.u32 %v4398, 7
      %v4400 = vsub.s32 %v4397, %v4399
      %v4401 = vrot.slane %v4393, %v4400
      %v4403 = vunpack.c.l.s4 1966171168
      %v4404 = vunpack.c.0.s8 %v4403
      %v4405 = vlaneseq
      %v4406 = vshrl.u32 %v4405, 7
      %v4407 = vsub.s32 %v4404, %v4406
      %v4408 = vrot.slane %v4394, %v4407
      %v4409 = vcombine.low %v4401, %v4408
      %v4411 = vunpack.c.l.s4 1966171168
      %v4412 = vunpack.c.0.s8 %v4411
      %v4413 = vlaneseq
      %v4414 = vshrl.u32 %v4413, 7
      %v4415 = vsub.s32 %v4412, %v4414
      %v4416 = vrot.slane %v4234, %v4415
      %v4418 = vunpack.c.l.s4 1966171168
      %v4419 = vunpack.c.0.s8 %v4418
      %v4420 = vlaneseq
      %v4421 = vshrl.u32 %v4420, 7
      %v4422 = vsub.s32 %v4419, %v4421
      %v4423 = vrot.slane %v4416, %v4422
      %vm4424 = vcmask 736256
      %v4425 = vsel %vm4424, %v4311, 0
      %v4427 = vsel %vm4424, %v4360, 0
      %v4429 = vsel %vm4424, %v4409, 0
      %v4431 = vsel %vm4424, %v4423, 0
      %v4434 = vsel %vm3817, %v4255, 0
      %4436 = vmatprep.subr.mxu0 0.0
      %4437 = vmatpush1.msra.mxu0 %v4244
      %4438 = vmatprep.subr.mxu0 0.0
      %4439 = vmatpush1.msra.mxu0 %v4245
      %4440 = vmatprep.subr.mxu0 0.0
      %4441 = vmatpush1.msra.mxu0 %v4246
      %4442 = vmatprep.subr.mxu0 0.0
      %4443 = vmatpush1.msra.mxu0 %v4247
      %4444 = vmatprep.subr.mxu0 0.0
      %4445 = vmatpush1.msra.mxu0 %v4248
      %4446 = vmatprep.subr.mxu0 0.0
      %4447 = vmatpush1.msra.mxu0 %v4249
      %4448 = vmatprep.subr.mxu0 0.0
      %4449 = vmatpush1.msra.mxu0 %v4250
      %4450 = vmatprep.subr.mxu0 0.0
      %4451 = vmatpush1.msra.mxu0 %v4251
      %4452 = vmatprep.subr.mxu0 0.0
      %4453 = vmatpush1.msra.mxu0 %v4252
      %4454 = vmatprep.subr.mxu0 0.0
      %4455 = vmatpush1.msra.mxu0 %v4253
      %4456 = vmatprep.subr.mxu0 0.0
      %4457 = vmatpush1.msra.mxu0 %v4254
      %4458 = vmatprep.subr.mxu0 0.0
      %4459 = vmatpush1.msra.mxu0 %v4434
      %4460 = vmatprep.subr.mxu0 0.0
      %4461 = vmatpush1.msra.mxu0 0.0
      %4462 = vmatprep.subr.mxu0 0.0
      %4463 = vmatpush1.msra.mxu0 0.0
      %4464 = vmatprep.subr.mxu0 0.0
      %4465 = vmatpush1.msra.mxu0 0.0
      %4466 = vmatprep.subr.mxu0 0.0
      %4467 = vmatpush1.msra.mxu0 0.0
      %4468 = vmatprep.subr.mxu0 0.0
      %4469 = vmatpush1.msra.mxu0 0.0
      %4470 = vmatprep.subr.mxu0 0.0
      %4471 = vmatpush1.msra.mxu0 0.0
      %4472 = vmatprep.subr.mxu0 0.0
      %4473 = vmatpush1.msra.mxu0 0.0
      %4474 = vmatprep.subr.mxu0 0.0
      %4475 = vmatpush1.msra.mxu0 0.0
      %4476 = vmatprep.subr.mxu0 0.0
      %4477 = vmatpush1.msra.mxu0 0.0
      %4478 = vmatprep.subr.mxu0 0.0
      %4479 = vmatpush1.msra.mxu0 0.0
      %4480 = vmatprep.subr.mxu0 0.0
      %4481 = vmatpush1.msra.mxu0 0.0
      %4482 = vmatprep.subr.mxu0 0.0
      %4483 = vmatpush1.msra.mxu0 0.0
      %4484 = vmatprep.subr.mxu0 0.0
      %4485 = vmatpush1.msra.mxu0 0.0
      %4486 = vmatprep.subr.mxu0 0.0
      %4487 = vmatpush1.msra.mxu0 0.0
      %4488 = vmatprep.subr.mxu0 0.0
      %4489 = vmatpush1.msra.mxu0 0.0
      %4490 = vmatprep.subr.mxu0 0.0
      %4491 = vmatpush1.msra.mxu0 0.0
      %4492 = vmatprep.subr.mxu0 0.0
      %4493 = vmatpush1.msra.mxu0 0.0
      %4494 = vmatprep.subr.mxu0 0.0
      %4495 = vmatpush1.msra.mxu0 0.0
      %4496 = vmatprep.subr.mxu0 0.0
      %4497 = vmatpush1.msra.mxu0 0.0
      %4498 = vmatprep.subr.mxu0 0.0
      %4499 = vmatpush1.msra.mxu0 0.0
      %4500 = vmatprep.mubr.f32.mxu0 0.0
      %4501 = vmatmul.mubr.f32.gmra.mrb[0].mxu0 %v4425
      %v4502 = vpop.f32.mrb[0].mxu0
      %v4503 = vadd.f32 %v4261, %v4502
      %v4504 = vpop.f32.mrb[0].mxu0
      %4505 = vmatprep.mubr.f32.mxu0 0.0
      %4506 = vmatmul.mubr.f32.gmra.mrb[0].mxu0 %v4427
      %v4507 = vpop.f32.mrb[0].mxu0
      %v4508 = vadd.f32 %v4261, %v4507
      %v4509 = vpop.f32.mrb[0].mxu0
      %4510 = vmatprep.mubr.f32.mxu0 0.0
      %4511 = vmatmul.mubr.f32.gmra.mrb[0].mxu0 %v4429
      %v4512 = vpop.f32.mrb[0].mxu0
      %v4513 = vadd.f32 %v4261, %v4512
      %v4514 = vpop.f32.mrb[0].mxu0
      %4515 = vmatprep.mubr.f32.mxu0 0.0
      %4516 = vmatmul.mubr.f32.gmra.mrb[0].mxu0 %v4431
      %v4517 = vpop.f32.mrb[0].mxu0
      %v4518 = vadd.f32 %v4261, %v4517
      %v4519 = vpop.f32.mrb[0].mxu0
      %4520 = vdwg.mxu0
      %v4521 = vld [vmem:[%s6] sm:$0x1]
      %vm4522 = vcmp.ge.f32.partialorder %v4503, 0.0
      %vm4523 = vcmp.ge.f32.partialorder %v4508, 0.0
      %vm4524 = vcmp.ge.f32.partialorder %v4513, 0.0
      %vm4525 = vcmp.ge.f32.partialorder %v4518, 0.0
      %v4527 = vlaneseq
      %v4528 = vshrl.u32 %v4527, 7
      %v4529 = vsub.s32 0, %v4528
      %v4530 = vrot.slane %v4521, %v4529
      %v4532 = vmul.f32 %v4503, %v4530
      %v4533 = vmul.f32 %v4508, %v4530
      %v4534 = vmul.f32 %v4513, %v4530
      %v4535 = vmul.f32 %v4518, %v4530
      %v4536 = vsel %vm4522, %v4503, %v4532
      %v4537 = vsel %vm4523, %v4508, %v4533
      %v4538 = vsel %vm4524, %v4513, %v4534
      %v4539 = vsel %vm4525, %v4518, %v4535
      %v4544 = vcombine.high %v4536, %v4536
      %v4546 = vunpack.c.l.s4 1966171168
      %v4547 = vunpack.c.0.s8 %v4546
      %v4548 = vlaneseq
      %v4549 = vshrl.u32 %v4548, 7
      %v4550 = vsub.s32 %v4547, %v4549
      %v4551 = vrot.slane %v4536, %v4550
      %v4553 = vunpack.c.l.s4 1966171168
      %v4554 = vunpack.c.0.s8 %v4553
      %v4555 = vlaneseq
      %v4556 = vshrl.u32 %v4555, 7
      %v4557 = vsub.s32 %v4554, %v4556
      %v4558 = vrot.slane %v4544, %v4557
      %v4559 = vcombine.high %v4551, %v4551
      %v4560 = vcombine.high %v4558, %v4558
      %v4562 = vunpack.c.l.s4 1966171168
      %v4563 = vunpack.c.0.s8 %v4562
      %v4564 = vlaneseq
      %v4565 = vshrl.u32 %v4564, 7
      %v4566 = vsub.s32 %v4563, %v4565
      %v4567 = vrot.slane %v4551, %v4566
      %v4569 = vunpack.c.l.s4 1966171168
      %v4570 = vunpack.c.0.s8 %v4569
      %v4571 = vlaneseq
      %v4572 = vshrl.u32 %v4571, 7
      %v4573 = vsub.s32 %v4570, %v4572
      %v4574 = vrot.slane %v4558, %v4573
      %v4576 = vunpack.c.l.s4 1966171168
      %v4577 = vunpack.c.0.s8 %v4576
      %v4578 = vlaneseq
      %v4579 = vshrl.u32 %v4578, 7
      %v4580 = vsub.s32 %v4577, %v4579
      %v4581 = vrot.slane %v4559, %v4580
      %v4583 = vunpack.c.l.s4 1966171168
      %v4584 = vunpack.c.0.s8 %v4583
      %v4585 = vlaneseq
      %v4586 = vshrl.u32 %v4585, 7
      %v4587 = vsub.s32 %v4584, %v4586
      %v4588 = vrot.slane %v4560, %v4587
      %v4589 = vcombine.high %v4567, %v4567
      %v4590 = vcombine.high %v4574, %v4574
      %v4591 = vcombine.high %v4581, %v4581
      %v4592 = vcombine.high %v4588, %v4588
      %v4593 = vcombine.high %v4537, %v4537
      %v4595 = vunpack.c.l.s4 1966171168
      %v4596 = vunpack.c.0.s8 %v4595
      %v4597 = vlaneseq
      %v4598 = vshrl.u32 %v4597, 7
      %v4599 = vsub.s32 %v4596, %v4598
      %v4600 = vrot.slane %v4537, %v4599
      %v4602 = vunpack.c.l.s4 1966171168
      %v4603 = vunpack.c.0.s8 %v4602
      %v4604 = vlaneseq
      %v4605 = vshrl.u32 %v4604, 7
      %v4606 = vsub.s32 %v4603, %v4605
      %v4607 = vrot.slane %v4593, %v4606
      %v4608 = vcombine.high %v4600, %v4600
      %v4609 = vcombine.high %v4607, %v4607
      %v4611 = vunpack.c.l.s4 1966171168
      %v4612 = vunpack.c.0.s8 %v4611
      %v4613 = vlaneseq
      %v4614 = vshrl.u32 %v4613, 7
      %v4615 = vsub.s32 %v4612, %v4614
      %v4616 = vrot.slane %v4600, %v4615
      %v4618 = vunpack.c.l.s4 1966171168
      %v4619 = vunpack.c.0.s8 %v4618
      %v4620 = vlaneseq
      %v4621 = vshrl.u32 %v4620, 7
      %v4622 = vsub.s32 %v4619, %v4621
      %v4623 = vrot.slane %v4607, %v4622
      %v4625 = vunpack.c.l.s4 1966171168
      %v4626 = vunpack.c.0.s8 %v4625
      %v4627 = vlaneseq
      %v4628 = vshrl.u32 %v4627, 7
      %v4629 = vsub.s32 %v4626, %v4628
      %v4630 = vrot.slane %v4608, %v4629
      %v4632 = vunpack.c.l.s4 1966171168
      %v4633 = vunpack.c.0.s8 %v4632
      %v4634 = vlaneseq
      %v4635 = vshrl.u32 %v4634, 7
      %v4636 = vsub.s32 %v4633, %v4635
      %v4637 = vrot.slane %v4609, %v4636
      %v4638 = vcombine.high %v4616, %v4616
      %v4639 = vcombine.high %v4623, %v4623
      %v4640 = vcombine.high %v4630, %v4630
      %v4641 = vcombine.high %v4637, %v4637
      %v4642 = vcombine.high %v4538, %v4538
      %v4644 = vunpack.c.l.s4 1966171168
      %v4645 = vunpack.c.0.s8 %v4644
      %v4646 = vlaneseq
      %v4647 = vshrl.u32 %v4646, 7
      %v4648 = vsub.s32 %v4645, %v4647
      %v4649 = vrot.slane %v4538, %v4648
      %v4651 = vunpack.c.l.s4 1966171168
      %v4652 = vunpack.c.0.s8 %v4651
      %v4653 = vlaneseq
      %v4654 = vshrl.u32 %v4653, 7
      %v4655 = vsub.s32 %v4652, %v4654
      %v4656 = vrot.slane %v4642, %v4655
      %v4657 = vcombine.high %v4649, %v4649
      %v4658 = vcombine.high %v4656, %v4656
      %v4660 = vunpack.c.l.s4 1966171168
      %v4661 = vunpack.c.0.s8 %v4660
      %v4662 = vlaneseq
      %v4663 = vshrl.u32 %v4662, 7
      %v4664 = vsub.s32 %v4661, %v4663
      %v4665 = vrot.slane %v4649, %v4664
      %v4667 = vunpack.c.l.s4 1966171168
      %v4668 = vunpack.c.0.s8 %v4667
      %v4669 = vlaneseq
      %v4670 = vshrl.u32 %v4669, 7
      %v4671 = vsub.s32 %v4668, %v4670
      %v4672 = vrot.slane %v4656, %v4671
      %v4674 = vunpack.c.l.s4 1966171168
      %v4675 = vunpack.c.0.s8 %v4674
      %v4676 = vlaneseq
      %v4677 = vshrl.u32 %v4676, 7
      %v4678 = vsub.s32 %v4675, %v4677
      %v4679 = vrot.slane %v4657, %v4678
      %v4681 = vunpack.c.l.s4 1966171168
      %v4682 = vunpack.c.0.s8 %v4681
      %v4683 = vlaneseq
      %v4684 = vshrl.u32 %v4683, 7
      %v4685 = vsub.s32 %v4682, %v4684
      %v4686 = vrot.slane %v4658, %v4685
      %v4687 = vcombine.high %v4665, %v4665
      %v4688 = vcombine.high %v4672, %v4672
      %v4689 = vcombine.high %v4679, %v4679
      %v4690 = vcombine.high %v4686, %v4686
      %v4692 = vunpack.c.l.s4 1966171168
      %v4693 = vunpack.c.0.s8 %v4692
      %v4694 = vlaneseq
      %v4695 = vshrl.u32 %v4694, 7
      %v4696 = vsub.s32 %v4693, %v4695
      %v4697 = vrot.slane %v4539, %v4696
      %v4699 = vunpack.c.l.s4 1966171168
      %v4700 = vunpack.c.0.s8 %v4699
      %v4701 = vlaneseq
      %v4702 = vshrl.u32 %v4701, 7
      %v4703 = vsub.s32 %v4700, %v4702
      %v4704 = vrot.slane %v4697, %v4703
      %v4705 = vcombine.low %v4567, %v4581
      %v4707 = vunpack.c.l.s4 1966171168
      %v4708 = vunpack.c.0.s8 %v4707
      %v4709 = vlaneseq
      %v4710 = vshrl.u32 %v4709, 7
      %v4711 = vsub.s32 %v4708, %v4710
      %v4712 = vrot.slane %v4705, %v4711
      %v4714 = vunpack.c.l.s4 1966171168
      %v4715 = vunpack.c.0.s8 %v4714
      %v4716 = vlaneseq
      %v4717 = vshrl.u32 %v4716, 7
      %v4718 = vsub.s32 %v4715, %v4717
      %v4719 = vrot.slane %v4589, %v4718
      %v4720 = vcombine.low %v4712, %v4719
      %v4722 = vunpack.c.l.s4 1966171168
      %v4723 = vunpack.c.0.s8 %v4722
      %v4724 = vlaneseq
      %v4725 = vshrl.u32 %v4724, 7
      %v4726 = vsub.s32 %v4723, %v4725
      %v4727 = vrot.slane %v4720, %v4726
      %v4728 = vcombine.low %v4588, %v4590
      %v4730 = vunpack.c.l.s4 1966171168
      %v4731 = vunpack.c.0.s8 %v4730
      %v4732 = vlaneseq
      %v4733 = vshrl.u32 %v4732, 7
      %v4734 = vsub.s32 %v4731, %v4733
      %v4735 = vrot.slane %v4728, %v4734
      %v4737 = vunpack.c.l.s4 1966171168
      %v4738 = vunpack.c.0.s8 %v4737
      %v4739 = vlaneseq
      %v4740 = vshrl.u32 %v4739, 7
      %v4741 = vsub.s32 %v4738, %v4740
      %v4742 = vrot.slane %v4592, %v4741
      %v4743 = vcombine.low %v4735, %v4742
      %v4745 = vunpack.c.l.s4 1966171168
      %v4746 = vunpack.c.0.s8 %v4745
      %v4747 = vlaneseq
      %v4748 = vshrl.u32 %v4747, 7
      %v4749 = vsub.s32 %v4746, %v4748
      %v4750 = vrot.slane %v4743, %v4749
      %v4751 = vcombine.low %v4638, %v4640
      %v4753 = vunpack.c.l.s4 1966171168
      %v4754 = vunpack.c.0.s8 %v4753
      %v4755 = vlaneseq
      %v4756 = vshrl.u32 %v4755, 7
      %v4757 = vsub.s32 %v4754, %v4756
      %v4758 = vrot.slane %v4751, %v4757
      %v4760 = vunpack.c.l.s4 1966171168
      %v4761 = vunpack.c.0.s8 %v4760
      %v4762 = vlaneseq
      %v4763 = vshrl.u32 %v4762, 7
      %v4764 = vsub.s32 %v4761, %v4763
      %v4765 = vrot.slane %v4623, %v4764
      %v4766 = vcombine.low %v4758, %v4765
      %v4768 = vunpack.c.l.s4 1966171168
      %v4769 = vunpack.c.0.s8 %v4768
      %v4770 = vlaneseq
      %v4771 = vshrl.u32 %v4770, 7
      %v4772 = vsub.s32 %v4769, %v4771
      %v4773 = vrot.slane %v4766, %v4772
      %v4777 = vcombine.low %v4581, %v4589
      %v4779 = vunpack.c.l.s4 1966171168
      %v4780 = vunpack.c.0.s8 %v4779
      %v4781 = vlaneseq
      %v4782 = vshrl.u32 %v4781, 7
      %v4783 = vsub.s32 %v4780, %v4782
      %v4784 = vrot.slane %v4777, %v4783
      %v4786 = vunpack.c.l.s4 1966171168
      %v4787 = vunpack.c.0.s8 %v4786
      %v4788 = vlaneseq
      %v4789 = vshrl.u32 %v4788, 7
      %v4790 = vsub.s32 %v4787, %v4789
      %v4791 = vrot.slane %v4591, %v4790
      %v4792 = vcombine.low %v4784, %v4791
      %v4794 = vunpack.c.l.s4 1966171168
      %v4795 = vunpack.c.0.s8 %v4794
      %v4796 = vlaneseq
      %v4797 = vshrl.u32 %v4796, 7
      %v4798 = vsub.s32 %v4795, %v4797
      %v4799 = vrot.slane %v4792, %v4798
      %v4800 = vcombine.low %v4590, %v4592
      %v4802 = vunpack.c.l.s4 1966171168
      %v4803 = vunpack.c.0.s8 %v4802
      %v4804 = vlaneseq
      %v4805 = vshrl.u32 %v4804, 7
      %v4806 = vsub.s32 %v4803, %v4805
      %v4807 = vrot.slane %v4800, %v4806
      %v4809 = vunpack.c.l.s4 1966171168
      %v4810 = vunpack.c.0.s8 %v4809
      %v4811 = vlaneseq
      %v4812 = vshrl.u32 %v4811, 7
      %v4813 = vsub.s32 %v4810, %v4812
      %v4814 = vrot.slane %v4616, %v4813
      %v4815 = vcombine.low %v4807, %v4814
      %v4817 = vunpack.c.l.s4 1966171168
      %v4818 = vunpack.c.0.s8 %v4817
      %v4819 = vlaneseq
      %v4820 = vshrl.u32 %v4819, 7
      %v4821 = vsub.s32 %v4818, %v4820
      %v4822 = vrot.slane %v4815, %v4821
      %v4823 = vcombine.low %v4640, %v4623
      %v4825 = vunpack.c.l.s4 1966171168
      %v4826 = vunpack.c.0.s8 %v4825
      %v4827 = vlaneseq
      %v4828 = vshrl.u32 %v4827, 7
      %v4829 = vsub.s32 %v4826, %v4828
      %v4830 = vrot.slane %v4823, %v4829
      %v4832 = vunpack.c.l.s4 1966171168
      %v4833 = vunpack.c.0.s8 %v4832
      %v4834 = vlaneseq
      %v4835 = vshrl.u32 %v4834, 7
      %v4836 = vsub.s32 %v4833, %v4835
      %v4837 = vrot.slane %v4637, %v4836
      %v4838 = vcombine.low %v4830, %v4837
      %v4840 = vunpack.c.l.s4 1966171168
      %v4841 = vunpack.c.0.s8 %v4840
      %v4842 = vlaneseq
      %v4843 = vshrl.u32 %v4842, 7
      %v4844 = vsub.s32 %v4841, %v4843
      %v4845 = vrot.slane %v4838, %v4844
      %4846 = vrot.lane.b32.xlu0 %v4799, 16
      %v4847 = vpop.permute.xlu0 %4846
      %4848 = vrot.lane.b32.xlu0 %v4822, 16
      %v4849 = vpop.permute.xlu0 %4848
      %4850 = vrot.lane.b32.xlu0 %v4845, 16
      %v4851 = vpop.permute.xlu0 %4850
      %v4855 = vcombine.low %v4589, %v4591
      %v4857 = vunpack.c.l.s4 1966171168
      %v4858 = vunpack.c.0.s8 %v4857
      %v4859 = vlaneseq
      %v4860 = vshrl.u32 %v4859, 7
      %v4861 = vsub.s32 %v4858, %v4860
      %v4862 = vrot.slane %v4855, %v4861
      %v4864 = vunpack.c.l.s4 1966171168
      %v4865 = vunpack.c.0.s8 %v4864
      %v4866 = vlaneseq
      %v4867 = vshrl.u32 %v4866, 7
      %v4868 = vsub.s32 %v4865, %v4867
      %v4869 = vrot.slane %v4574, %v4868
      %v4870 = vcombine.low %v4862, %v4869
      %v4872 = vunpack.c.l.s4 1966171168
      %v4873 = vunpack.c.0.s8 %v4872
      %v4874 = vlaneseq
      %v4875 = vshrl.u32 %v4874, 7
      %v4876 = vsub.s32 %v4873, %v4875
      %v4877 = vrot.slane %v4870, %v4876
      %v4878 = vcombine.low %v4592, %v4616
      %v4880 = vunpack.c.l.s4 1966171168
      %v4881 = vunpack.c.0.s8 %v4880
      %v4882 = vlaneseq
      %v4883 = vshrl.u32 %v4882, 7
      %v4884 = vsub.s32 %v4881, %v4883
      %v4885 = vrot.slane %v4878, %v4884
      %v4887 = vunpack.c.l.s4 1966171168
      %v4888 = vunpack.c.0.s8 %v4887
      %v4889 = vlaneseq
      %v4890 = vshrl.u32 %v4889, 7
      %v4891 = vsub.s32 %v4888, %v4890
      %v4892 = vrot.slane %v4630, %v4891
      %v4893 = vcombine.low %v4885, %v4892
      %v4895 = vunpack.c.l.s4 1966171168
      %v4896 = vunpack.c.0.s8 %v4895
      %v4897 = vlaneseq
      %v4898 = vshrl.u32 %v4897, 7
      %v4899 = vsub.s32 %v4896, %v4898
      %v4900 = vrot.slane %v4893, %v4899
      %v4901 = vcombine.low %v4623, %v4637
      %v4903 = vunpack.c.l.s4 1966171168
      %v4904 = vunpack.c.0.s8 %v4903
      %v4905 = vlaneseq
      %v4906 = vshrl.u32 %v4905, 7
      %v4907 = vsub.s32 %v4904, %v4906
      %v4908 = vrot.slane %v4901, %v4907
      %v4910 = vunpack.c.l.s4 1966171168
      %v4911 = vunpack.c.0.s8 %v4910
      %v4912 = vlaneseq
      %v4913 = vshrl.u32 %v4912, 7
      %v4914 = vsub.s32 %v4911, %v4913
      %v4915 = vrot.slane %v4639, %v4914
      %v4916 = vcombine.low %v4908, %v4915
      %v4918 = vunpack.c.l.s4 1966171168
      %v4919 = vunpack.c.0.s8 %v4918
      %v4920 = vlaneseq
      %v4921 = vshrl.u32 %v4920, 7
      %v4922 = vsub.s32 %v4919, %v4921
      %v4923 = vrot.slane %v4916, %v4922
      %4924 = vrot.lane.b32.xlu0 %v4877, 32
      %v4925 = vpop.permute.xlu0 %4924
      %4926 = vrot.lane.b32.xlu0 %v4900, 32
      %v4927 = vpop.permute.xlu0 %4926
      %4928 = vrot.lane.b32.xlu0 %v4923, 32
      %v4929 = vpop.permute.xlu0 %4928
      %v4933 = vcombine.low %v4641, %v4665
      %v4935 = vunpack.c.l.s4 1966171168
      %v4936 = vunpack.c.0.s8 %v4935
      %v4937 = vlaneseq
      %v4938 = vshrl.u32 %v4937, 7
      %v4939 = vsub.s32 %v4936, %v4938
      %v4940 = vrot.slane %v4933, %v4939
      %v4942 = vunpack.c.l.s4 1966171168
      %v4943 = vunpack.c.0.s8 %v4942
      %v4944 = vlaneseq
      %v4945 = vshrl.u32 %v4944, 7
      %v4946 = vsub.s32 %v4943, %v4945
      %v4947 = vrot.slane %v4679, %v4946
      %v4948 = vcombine.low %v4940, %v4947
      %v4950 = vunpack.c.l.s4 1966171168
      %v4951 = vunpack.c.0.s8 %v4950
      %v4952 = vlaneseq
      %v4953 = vshrl.u32 %v4952, 7
      %v4954 = vsub.s32 %v4951, %v4953
      %v4955 = vrot.slane %v4948, %v4954
      %4956 = vrot.lane.b32.xlu0 %v4750, 48
      %v4957 = vpop.permute.xlu0 %4956
      %4958 = vrot.lane.b32.xlu0 %v4773, 48
      %v4959 = vpop.permute.xlu0 %4958
      %4960 = vrot.lane.b32.xlu0 %v4955, 48
      %v4961 = vpop.permute.xlu0 %4960
      %v4965 = vcombine.low %v4665, %v4679
      %v4967 = vunpack.c.l.s4 1966171168
      %v4968 = vunpack.c.0.s8 %v4967
      %v4969 = vlaneseq
      %v4970 = vshrl.u32 %v4969, 7
      %v4971 = vsub.s32 %v4968, %v4970
      %v4972 = vrot.slane %v4965, %v4971
      %v4974 = vunpack.c.l.s4 1966171168
      %v4975 = vunpack.c.0.s8 %v4974
      %v4976 = vlaneseq
      %v4977 = vshrl.u32 %v4976, 7
      %v4978 = vsub.s32 %v4975, %v4977
      %v4979 = vrot.slane %v4687, %v4978
      %v4980 = vcombine.low %v4972, %v4979
      %v4982 = vunpack.c.l.s4 1966171168
      %v4983 = vunpack.c.0.s8 %v4982
      %v4984 = vlaneseq
      %v4985 = vshrl.u32 %v4984, 7
      %v4986 = vsub.s32 %v4983, %v4985
      %v4987 = vrot.slane %v4980, %v4986
      %4988 = vrot.lane.b32.xlu0 %v4822, 64
      %v4989 = vpop.permute.xlu0 %4988
      %4990 = vrot.lane.b32.xlu0 %v4845, 64
      %v4991 = vpop.permute.xlu0 %4990
      %4992 = vrot.lane.b32.xlu0 %v4987, 64
      %v4993 = vpop.permute.xlu0 %4992
      %v4997 = vcombine.low %v4679, %v4687
      %v4999 = vunpack.c.l.s4 1966171168
      %v5000 = vunpack.c.0.s8 %v4999
      %v5001 = vlaneseq
      %v5002 = vshrl.u32 %v5001, 7
      %v5003 = vsub.s32 %v5000, %v5002
      %v5004 = vrot.slane %v4997, %v5003
      %v5006 = vunpack.c.l.s4 1966171168
      %v5007 = vunpack.c.0.s8 %v5006
      %v5008 = vlaneseq
      %v5009 = vshrl.u32 %v5008, 7
      %v5010 = vsub.s32 %v5007, %v5009
      %v5011 = vrot.slane %v4689, %v5010
      %v5012 = vcombine.low %v5004, %v5011
      %v5014 = vunpack.c.l.s4 1966171168
      %v5015 = vunpack.c.0.s8 %v5014
      %v5016 = vlaneseq
      %v5017 = vshrl.u32 %v5016, 7
      %v5018 = vsub.s32 %v5015, %v5017
      %v5019 = vrot.slane %v5012, %v5018
      %5020 = vrot.lane.b32.xlu0 %v4900, 80
      %v5021 = vpop.permute.xlu0 %5020
      %5022 = vrot.lane.b32.xlu0 %v4923, 80
      %v5023 = vpop.permute.xlu0 %5022
      %5024 = vrot.lane.b32.xlu0 %v5019, 80
      %v5025 = vpop.permute.xlu0 %5024
      %v5029 = vcombine.low %v4672, %v4686
      %v5031 = vunpack.c.l.s4 1966171168
      %v5032 = vunpack.c.0.s8 %v5031
      %v5033 = vlaneseq
      %v5034 = vshrl.u32 %v5033, 7
      %v5035 = vsub.s32 %v5032, %v5034
      %v5036 = vrot.slane %v5029, %v5035
      %v5038 = vunpack.c.l.s4 1966171168
      %v5039 = vunpack.c.0.s8 %v5038
      %v5040 = vlaneseq
      %v5041 = vshrl.u32 %v5040, 7
      %v5042 = vsub.s32 %v5039, %v5041
      %v5043 = vrot.slane %v4688, %v5042
      %v5044 = vcombine.low %v5036, %v5043
      %v5046 = vunpack.c.l.s4 1966171168
      %v5047 = vunpack.c.0.s8 %v5046
      %v5048 = vlaneseq
      %v5049 = vshrl.u32 %v5048, 7
      %v5050 = vsub.s32 %v5047, %v5049
      %v5051 = vrot.slane %v5044, %v5050
      %5052 = vrot.lane.b32.xlu0 %v4773, 96
      %v5053 = vpop.permute.xlu0 %5052
      %5054 = vrot.lane.b32.xlu0 %v4955, 96
      %v5055 = vpop.permute.xlu0 %5054
      %5056 = vrot.lane.b32.xlu0 %v5051, 96
      %v5057 = vpop.permute.xlu0 %5056
      %v5061 = vcombine.low %v4686, %v4688
      %v5063 = vunpack.c.l.s4 1966171168
      %v5064 = vunpack.c.0.s8 %v5063
      %v5065 = vlaneseq
      %v5066 = vshrl.u32 %v5065, 7
      %v5067 = vsub.s32 %v5064, %v5066
      %v5068 = vrot.slane %v5061, %v5067
      %v5070 = vunpack.c.l.s4 1966171168
      %v5071 = vunpack.c.0.s8 %v5070
      %v5072 = vlaneseq
      %v5073 = vshrl.u32 %v5072, 7
      %v5074 = vsub.s32 %v5071, %v5073
      %v5075 = vrot.slane %v4690, %v5074
      %v5076 = vcombine.low %v5068, %v5075
      %v5078 = vunpack.c.l.s4 1966171168
      %v5079 = vunpack.c.0.s8 %v5078
      %v5080 = vlaneseq
      %v5081 = vshrl.u32 %v5080, 7
      %v5082 = vsub.s32 %v5079, %v5081
      %v5083 = vrot.slane %v5076, %v5082
      %5084 = vrot.lane.b32.xlu0 %v4845, 112
      %v5085 = vpop.permute.xlu0 %5084
      %5086 = vrot.lane.b32.xlu0 %v4987, 112
      %v5087 = vpop.permute.xlu0 %5086
      %5088 = vrot.lane.b32.xlu0 %v5083, 112
      %v5089 = vpop.permute.xlu0 %5088
      %v5093 = vcombine.low %v4688, %v4690
      %v5095 = vunpack.c.l.s4 1966171168
      %v5096 = vunpack.c.0.s8 %v5095
      %v5097 = vlaneseq
      %v5098 = vshrl.u32 %v5097, 7
      %v5099 = vsub.s32 %v5096, %v5098
      %v5100 = vrot.slane %v5093, %v5099
      %v5102 = vunpack.c.l.s4 1966171168
      %v5103 = vunpack.c.0.s8 %v5102
      %v5104 = vlaneseq
      %v5105 = vshrl.u32 %v5104, 7
      %v5106 = vsub.s32 %v5103, %v5105
      %v5107 = vrot.slane %v4704, %v5106
      %v5108 = vcombine.low %v5100, %v5107
      %v5110 = vunpack.c.l.s4 1966171168
      %v5111 = vunpack.c.0.s8 %v5110
      %v5112 = vlaneseq
      %v5113 = vshrl.u32 %v5112, 7
      %v5114 = vsub.s32 %v5111, %v5113
      %v5115 = vrot.slane %v5108, %v5114
      %vm5116 = vcmask 130048
      %v5117 = vsel %vm5116, %v4727, %v4847
      %v5118 = vsel %vm5116, %v4750, %v4849
      %v5119 = vsel %vm5116, %v4773, %v4851
      %vm5120 = vcmask 261120
      %v5121 = vsel %vm5120, %v5117, %v4925
      %v5122 = vsel %vm5120, %v5118, %v4927
      %v5123 = vsel %vm5120, %v5119, %v4929
      %vm5124 = vcmask 392192
      %v5125 = vsel %vm5124, %v5121, %v4957
      %v5126 = vsel %vm5124, %v5122, %v4959
      %v5127 = vsel %vm5124, %v5123, %v4961
      %vm5128 = vcmask 523264
      %v5129 = vsel %vm5128, %v5125, %v4989
      %v5130 = vsel %vm5128, %v5126, %v4991
      %v5131 = vsel %vm5128, %v5127, %v4993
      %v5132 = vsel %vm4038, %v5129, %v5021
      %v5133 = vsel %vm4038, %v5130, %v5023
      %v5134 = vsel %vm4038, %v5131, %v5025
      %vm5135 = vcmask 785408
      %v5136 = vsel %vm5135, %v5132, %v5053
      %v5137 = vsel %vm5135, %v5133, %v5055
      %v5138 = vsel %vm5135, %v5134, %v5057
      %vm5139 = vcmask 916480
      %v5140 = vsel %vm5139, %v5136, %v5085
      %v5141 = vsel %vm5139, %v5137, %v5087
      %v5142 = vsel %vm5139, %v5138, %v5089
      %v5146 = vcombine.low %v5140, %v4923
      %v5148 = vunpack.c.l.s4 1966171168
      %v5149 = vunpack.c.0.s8 %v5148
      %v5150 = vlaneseq
      %v5151 = vshrl.u32 %v5150, 7
      %v5152 = vsub.s32 %v5149, %v5151
      %v5153 = vrot.slane %v5146, %v5152
      %v5154 = vcombine.high %v5153, %v5153
      %v5156 = vunpack.c.l.s4 1966171168
      %v5157 = vunpack.c.0.s8 %v5156
      %v5158 = vlaneseq
      %v5159 = vshrl.u32 %v5158, 7
      %v5160 = vsub.s32 %v5157, %v5159
      %v5161 = vrot.slane %v5153, %v5160
      %v5163 = vunpack.c.l.s4 1966171168
      %v5164 = vunpack.c.0.s8 %v5163
      %v5165 = vlaneseq
      %v5166 = vshrl.u32 %v5165, 7
      %v5167 = vsub.s32 %v5164, %v5166
      %v5168 = vrot.slane %v5154, %v5167
      %v5169 = vcombine.high %v5161, %v5161
      %v5170 = vcombine.low %v5141, %v5019
      %v5172 = vunpack.c.l.s4 1966171168
      %v5173 = vunpack.c.0.s8 %v5172
      %v5174 = vlaneseq
      %v5175 = vshrl.u32 %v5174, 7
      %v5176 = vsub.s32 %v5173, %v5175
      %v5177 = vrot.slane %v5170, %v5176
      %v5178 = vcombine.high %v5177, %v5177
      %v5180 = vunpack.c.l.s4 1966171168
      %v5181 = vunpack.c.0.s8 %v5180
      %v5182 = vlaneseq
      %v5183 = vshrl.u32 %v5182, 7
      %v5184 = vsub.s32 %v5181, %v5183
      %v5185 = vrot.slane %v5177, %v5184
      %v5187 = vunpack.c.l.s4 1966171168
      %v5188 = vunpack.c.0.s8 %v5187
      %v5189 = vlaneseq
      %v5190 = vshrl.u32 %v5189, 7
      %v5191 = vsub.s32 %v5188, %v5190
      %v5192 = vrot.slane %v5178, %v5191
      %v5193 = vcombine.high %v5185, %v5185
      %v5194 = vcombine.low %v5142, %v5115
      %v5196 = vunpack.c.l.s4 1966171168
      %v5197 = vunpack.c.0.s8 %v5196
      %v5198 = vlaneseq
      %v5199 = vshrl.u32 %v5198, 7
      %v5200 = vsub.s32 %v5197, %v5199
      %v5201 = vrot.slane %v5194, %v5200
      %v5202 = vcombine.high %v5201, %v5201
      %v5204 = vunpack.c.l.s4 1966171168
      %v5205 = vunpack.c.0.s8 %v5204
      %v5206 = vlaneseq
      %v5207 = vshrl.u32 %v5206, 7
      %v5208 = vsub.s32 %v5205, %v5207
      %v5209 = vrot.slane %v5201, %v5208
      %v5211 = vunpack.c.l.s4 1966171168
      %v5212 = vunpack.c.0.s8 %v5211
      %v5213 = vlaneseq
      %v5214 = vshrl.u32 %v5213, 7
      %v5215 = vsub.s32 %v5212, %v5214
      %v5216 = vrot.slane %v5202, %v5215
      %v5217 = vcombine.high %v5209, %v5209
      %v5218 = vld [vmem:[%s7] sm:$0xff]
      %v5219 = vld [vmem:[%s7 + $0x8] sm:$0xff]
      %v5220 = vld [vmem:[%s7 + $0x10] sm:$0xff]
      %v5221 = vld [vmem:[%s7 + $0x18] sm:$0xff]
      %v5222 = vld [vmem:[%s7 + $0x20] sm:$0xff]
      %v5223 = vld [vmem:[%s7 + $0x28] sm:$0xff]
      %v5224 = vld [vmem:[%s7 + $0x30] sm:$0xff]
      %v5225 = vld [vmem:[%s7 + $0x38] sm:$0xff]
      %v5226 = vld [vmem:[%s7 + $0x40] sm:$0xff]
      %v5227 = vld [vmem:[%s7 + $0x48] sm:$0xff]
      %v5228 = vld [vmem:[%s7 + $0x50] sm:$0xff]
      %v5229 = vld [vmem:[%s7 + $0x58] sm:$0xff]
      %v5230 = vld [vmem:[%s7 + $0x60] sm:$0xff]
      %v5231 = vld [vmem:[%s7 + $0x68] sm:$0xff]
      %v5232 = vld [vmem:[%s7 + $0x70] sm:$0xff]
      %v5233 = vld [vmem:[%s7 + $0x78] sm:$0xff]
      %v5234 = vld [vmem:[%s7 + $0x80] sm:$0xff]
      %v5235 = vld [vmem:[%s7 + $0x88] sm:$0xff]
      %v5236 = vld [vmem:[%s8] sm:$0x1]
      %v5238 = vlaneseq
      %v5239 = vshrl.u32 %v5238, 7
      %v5240 = vsub.s32 0, %v5239
      %v5241 = vrot.slane %v5236, %v5240
      %v5243 = vcombine.low %v5161, %v5168
      %v5244 = vcombine.low %v5169, %v5185
      %v5245 = vcombine.low %v5192, %v5193
      %v5246 = vcombine.low %v5209, %v5216
      %v5248 = vunpack.c.l.s4 1966171168
      %v5249 = vunpack.c.0.s8 %v5248
      %v5250 = vlaneseq
      %v5251 = vshrl.u32 %v5250, 7
      %v5252 = vsub.s32 %v5249, %v5251
      %v5253 = vrot.slane %v5243, %v5252
      %v5255 = vunpack.c.l.s4 1966171168
      %v5256 = vunpack.c.0.s8 %v5255
      %v5257 = vlaneseq
      %v5258 = vshrl.u32 %v5257, 7
      %v5259 = vsub.s32 %v5256, %v5258
      %v5260 = vrot.slane %v5244, %v5259
      %v5262 = vunpack.c.l.s4 1966171168
      %v5263 = vunpack.c.0.s8 %v5262
      %v5264 = vlaneseq
      %v5265 = vshrl.u32 %v5264, 7
      %v5266 = vsub.s32 %v5263, %v5265
      %v5267 = vrot.slane %v5245, %v5266
      %v5269 = vunpack.c.l.s4 1966171168
      %v5270 = vunpack.c.0.s8 %v5269
      %v5271 = vlaneseq
      %v5272 = vshrl.u32 %v5271, 7
      %v5273 = vsub.s32 %v5270, %v5272
      %v5274 = vrot.slane %v5246, %v5273
      %v5275 = vcombine.low %v5253, %v5260
      %v5276 = vcombine.high %v5253, %v5260
      %v5277 = vcombine.low %v5267, %v5274
      %v5278 = vcombine.high %v5267, %v5274
      %v5280 = vunpack.c.l.s4 1966171168
      %v5281 = vunpack.c.0.s8 %v5280
      %v5282 = vlaneseq
      %v5283 = vshrl.u32 %v5282, 7
      %v5284 = vsub.s32 %v5281, %v5283
      %v5285 = vrot.slane %v5275, %v5284
      %v5287 = vunpack.c.l.s4 1966171168
      %v5288 = vunpack.c.0.s8 %v5287
      %v5289 = vlaneseq
      %v5290 = vshrl.u32 %v5289, 7
      %v5291 = vsub.s32 %v5288, %v5290
      %v5292 = vrot.slane %v5276, %v5291
      %v5294 = vunpack.c.l.s4 1966171168
      %v5295 = vunpack.c.0.s8 %v5294
      %v5296 = vlaneseq
      %v5297 = vshrl.u32 %v5296, 7
      %v5298 = vsub.s32 %v5295, %v5297
      %v5299 = vrot.slane %v5277, %v5298
      %v5301 = vunpack.c.l.s4 1966171168
      %v5302 = vunpack.c.0.s8 %v5301
      %v5303 = vlaneseq
      %v5304 = vshrl.u32 %v5303, 7
      %v5305 = vsub.s32 %v5302, %v5304
      %v5306 = vrot.slane %v5278, %v5305
      %v5307 = vcombine.low %v5285, %v5299
      %v5308 = vcombine.low %v5292, %v5306
      %v5310 = vunpack.c.l.s4 1966171168
      %v5311 = vunpack.c.0.s8 %v5310
      %v5312 = vlaneseq
      %v5313 = vshrl.u32 %v5312, 7
      %v5314 = vsub.s32 %v5311, %v5313
      %v5315 = vrot.slane %v5217, %v5314
      %v5316 = vcombine.high %v5315, %v5315
      %v5318 = vunpack.c.l.s4 1966171168
      %v5319 = vunpack.c.0.s8 %v5318
      %v5320 = vlaneseq
      %v5321 = vshrl.u32 %v5320, 7
      %v5322 = vsub.s32 %v5319, %v5321
      %v5323 = vrot.slane %v5315, %v5322
      %v5325 = vunpack.c.l.s4 1966171168
      %v5326 = vunpack.c.0.s8 %v5325
      %v5327 = vlaneseq
      %v5328 = vshrl.u32 %v5327, 7
      %v5329 = vsub.s32 %v5326, %v5328
      %v5330 = vrot.slane %v5316, %v5329
      %v5333 = vsel %vm5116, %v5308, 0
      %v5335 = vsel %vm5116, %v5330, 0
      %5337 = vmatprep.subr.mxu0 0.0
      %5338 = vmatpush1.msra.mxu0 %v5218
      %5339 = vmatprep.subr.mxu0 0.0
      %5340 = vmatpush1.msra.mxu0 %v5219
      %5341 = vmatprep.subr.mxu0 0.0
      %5342 = vmatpush1.msra.mxu0 %v5220
      %5343 = vmatprep.subr.mxu0 0.0
      %5344 = vmatpush1.msra.mxu0 %v5221
      %5345 = vmatprep.subr.mxu0 0.0
      %5346 = vmatpush1.msra.mxu0 %v5222
      %5347 = vmatprep.subr.mxu0 0.0
      %5348 = vmatpush1.msra.mxu0 %v5223
      %5349 = vmatprep.subr.mxu0 0.0
      %5350 = vmatpush1.msra.mxu0 %v5224
      %5351 = vmatprep.subr.mxu0 0.0
      %5352 = vmatpush1.msra.mxu0 %v5225
      %5353 = vmatprep.subr.mxu0 0.0
      %5354 = vmatpush1.msra.mxu0 %v5226
      %5355 = vmatprep.subr.mxu0 0.0
      %5356 = vmatpush1.msra.mxu0 %v5227
      %5357 = vmatprep.subr.mxu0 0.0
      %5358 = vmatpush1.msra.mxu0 %v5228
      %5359 = vmatprep.subr.mxu0 0.0
      %5360 = vmatpush1.msra.mxu0 %v5229
      %5361 = vmatprep.subr.mxu0 0.0
      %5362 = vmatpush1.msra.mxu0 %v5230
      %5363 = vmatprep.subr.mxu0 0.0
      %5364 = vmatpush1.msra.mxu0 %v5231
      %5365 = vmatprep.subr.mxu0 0.0
      %5366 = vmatpush1.msra.mxu0 %v5232
      %5367 = vmatprep.subr.mxu0 0.0
      %5368 = vmatpush1.msra.mxu0 %v5233
      %5369 = vmatprep.subr.mxu0 0.0
      %5370 = vmatpush1.msra.mxu0 %v5234
      %5371 = vmatprep.subr.mxu0 0.0
      %5372 = vmatpush1.msra.mxu0 %v5235
      %5373 = vmatprep.subr.mxu0 0.0
      %5374 = vmatpush1.msra.mxu0 0.0
      %5375 = vmatprep.subr.mxu0 0.0
      %5376 = vmatpush1.msra.mxu0 0.0
      %5377 = vmatprep.subr.mxu0 0.0
      %5378 = vmatpush1.msra.mxu0 0.0
      %5379 = vmatprep.subr.mxu0 0.0
      %5380 = vmatpush1.msra.mxu0 0.0
      %5381 = vmatprep.subr.mxu0 0.0
      %5382 = vmatpush1.msra.mxu0 0.0
      %5383 = vmatprep.subr.mxu0 0.0
      %5384 = vmatpush1.msra.mxu0 0.0
      %5385 = vmatprep.subr.mxu0 0.0
      %5386 = vmatpush1.msra.mxu0 0.0
      %5387 = vmatprep.subr.mxu0 0.0
      %5388 = vmatpush1.msra.mxu0 0.0
      %5389 = vmatprep.subr.mxu0 0.0
      %5390 = vmatpush1.msra.mxu0 0.0
      %5391 = vmatprep.subr.mxu0 0.0
      %5392 = vmatpush1.msra.mxu0 0.0
      %5393 = vmatprep.subr.mxu0 0.0
      %5394 = vmatpush1.msra.mxu0 0.0
      %5395 = vmatprep.subr.mxu0 0.0
      %5396 = vmatpush1.msra.mxu0 0.0
      %5397 = vmatprep.subr.mxu0 0.0
      %5398 = vmatpush1.msra.mxu0 0.0
      %5399 = vmatprep.subr.mxu0 0.0
      %5400 = vmatpush1.msra.mxu0 0.0
      %5401 = vmatprep.mubr.f32.mxu0 %v5333
      %5402 = vmatmul.mubr.f32.gmra.mrb[0].mxu0 %v5307
      %v5403 = vpop.f32.mrb[0].mxu0
      %v5404 = vadd.f32 %v5241, %v5403
      %v5405 = vpop.f32.mrb[0].mxu0
      %5406 = vmatprep.mubr.f32.mxu0 %v5335
      %5407 = vmatmul.mubr.f32.gmra.mrb[0].mxu0 %v5323
      %v5408 = vpop.f32.mrb[0].mxu0
      %v5409 = vadd.f32 %v5241, %v5408
      %v5410 = vpop.f32.mrb[0].mxu0
      %5411 = vdwg.mxu0
      %v5412 = vld [vmem:[%s9] sm:$0x1]
      %vm5413 = vcmp.ge.f32.partialorder %v5404, 0.0
      %vm5414 = vcmp.ge.f32.partialorder %v5409, 0.0
      %v5416 = vlaneseq
      %v5417 = vshrl.u32 %v5416, 7
      %v5418 = vsub.s32 0, %v5417
      %v5419 = vrot.slane %v5412, %v5418
      %v5421 = vmul.f32 %v5404, %v5419
      %v5422 = vmul.f32 %v5409, %v5419
      %v5423 = vsel %vm5413, %v5404, %v5421
      %v5424 = vsel %vm5414, %v5409, %v5422
      %v5425 = vld [vmem:[%s10] sm:$0xff]
      %v5426 = vld [vmem:[%s10 + $0x8] sm:$0xff]
      %v5427 = vld [vmem:[%s10 + $0x10] sm:$0xff]
      %v5428 = vld [vmem:[%s10 + $0x18] sm:$0xff]
      %v5429 = vld [vmem:[%s11] sm:$0x1]
      %v5431 = vlaneseq
      %v5432 = vshrl.u32 %v5431, 7
      %v5433 = vsub.s32 0, %v5432
      %v5434 = vrot.slane %v5429, %v5433
      %v5437 = vsel %vm5120, %v5423, 0
      %v5440 = vsel %vm5120, %v5424, 0
      %5442 = vmatprep.subr.mxu0 0.0
      %5443 = vmatpush1.msra.mxu0 %v5425
      %5444 = vmatprep.subr.mxu0 0.0
      %5445 = vmatpush1.msra.mxu0 %v5426
      %5446 = vmatprep.subr.mxu0 0.0
      %5447 = vmatpush1.msra.mxu0 %v5427
      %5448 = vmatprep.subr.mxu0 0.0
      %5449 = vmatpush1.msra.mxu0 %v5428
      %5450 = vmatprep.subr.mxu0 0.0
      %5451 = vmatpush1.msra.mxu0 0.0
      %5452 = vmatprep.subr.mxu0 0.0
      %5453 = vmatpush1.msra.mxu0 0.0
      %5454 = vmatprep.subr.mxu0 0.0
      %5455 = vmatpush1.msra.mxu0 0.0
      %5456 = vmatprep.subr.mxu0 0.0
      %5457 = vmatpush1.msra.mxu0 0.0
      %5458 = vmatprep.subr.mxu0 0.0
      %5459 = vmatpush1.msra.mxu0 0.0
      %5460 = vmatprep.subr.mxu0 0.0
      %5461 = vmatpush1.msra.mxu0 0.0
      %5462 = vmatprep.subr.mxu0 0.0
      %5463 = vmatpush1.msra.mxu0 0.0
      %5464 = vmatprep.subr.mxu0 0.0
      %5465 = vmatpush1.msra.mxu0 0.0
      %5466 = vmatprep.subr.mxu0 0.0
      %5467 = vmatpush1.msra.mxu0 0.0
      %5468 = vmatprep.subr.mxu0 0.0
      %5469 = vmatpush1.msra.mxu0 0.0
      %5470 = vmatprep.subr.mxu0 0.0
      %5471 = vmatpush1.msra.mxu0 0.0
      %5472 = vmatprep.subr.mxu0 0.0
      %5473 = vmatpush1.msra.mxu0 0.0
      %5474 = vmatprep.subr.mxu0 0.0
      %5475 = vmatpush1.msra.mxu0 0.0
      %5476 = vmatprep.subr.mxu0 0.0
      %5477 = vmatpush1.msra.mxu0 0.0
      %5478 = vmatprep.subr.mxu0 0.0
      %5479 = vmatpush1.msra.mxu0 0.0
      %5480 = vmatprep.subr.mxu0 0.0
      %5481 = vmatpush1.msra.mxu0 0.0
      %5482 = vmatprep.subr.mxu0 0.0
      %5483 = vmatpush1.msra.mxu0 0.0
      %5484 = vmatprep.subr.mxu0 0.0
      %5485 = vmatpush1.msra.mxu0 0.0
      %5486 = vmatprep.subr.mxu0 0.0
      %5487 = vmatpush1.msra.mxu0 0.0
      %5488 = vmatprep.subr.mxu0 0.0
      %5489 = vmatpush1.msra.mxu0 0.0
      %5490 = vmatprep.subr.mxu0 0.0
      %5491 = vmatpush1.msra.mxu0 0.0
      %5492 = vmatprep.subr.mxu0 0.0
      %5493 = vmatpush1.msra.mxu0 0.0
      %5494 = vmatprep.subr.mxu0 0.0
      %5495 = vmatpush1.msra.mxu0 0.0
      %5496 = vmatprep.subr.mxu0 0.0
      %5497 = vmatpush1.msra.mxu0 0.0
      %5498 = vmatprep.subr.mxu0 0.0
      %5499 = vmatpush1.msra.mxu0 0.0
      %5500 = vmatprep.subr.mxu0 0.0
      %5501 = vmatpush1.msra.mxu0 0.0
      %5502 = vmatprep.subr.mxu0 0.0
      %5503 = vmatpush1.msra.mxu0 0.0
      %5504 = vmatprep.subr.mxu0 0.0
      %5505 = vmatpush1.msra.mxu0 0.0
      %5506 = vmatprep.mubr.f32.mxu0 0.0
      %5507 = vmatmul.mubr.f32.gmra.mrb[0].mxu0 %v5437
      %v5508 = vpop.f32.mrb[0].mxu0
      %v5509 = vadd.f32 %v5434, %v5508
      %v5510 = vpop.f32.mrb[0].mxu0
      %5511 = vmatprep.mubr.f32.mxu0 0.0
      %5512 = vmatmul.mubr.f32.gmra.mrb[0].mxu0 %v5440
      %v5513 = vpop.f32.mrb[0].mxu0
      %v5514 = vadd.f32 %v5434, %v5513
      %v5515 = vpop.f32.mrb[0].mxu0
      %5516 = vdwg.mxu0
      %vm5517 = vcmask 48160
      %v5518 = vsel %vm5517, %v5509, -inf
      %5519 = vmax.xlane.f32.xlu0 %v5518
      %v5520 = vpop.xlane.xlu0 %5519
      %vm5521 = vcmask 40992
      %v5522 = vsel %vm5521, %v5514, -inf
      %5523 = vmax.xlane.f32.xlu0 %v5522
      %v5524 = vpop.xlane.xlu0 %5523
      %v5525 = vsub.f32 %v5509, %v5520
      %v5526 = vsub.f32 %v5514, %v5524
      %v5527 = vmul.f32 %v5525, 1.442695
      %v5528 = vpow.pop %v5527
      %v5529 = vmul.f32 %v5526, 1.442695
      %v5530 = vpow.pop %v5529
      %5533 = vrot.lane.b32.xlu0 %v5528, 124
      %v5534 = vpop.permute.xlu0 %5533
      %5535 = vrot.lane.b32.xlu0 %v5530, 124
      %v5536 = vpop.permute.xlu0 %5535
      %vm5539 = vcmask 15360
      %v5540 = vsel %vm5539, %v5534, 0.0
      %5541 = vadd.xlane.f32.xlu0 %v5540
      %v5542 = vpop.xlane.xlu0 %5541
      %vm5543 = vcmask 8192
      %v5544 = vsel %vm5543, %v5536, 0.0
      %5545 = vadd.xlane.f32.xlu0 %v5544
      %v5546 = vpop.xlane.xlu0 %5545
      %v5547 = vrcp.pop %v5542
      %v5548 = vmul.f32 %v5528, %v5547
      %v5549 = vrcp.pop %v5546
      %v5550 = vmul.f32 %v5530, %v5549
      %vm5551 = vcmask 31744
      %v5552 = vsel %vm5551, %v5509, %v5548
      %v5553 = vsel %vm5551, %v5514, %v5550
      %5554 = vst.msk [vmem:[%s413] sm:$0xff] %vm1277, %v5552
      %vm5555 = vcmask 40960
      %5556 = vst.msk [vmem:[%s413 + $0x8] sm:$0x1] %vm5555, %v5553
      %p5557 = scmp.lt.s32.totalorder %s23, 1
      %s5558 = scalar_select %p5557, %s23, 1
      %s5559 = smul.addr %s5558, 2
      %s5560 = smul.addr %s5559, 8
      %s5561 = scalar_lea.vmem %s12, %s5560
      // Predicated region
      $region69: #{tpu_custom_call.1} parent=67 // pred_check
        %p5562 = pneg %p298
      $region70: #{tpu_custom_call.1} parent=67 // pred_check_branch
        %5564 = sbr.rel (%p5562) target = $region72
      $region71: #{tpu_custom_call.1} parent=67 // pred_region
        _
      $region72: #{tpu_custom_call.1} parent=67 // pred_fallthru
        _
    $region68: #{tpu_custom_call.1} parent=5 // pred_fallthru
      _
    %p5565 = scmp.le.s32.totalorder 2, %s18
    // Predicated region
    $region73: #{tpu_custom_call.1} parent=5 // pred_check
      %p5566 = pneg %p5565
    $region74: #{tpu_custom_call.1} parent=5 // pred_check_branch
      %5568 = sbr.rel (%p5566) target = $region76
    $region75: #{tpu_custom_call.1} parent=5 // pred_region
      %s5569 = ssub.s32 %s18, 2
      // Predicated region
      $region77: #{tpu_custom_call.1} parent=75 // pred_check
        %p5570 = pneg %p304
      $region78: #{tpu_custom_call.1} parent=75 // pred_check_branch
        %5572 = sbr.rel (%p5570) target = $region80
      $region79: #{tpu_custom_call.1} parent=75 // pred_region
        %p5573 = scmp.lt.s32.totalorder %s24, 1
        %s5574 = scalar_select %p5573, %s24, 1
        %s5575 = smul.addr %s5574, 2
        %s5576 = smul.addr %s5575, 8
        %s5577 = scalar_lea.vmem %s12, %s5576
      $region80: #{tpu_custom_call.1} parent=75 // pred_fallthru
        _
    $region76: #{tpu_custom_call.1} parent=5 // pred_fallthru
      _
  $region6: #{tpu_custom_call.1} parent=0 // loop_footer
    %s22 = sadd.s32 1, %s18
  $region7: #{tpu_custom_call.1} parent=0 // loop_footer_branch
    %17 = sbr.rel target = $region3
  $region8: #{tpu_custom_call.1} parent=0 // loop_exit
    _

</llo_original>
